<compile_context>
chip_gen: v5e
topology: v5e:2x2
jax: 0.10.0
libtpu: 0.0.40
codegen_flags: <defaults>
</compile_context>

<pallas_src>
import jax
import jax.numpy as jnp
from jax.experimental import pallas as pl
from jax.experimental.pallas import tpu as pltpu


def _lstm_cell(gates, c_prev, H):
    """PyTorch gate order (i, f, g, o). gates: (B, 4H)."""
    sg = jax.nn.sigmoid(gates)              # one EUP pass on the full 4H vector
    i_g = sg[:, 0:H]
    f_g = sg[:, H:2 * H]
    o_g = sg[:, 3 * H:4 * H]
    g_g = jnp.tanh(gates[:, 2 * H:3 * H])
    c_new = f_g * c_prev + i_g * g_g
    h_new = o_g * jnp.tanh(c_new)
    return h_new, c_new


def make_fused_kernel(T, B, H, num_layers):
    """Fused 3-layer bi-LSTM + MLP head. Data layout: rows are time-major,
    i.e. row index = t*B + b for all (T*B, .) buffers."""

    def kernel(*refs):
        # ---- unpack refs: inputs..., output, scratches -----------------
        x_ref = refs[0]
        idx = 1
        lstm_refs = []
        for _ in range(num_layers):
            lstm_refs.append(refs[idx:idx + 6])   # wih_f, whh_f, b_f, wih_b, whh_b, b_b
            idx += 6
        w1_ref, b1_ref, w2_ref, b2_ref, w3_ref, b3_ref = refs[idx:idx + 6]
        idx += 6
        out_ref = refs[idx]
        buf_sc = refs[idx + 1]                    # (T*B, 2H) layer output buffer
        z_sc = refs[idx + 2]                      # (B, T)   linear1 output

        zeros = jnp.zeros((B, H), jnp.float32)

        x_in = x_ref[...]                         # (T*B, IN)
        for l in range(num_layers):
            wih_f, whh_f, b_f, wih_b, whh_b, b_b = lstm_refs[l]
            if l > 0:
                # snapshot previous layer's output before overwriting buf_sc
                x_in = buf_sc[...]                # (T*B, 2H)

            # Precompute input projections for all timesteps (one MXU matmul
            # per direction); only the h-dependent matmul stays serial.
            xp_f = jnp.dot(x_in, wih_f[...],
                           preferred_element_type=jnp.float32) + b_f[...]
            xp_b = jnp.dot(x_in, wih_b[...],
                           preferred_element_type=jnp.float32) + b_b[...]

            h_f, c_f, h_b, c_b = zeros, zeros, zeros, zeros
            # Fused fwd/bwd recurrence, statically unrolled (T is small).
            for t in range(T):
                tb = T - 1 - t
                # forward direction, time t
                g_f = xp_f[t * B:(t + 1) * B, :] + jnp.dot(
                    h_f, whh_f[...], preferred_element_type=jnp.float32)
                h_f, c_f = _lstm_cell(g_f, c_f, H)
                buf_sc[t * B:(t + 1) * B, 0:H] = h_f
                # backward direction, time T-1-t
                g_b = xp_b[tb * B:(tb + 1) * B, :] + jnp.dot(
                    h_b, whh_b[...], preferred_element_type=jnp.float32)
                h_b, c_b = _lstm_cell(g_b, c_b, H)
                buf_sc[tb * B:(tb + 1) * B, H:2 * H] = h_b

        # ---- MLP head --------------------------------------------------
        feat = buf_sc[...]                        # (T*B, 2H)
        # linear1 (2H -> 1) as a single MXU matmul, then tanh
        z_flat = jnp.tanh(
            jnp.dot(feat, w1_ref[...], preferred_element_type=jnp.float32)
            + b1_ref[...])                        # (T*B, 1)
        # rearrange time-major rows into (B, T) via static column stores
        for t in range(T):
            z_sc[:, t:t + 1] = z_flat[t * B:(t + 1) * B, :]
        z = z_sc[...]                             # (B, T)
        # linear2 (T -> 128)
        z2 = jnp.tanh(
            jnp.dot(z, w2_ref[...], preferred_element_type=jnp.float32)
            + b2_ref[...])                        # (B, 128)
        # linear3 (128 -> 1)
        z3 = jnp.tanh(
            jnp.dot(z2, w3_ref[...], preferred_element_type=jnp.float32)
            + b3_ref[...])                        # (B, 1)
        out_ref[...] = z3.astype(out_ref.dtype)

    return kernel


def bert_forward(x, params, hidden, num_layers):
    """x: (B, T, input_size), batch-first (PyTorch convention). Returns (B,)."""
    B, T, IN = x.shape
    # time-major flatten in the wrapper: row index = t*B + b
    x2d = jnp.transpose(x, (1, 0, 2)).reshape(T * B, IN).astype(jnp.float32)

    inputs = [x2d]
    for l in range(num_layers):
        p = params["lstm"][l]
        inputs += [p["wih_f"], p["whh_f"], p["b_f"],
                   p["wih_b"], p["whh_b"], p["b_b"]]
    inputs += [params["w1"], params["b1"],
               params["w2"], params["b2"],
               params["w3"], params["b3"]]

    vmem_spec = pl.BlockSpec(memory_space=pltpu.MemorySpace.VMEM)
    out = pl.pallas_call(
        make_fused_kernel(T, B, hidden, num_layers),
        out_shape=jax.ShapeDtypeStruct((B, 1), jnp.float32),
        in_specs=[vmem_spec] * len(inputs),
        out_specs=vmem_spec,
        scratch_shapes=[
            pltpu.VMEM((T * B, 2 * hidden), jnp.float32),  # layer output buffer
            pltpu.VMEM((B, T), jnp.float32),               # linear1 output (B, T)
        ],
    )(*inputs)
    return out[:, 0]  # squeeze(1)


def init_params(key, input_size, hidden, num_layers, max_length):
    scale = 0.1
    params = {"lstm": []}
    for l in range(num_layers):
        d_in = input_size if l == 0 else 2 * hidden
        ks = jax.random.split(key, 7)
        key = ks[0]
        layer = {
            # stored pre-transposed: (in, 4H) / (H, 4H); bias = b_ih + b_hh merged
            "wih_f": scale * jax.random.normal(ks[1], (d_in, 4 * hidden), jnp.float32),
            "whh_f": scale * jax.random.normal(ks[2], (hidden, 4 * hidden), jnp.float32),
            "b_f":   scale * jax.random.normal(ks[3], (1, 4 * hidden), jnp.float32),
            "wih_b": scale * jax.random.normal(ks[4], (d_in, 4 * hidden), jnp.float32),
            "whh_b": scale * jax.random.normal(ks[5], (hidden, 4 * hidden), jnp.float32),
            "b_b":   scale * jax.random.normal(ks[6], (1, 4 * hidden), jnp.float32),
        }
        params["lstm"].append(layer)

    ks = jax.random.split(key, 7)
    params["w1"] = scale * jax.random.normal(ks[1], (2 * hidden, 1), jnp.float32)   # linear1 W.T
    params["b1"] = scale * jax.random.normal(ks[2], (1, 1), jnp.float32)
    params["w2"] = scale * jax.random.normal(ks[3], (max_length, 128), jnp.float32)  # linear2 W.T
    params["b2"] = scale * jax.random.normal(ks[4], (1, 128), jnp.float32)
    params["w3"] = scale * jax.random.normal(ks[5], (128, 1), jnp.float32)           # linear3 W.T
    params["b3"] = scale * jax.random.normal(ks[6], (1, 1), jnp.float32)
    return params


if __name__ == "__main__":
    # Small shapes: batch=2, max_length(seq)=8, input feature=32, hidden=32, 3 layers.
    B, T, IN, H, L = 2, 8, 32, 32, 3

    root = jax.random.PRNGKey(0)
    k_x, k_p = jax.random.split(root)
    x = jax.random.normal(k_x, (B, T, IN), jnp.float32)
    params = init_params(k_p, IN, H, L, T)

    out = bert_forward(x, params, hidden=H, num_layers=L)
    out = jax.block_until_ready(out)
    assert out.shape == (B,), out.shape
    assert bool(jnp.all(jnp.isfinite(out)))
    print("KERNEL_OK")
</pallas_src>

<mosaic_0001>
module attributes {stable_mosaic.version = 11 : i64} {
  func.func @kernel(%arg0: memref<16x32xf32, #tpu.memory_space<vmem>>, %arg1: memref<32x128xf32, #tpu.memory_space<vmem>>, %arg2: memref<32x128xf32, #tpu.memory_space<vmem>>, %arg3: memref<1x128xf32, #tpu.memory_space<vmem>>, %arg4: memref<32x128xf32, #tpu.memory_space<vmem>>, %arg5: memref<32x128xf32, #tpu.memory_space<vmem>>, %arg6: memref<1x128xf32, #tpu.memory_space<vmem>>, %arg7: memref<64x128xf32, #tpu.memory_space<vmem>>, %arg8: memref<32x128xf32, #tpu.memory_space<vmem>>, %arg9: memref<1x128xf32, #tpu.memory_space<vmem>>, %arg10: memref<64x128xf32, #tpu.memory_space<vmem>>, %arg11: memref<32x128xf32, #tpu.memory_space<vmem>>, %arg12: memref<1x128xf32, #tpu.memory_space<vmem>>, %arg13: memref<64x128xf32, #tpu.memory_space<vmem>>, %arg14: memref<32x128xf32, #tpu.memory_space<vmem>>, %arg15: memref<1x128xf32, #tpu.memory_space<vmem>>, %arg16: memref<64x128xf32, #tpu.memory_space<vmem>>, %arg17: memref<32x128xf32, #tpu.memory_space<vmem>>, %arg18: memref<1x128xf32, #tpu.memory_space<vmem>>, %arg19: memref<64x1xf32, #tpu.memory_space<vmem>>, %arg20: memref<1x1xf32, #tpu.memory_space<vmem>>, %arg21: memref<8x128xf32, #tpu.memory_space<vmem>>, %arg22: memref<1x128xf32, #tpu.memory_space<vmem>>, %arg23: memref<128x1xf32, #tpu.memory_space<vmem>>, %arg24: memref<1x1xf32, #tpu.memory_space<vmem>>, %arg25: memref<2x1xf32, #tpu.memory_space<vmem>>, %arg26: memref<16x64xf32, #tpu.memory_space<vmem>>, %arg27: memref<2x8xf32, #tpu.memory_space<vmem>>) attributes {dimension_semantics = [], scalar_prefetch = 0 : i64, scratch_operands = 2 : i64, tpu.core_type = #tpu.core_type<tc>} {
    %cst = arith.constant 0.000000e+00 : f32
    %0 = vector.broadcast %cst : f32 to vector<2x32xf32>
    %c0 = arith.constant 0 : index
    %c0_0 = arith.constant 0 : index
    %1 = vector.load %arg0[%c0, %c0_0] : memref<16x32xf32, #tpu.memory_space<vmem>>, vector<16x32xf32>
    %c0_1 = arith.constant 0 : index
    %c0_2 = arith.constant 0 : index
    %2 = vector.load %arg1[%c0_1, %c0_2] : memref<32x128xf32, #tpu.memory_space<vmem>>, vector<32x128xf32>
    %cst_3 = arith.constant dense<0.000000e+00> : vector<16x128xf32>
    %3 = tpu.matmul %1, %2, %cst_3 {dimension_numbers = #tpu.dot_dimension_numbers<[1], [0], [0], [1], [0, 0, 1, 1], [], []>} : vector<16x32xf32>, vector<32x128xf32>, vector<16x128xf32> -> vector<16x128xf32>
    %c0_4 = arith.constant 0 : index
    %c0_5 = arith.constant 0 : index
    %4 = vector.load %arg3[%c0_4, %c0_5] : memref<1x128xf32, #tpu.memory_space<vmem>>, vector<1x128xf32>
    %5 = vector.broadcast %4 : vector<1x128xf32> to vector<16x128xf32>
    %6 = arith.addf %3, %5 : vector<16x128xf32>
    %c0_6 = arith.constant 0 : index
    %c0_7 = arith.constant 0 : index
    %7 = vector.load %arg4[%c0_6, %c0_7] : memref<32x128xf32, #tpu.memory_space<vmem>>, vector<32x128xf32>
    %cst_8 = arith.constant dense<0.000000e+00> : vector<16x128xf32>
    %8 = tpu.matmul %1, %7, %cst_8 {dimension_numbers = #tpu.dot_dimension_numbers<[1], [0], [0], [1], [0, 0, 1, 1], [], []>} : vector<16x32xf32>, vector<32x128xf32>, vector<16x128xf32> -> vector<16x128xf32>
    %c0_9 = arith.constant 0 : index
    %c0_10 = arith.constant 0 : index
    %9 = vector.load %arg6[%c0_9, %c0_10] : memref<1x128xf32, #tpu.memory_space<vmem>>, vector<1x128xf32>
    %10 = vector.broadcast %9 : vector<1x128xf32> to vector<16x128xf32>
    %11 = arith.addf %8, %10 : vector<16x128xf32>
    %12 = vector.extract_strided_slice %6 {offsets = [0, 0], sizes = [2, 128], strides = [1, 1]} : vector<16x128xf32> to vector<2x128xf32>
    %c0_11 = arith.constant 0 : index
    %c0_12 = arith.constant 0 : index
    %13 = vector.load %arg2[%c0_11, %c0_12] : memref<32x128xf32, #tpu.memory_space<vmem>>, vector<32x128xf32>
    %cst_13 = arith.constant dense<0.000000e+00> : vector<2x128xf32>
    %14 = tpu.matmul %0, %13, %cst_13 {dimension_numbers = #tpu.dot_dimension_numbers<[1], [0], [0], [1], [0, 0, 1, 1], [], []>} : vector<2x32xf32>, vector<32x128xf32>, vector<2x128xf32> -> vector<2x128xf32>
    %15 = arith.addf %12, %14 : vector<2x128xf32>
    %16 = arith.negf %15 : vector<2x128xf32>
    %17 = math.exp %16 : vector<2x128xf32>
    %cst_14 = arith.constant 1.000000e+00 : f32
    %18 = vector.broadcast %cst_14 : f32 to vector<2x128xf32>
    %19 = arith.addf %18, %17 : vector<2x128xf32>
    %20 = arith.divf %18, %19 : vector<2x128xf32>
    %21 = vector.extract_strided_slice %20 {offsets = [0, 0], sizes = [2, 32], strides = [1, 1]} : vector<2x128xf32> to vector<2x32xf32>
    %22 = vector.extract_strided_slice %20 {offsets = [0, 32], sizes = [2, 32], strides = [1, 1]} : vector<2x128xf32> to vector<2x32xf32>
    %23 = vector.extract_strided_slice %20 {offsets = [0, 96], sizes = [2, 32], strides = [1, 1]} : vector<2x128xf32> to vector<2x32xf32>
    %24 = vector.extract_strided_slice %15 {offsets = [0, 64], sizes = [2, 32], strides = [1, 1]} : vector<2x128xf32> to vector<2x32xf32>
    %25 = math.tanh %24 : vector<2x32xf32>
    %26 = arith.mulf %22, %0 : vector<2x32xf32>
    %27 = arith.mulf %21, %25 : vector<2x32xf32>
    %28 = arith.addf %26, %27 : vector<2x32xf32>
    %29 = math.tanh %28 : vector<2x32xf32>
    %30 = arith.mulf %23, %29 : vector<2x32xf32>
    %c0_15 = arith.constant 0 : index
    %c0_16 = arith.constant 0 : index
    %31 = vector.load %arg26[%c0_15, %c0_16] : memref<16x64xf32, #tpu.memory_space<vmem>>, vector<2x32xf32>
    tpu.vector_store %arg26[%c0_15, %c0_16], %30 {strides = array<i32>} : memref<16x64xf32, #tpu.memory_space<vmem>>, vector<2x32xf32>,
    %32 = vector.extract_strided_slice %11 {offsets = [14, 0], sizes = [2, 128], strides = [1, 1]} : vector<16x128xf32> to vector<2x128xf32>
    %c0_17 = arith.constant 0 : index
    %c0_18 = arith.constant 0 : index
    %33 = vector.load %arg5[%c0_17, %c0_18] : memref<32x128xf32, #tpu.memory_space<vmem>>, vector<32x128xf32>
    %cst_19 = arith.constant dense<0.000000e+00> : vector<2x128xf32>
    %34 = tpu.matmul %0, %33, %cst_19 {dimension_numbers = #tpu.dot_dimension_numbers<[1], [0], [0], [1], [0, 0, 1, 1], [], []>} : vector<2x32xf32>, vector<32x128xf32>, vector<2x128xf32> -> vector<2x128xf32>
    %35 = arith.addf %32, %34 : vector<2x128xf32>
    %36 = arith.negf %35 : vector<2x128xf32>
    %37 = math.exp %36 : vector<2x128xf32>
    %cst_20 = arith.constant 1.000000e+00 : f32
    %38 = vector.broadcast %cst_20 : f32 to vector<2x128xf32>
    %39 = arith.addf %38, %37 : vector<2x128xf32>
    %40 = arith.divf %38, %39 : vector<2x128xf32>
    %41 = vector.extract_strided_slice %40 {offsets = [0, 0], sizes = [2, 32], strides = [1, 1]} : vector<2x128xf32> to vector<2x32xf32>
    %42 = vector.extract_strided_slice %40 {offsets = [0, 32], sizes = [2, 32], strides = [1, 1]} : vector<2x128xf32> to vector<2x32xf32>
    %43 = vector.extract_strided_slice %40 {offsets = [0, 96], sizes = [2, 32], strides = [1, 1]} : vector<2x128xf32> to vector<2x32xf32>
    %44 = vector.extract_strided_slice %35 {offsets = [0, 64], sizes = [2, 32], strides = [1, 1]} : vector<2x128xf32> to vector<2x32xf32>
    %45 = math.tanh %44 : vector<2x32xf32>
    %46 = arith.mulf %42, %0 : vector<2x32xf32>
    %47 = arith.mulf %41, %45 : vector<2x32xf32>
    %48 = arith.addf %46, %47 : vector<2x32xf32>
    %49 = math.tanh %48 : vector<2x32xf32>
    %50 = arith.mulf %43, %49 : vector<2x32xf32>
    %c14 = arith.constant 14 : index
    %c32 = arith.constant 32 : index
    %51 = vector.load %arg26[%c14, %c32] : memref<16x64xf32, #tpu.memory_space<vmem>>, vector<2x32xf32>
    tpu.vector_store %arg26[%c14, %c32], %50 {strides = array<i32>} : memref<16x64xf32, #tpu.memory_space<vmem>>, vector<2x32xf32>,
    %52 = vector.extract_strided_slice %6 {offsets = [2, 0], sizes = [2, 128], strides = [1, 1]} : vector<16x128xf32> to vector<2x128xf32>
    %c0_21 = arith.constant 0 : index
    %c0_22 = arith.constant 0 : index
    %53 = vector.load %arg2[%c0_21, %c0_22] : memref<32x128xf32, #tpu.memory_space<vmem>>, vector<32x128xf32>
    %cst_23 = arith.constant dense<0.000000e+00> : vector<2x128xf32>
    %54 = tpu.matmul %30, %53, %cst_23 {dimension_numbers = #tpu.dot_dimension_numbers<[1], [0], [0], [1], [0, 0, 1, 1], [], []>} : vector<2x32xf32>, vector<32x128xf32>, vector<2x128xf32> -> vector<2x128xf32>
    %55 = arith.addf %52, %54 : vector<2x128xf32>
    %56 = arith.negf %55 : vector<2x128xf32>
    %57 = math.exp %56 : vector<2x128xf32>
    %cst_24 = arith.constant 1.000000e+00 : f32
    %58 = vector.broadcast %cst_24 : f32 to vector<2x128xf32>
    %59 = arith.addf %58, %57 : vector<2x128xf32>
    %60 = arith.divf %58, %59 : vector<2x128xf32>
    %61 = vector.extract_strided_slice %60 {offsets = [0, 0], sizes = [2, 32], strides = [1, 1]} : vector<2x128xf32> to vector<2x32xf32>
    %62 = vector.extract_strided_slice %60 {offsets = [0, 32], sizes = [2, 32], strides = [1, 1]} : vector<2x128xf32> to vector<2x32xf32>
    %63 = vector.extract_strided_slice %60 {offsets = [0, 96], sizes = [2, 32], strides = [1, 1]} : vector<2x128xf32> to vector<2x32xf32>
    %64 = vector.extract_strided_slice %55 {offsets = [0, 64], sizes = [2, 32], strides = [1, 1]} : vector<2x128xf32> to vector<2x32xf32>
    %65 = math.tanh %64 : vector<2x32xf32>
    %66 = arith.mulf %62, %28 : vector<2x32xf32>
    %67 = arith.mulf %61, %65 : vector<2x32xf32>
    %68 = arith.addf %66, %67 : vector<2x32xf32>
    %69 = math.tanh %68 : vector<2x32xf32>
    %70 = arith.mulf %63, %69 : vector<2x32xf32>
    %c2 = arith.constant 2 : index
    %c0_25 = arith.constant 0 : index
    %71 = vector.load %arg26[%c2, %c0_25] : memref<16x64xf32, #tpu.memory_space<vmem>>, vector<2x32xf32>
    tpu.vector_store %arg26[%c2, %c0_25], %70 {strides = array<i32>} : memref<16x64xf32, #tpu.memory_space<vmem>>, vector<2x32xf32>,
    %72 = vector.extract_strided_slice %11 {offsets = [12, 0], sizes = [2, 128], strides = [1, 1]} : vector<16x128xf32> to vector<2x128xf32>
    %c0_26 = arith.constant 0 : index
    %c0_27 = arith.constant 0 : index
    %73 = vector.load %arg5[%c0_26, %c0_27] : memref<32x128xf32, #tpu.memory_space<vmem>>, vector<32x128xf32>
    %cst_28 = arith.constant dense<0.000000e+00> : vector<2x128xf32>
    %74 = tpu.matmul %50, %73, %cst_28 {dimension_numbers = #tpu.dot_dimension_numbers<[1], [0], [0], [1], [0, 0, 1, 1], [], []>} : vector<2x32xf32>, vector<32x128xf32>, vector<2x128xf32> -> vector<2x128xf32>
    %75 = arith.addf %72, %74 : vector<2x128xf32>
    %76 = arith.negf %75 : vector<2x128xf32>
    %77 = math.exp %76 : vector<2x128xf32>
    %cst_29 = arith.constant 1.000000e+00 : f32
    %78 = vector.broadcast %cst_29 : f32 to vector<2x128xf32>
    %79 = arith.addf %78, %77 : vector<2x128xf32>
    %80 = arith.divf %78, %79 : vector<2x128xf32>
    %81 = vector.extract_strided_slice %80 {offsets = [0, 0], sizes = [2, 32], strides = [1, 1]} : vector<2x128xf32> to vector<2x32xf32>
    %82 = vector.extract_strided_slice %80 {offsets = [0, 32], sizes = [2, 32], strides = [1, 1]} : vector<2x128xf32> to vector<2x32xf32>
    %83 = vector.extract_strided_slice %80 {offsets = [0, 96], sizes = [2, 32], strides = [1, 1]} : vector<2x128xf32> to vector<2x32xf32>
    %84 = vector.extract_strided_slice %75 {offsets = [0, 64], sizes = [2, 32], strides = [1, 1]} : vector<2x128xf32> to vector<2x32xf32>
    %85 = math.tanh %84 : vector<2x32xf32>
    %86 = arith.mulf %82, %48 : vector<2x32xf32>
    %87 = arith.mulf %81, %85 : vector<2x32xf32>
    %88 = arith.addf %86, %87 : vector<2x32xf32>
    %89 = math.tanh %88 : vector<2x32xf32>
    %90 = arith.mulf %83, %89 : vector<2x32xf32>
    %c12 = arith.constant 12 : index
    %c32_30 = arith.constant 32 : index
    %91 = vector.load %arg26[%c12, %c32_30] : memref<16x64xf32, #tpu.memory_space<vmem>>, vector<2x32xf32>
    tpu.vector_store %arg26[%c12, %c32_30], %90 {strides = array<i32>} : memref<16x64xf32, #tpu.memory_space<vmem>>, vector<2x32xf32>,
    %92 = vector.extract_strided_slice %6 {offsets = [4, 0], sizes = [2, 128], strides = [1, 1]} : vector<16x128xf32> to vector<2x128xf32>
    %c0_31 = arith.constant 0 : index
    %c0_32 = arith.constant 0 : index
    %93 = vector.load %arg2[%c0_31, %c0_32] : memref<32x128xf32, #tpu.memory_space<vmem>>, vector<32x128xf32>
    %cst_33 = arith.constant dense<0.000000e+00> : vector<2x128xf32>
    %94 = tpu.matmul %70, %93, %cst_33 {dimension_numbers = #tpu.dot_dimension_numbers<[1], [0], [0], [1], [0, 0, 1, 1], [], []>} : vector<2x32xf32>, vector<32x128xf32>, vector<2x128xf32> -> vector<2x128xf32>
    %95 = arith.addf %92, %94 : vector<2x128xf32>
    %96 = arith.negf %95 : vector<2x128xf32>
    %97 = math.exp %96 : vector<2x128xf32>
    %cst_34 = arith.constant 1.000000e+00 : f32
    %98 = vector.broadcast %cst_34 : f32 to vector<2x128xf32>
    %99 = arith.addf %98, %97 : vector<2x128xf32>
    %100 = arith.divf %98, %99 : vector<2x128xf32>
    %101 = vector.extract_strided_slice %100 {offsets = [0, 0], sizes = [2, 32], strides = [1, 1]} : vector<2x128xf32> to vector<2x32xf32>
    %102 = vector.extract_strided_slice %100 {offsets = [0, 32], sizes = [2, 32], strides = [1, 1]} : vector<2x128xf32> to vector<2x32xf32>
    %103 = vector.extract_strided_slice %100 {offsets = [0, 96], sizes = [2, 32], strides = [1, 1]} : vector<2x128xf32> to vector<2x32xf32>
    %104 = vector.extract_strided_slice %95 {offsets = [0, 64], sizes = [2, 32], strides = [1, 1]} : vector<2x128xf32> to vector<2x32xf32>
    %105 = math.tanh %104 : vector<2x32xf32>
    %106 = arith.mulf %102, %68 : vector<2x32xf32>
    %107 = arith.mulf %101, %105 : vector<2x32xf32>
    %108 = arith.addf %106, %107 : vector<2x32xf32>
    %109 = math.tanh %108 : vector<2x32xf32>
    %110 = arith.mulf %103, %109 : vector<2x32xf32>
    %c4 = arith.constant 4 : index
    %c0_35 = arith.constant 0 : index
    %111 = vector.load %arg26[%c4, %c0_35] : memref<16x64xf32, #tpu.memory_space<vmem>>, vector<2x32xf32>
    tpu.vector_store %arg26[%c4, %c0_35], %110 {strides = array<i32>} : memref<16x64xf32, #tpu.memory_space<vmem>>, vector<2x32xf32>,
    %112 = vector.extract_strided_slice %11 {offsets = [10, 0], sizes = [2, 128], strides = [1, 1]} : vector<16x128xf32> to vector<2x128xf32>
    %c0_36 = arith.constant 0 : index
    %c0_37 = arith.constant 0 : index
    %113 = vector.load %arg5[%c0_36, %c0_37] : memref<32x128xf32, #tpu.memory_space<vmem>>, vector<32x128xf32>
    %cst_38 = arith.constant dense<0.000000e+00> : vector<2x128xf32>
    %114 = tpu.matmul %90, %113, %cst_38 {dimension_numbers = #tpu.dot_dimension_numbers<[1], [0], [0], [1], [0, 0, 1, 1], [], []>} : vector<2x32xf32>, vector<32x128xf32>, vector<2x128xf32> -> vector<2x128xf32>
    %115 = arith.addf %112, %114 : vector<2x128xf32>
    %116 = arith.negf %115 : vector<2x128xf32>
    %117 = math.exp %116 : vector<2x128xf32>
    %cst_39 = arith.constant 1.000000e+00 : f32
    %118 = vector.broadcast %cst_39 : f32 to vector<2x128xf32>
    %119 = arith.addf %118, %117 : vector<2x128xf32>
    %120 = arith.divf %118, %119 : vector<2x128xf32>
    %121 = vector.extract_strided_slice %120 {offsets = [0, 0], sizes = [2, 32], strides = [1, 1]} : vector<2x128xf32> to vector<2x32xf32>
    %122 = vector.extract_strided_slice %120 {offsets = [0, 32], sizes = [2, 32], strides = [1, 1]} : vector<2x128xf32> to vector<2x32xf32>
    %123 = vector.extract_strided_slice %120 {offsets = [0, 96], sizes = [2, 32], strides = [1, 1]} : vector<2x128xf32> to vector<2x32xf32>
    %124 = vector.extract_strided_slice %115 {offsets = [0, 64], sizes = [2, 32], strides = [1, 1]} : vector<2x128xf32> to vector<2x32xf32>
    %125 = math.tanh %124 : vector<2x32xf32>
    %126 = arith.mulf %122, %88 : vector<2x32xf32>
    %127 = arith.mulf %121, %125 : vector<2x32xf32>
    %128 = arith.addf %126, %127 : vector<2x32xf32>
    %129 = math.tanh %128 : vector<2x32xf32>
    %130 = arith.mulf %123, %129 : vector<2x32xf32>
    %c10 = arith.constant 10 : index
    %c32_40 = arith.constant 32 : index
    %131 = vector.load %arg26[%c10, %c32_40] : memref<16x64xf32, #tpu.memory_space<vmem>>, vector<2x32xf32>
    tpu.vector_store %arg26[%c10, %c32_40], %130 {strides = array<i32>} : memref<16x64xf32, #tpu.memory_space<vmem>>, vector<2x32xf32>,
    %132 = vector.extract_strided_slice %6 {offsets = [6, 0], sizes = [2, 128], strides = [1, 1]} : vector<16x128xf32> to vector<2x128xf32>
    %c0_41 = arith.constant 0 : index
    %c0_42 = arith.constant 0 : index
    %133 = vector.load %arg2[%c0_41, %c0_42] : memref<32x128xf32, #tpu.memory_space<vmem>>, vector<32x128xf32>
    %cst_43 = arith.constant dense<0.000000e+00> : vector<2x128xf32>
    %134 = tpu.matmul %110, %133, %cst_43 {dimension_numbers = #tpu.dot_dimension_numbers<[1], [0], [0], [1], [0, 0, 1, 1], [], []>} : vector<2x32xf32>, vector<32x128xf32>, vector<2x128xf32> -> vector<2x128xf32>
    %135 = arith.addf %132, %134 : vector<2x128xf32>
    %136 = arith.negf %135 : vector<2x128xf32>
    %137 = math.exp %136 : vector<2x128xf32>
    %cst_44 = arith.constant 1.000000e+00 : f32
    %138 = vector.broadcast %cst_44 : f32 to vector<2x128xf32>
    %139 = arith.addf %138, %137 : vector<2x128xf32>
    %140 = arith.divf %138, %139 : vector<2x128xf32>
    %141 = vector.extract_strided_slice %140 {offsets = [0, 0], sizes = [2, 32], strides = [1, 1]} : vector<2x128xf32> to vector<2x32xf32>
    %142 = vector.extract_strided_slice %140 {offsets = [0, 32], sizes = [2, 32], strides = [1, 1]} : vector<2x128xf32> to vector<2x32xf32>
    %143 = vector.extract_strided_slice %140 {offsets = [0, 96], sizes = [2, 32], strides = [1, 1]} : vector<2x128xf32> to vector<2x32xf32>
    %144 = vector.extract_strided_slice %135 {offsets = [0, 64], sizes = [2, 32], strides = [1, 1]} : vector<2x128xf32> to vector<2x32xf32>
    %145 = math.tanh %144 : vector<2x32xf32>
    %146 = arith.mulf %142, %108 : vector<2x32xf32>
    %147 = arith.mulf %141, %145 : vector<2x32xf32>
    %148 = arith.addf %146, %147 : vector<2x32xf32>
    %149 = math.tanh %148 : vector<2x32xf32>
    %150 = arith.mulf %143, %149 : vector<2x32xf32>
    %c6 = arith.constant 6 : index
    %c0_45 = arith.constant 0 : index
    %151 = vector.load %arg26[%c6, %c0_45] : memref<16x64xf32, #tpu.memory_space<vmem>>, vector<2x32xf32>
    tpu.vector_store %arg26[%c6, %c0_45], %150 {strides = array<i32>} : memref<16x64xf32, #tpu.memory_space<vmem>>, vector<2x32xf32>,
    %152 = vector.extract_strided_slice %11 {offsets = [8, 0], sizes = [2, 128], strides = [1, 1]} : vector<16x128xf32> to vector<2x128xf32>
    %c0_46 = arith.constant 0 : index
    %c0_47 = arith.constant 0 : index
    %153 = vector.load %arg5[%c0_46, %c0_47] : memref<32x128xf32, #tpu.memory_space<vmem>>, vector<32x128xf32>
    %cst_48 = arith.constant dense<0.000000e+00> : vector<2x128xf32>
    %154 = tpu.matmul %130, %153, %cst_48 {dimension_numbers = #tpu.dot_dimension_numbers<[1], [0], [0], [1], [0, 0, 1, 1], [], []>} : vector<2x32xf32>, vector<32x128xf32>, vector<2x128xf32> -> vector<2x128xf32>
    %155 = arith.addf %152, %154 : vector<2x128xf32>
    %156 = arith.negf %155 : vector<2x128xf32>
    %157 = math.exp %156 : vector<2x128xf32>
    %cst_49 = arith.constant 1.000000e+00 : f32
    %158 = vector.broadcast %cst_49 : f32 to vector<2x128xf32>
    %159 = arith.addf %158, %157 : vector<2x128xf32>
    %160 = arith.divf %158, %159 : vector<2x128xf32>
    %161 = vector.extract_strided_slice %160 {offsets = [0, 0], sizes = [2, 32], strides = [1, 1]} : vector<2x128xf32> to vector<2x32xf32>
    %162 = vector.extract_strided_slice %160 {offsets = [0, 32], sizes = [2, 32], strides = [1, 1]} : vector<2x128xf32> to vector<2x32xf32>
    %163 = vector.extract_strided_slice %160 {offsets = [0, 96], sizes = [2, 32], strides = [1, 1]} : vector<2x128xf32> to vector<2x32xf32>
    %164 = vector.extract_strided_slice %155 {offsets = [0, 64], sizes = [2, 32], strides = [1, 1]} : vector<2x128xf32> to vector<2x32xf32>
    %165 = math.tanh %164 : vector<2x32xf32>
    %166 = arith.mulf %162, %128 : vector<2x32xf32>
    %167 = arith.mulf %161, %165 : vector<2x32xf32>
    %168 = arith.addf %166, %167 : vector<2x32xf32>
    %169 = math.tanh %168 : vector<2x32xf32>
    %170 = arith.mulf %163, %169 : vector<2x32xf32>
    %c8 = arith.constant 8 : index
    %c32_50 = arith.constant 32 : index
    %171 = vector.load %arg26[%c8, %c32_50] : memref<16x64xf32, #tpu.memory_space<vmem>>, vector<2x32xf32>
    tpu.vector_store %arg26[%c8, %c32_50], %170 {strides = array<i32>} : memref<16x64xf32, #tpu.memory_space<vmem>>, vector<2x32xf32>,
    %172 = vector.extract_strided_slice %6 {offsets = [8, 0], sizes = [2, 128], strides = [1, 1]} : vector<16x128xf32> to vector<2x128xf32>
    %c0_51 = arith.constant 0 : index
    %c0_52 = arith.constant 0 : index
    %173 = vector.load %arg2[%c0_51, %c0_52] : memref<32x128xf32, #tpu.memory_space<vmem>>, vector<32x128xf32>
    %cst_53 = arith.constant dense<0.000000e+00> : vector<2x128xf32>
    %174 = tpu.matmul %150, %173, %cst_53 {dimension_numbers = #tpu.dot_dimension_numbers<[1], [0], [0], [1], [0, 0, 1, 1], [], []>} : vector<2x32xf32>, vector<32x128xf32>, vector<2x128xf32> -> vector<2x128xf32>
    %175 = arith.addf %172, %174 : vector<2x128xf32>
    %176 = arith.negf %175 : vector<2x128xf32>
    %177 = math.exp %176 : vector<2x128xf32>
    %cst_54 = arith.constant 1.000000e+00 : f32
    %178 = vector.broadcast %cst_54 : f32 to vector<2x128xf32>
    %179 = arith.addf %178, %177 : vector<2x128xf32>
    %180 = arith.divf %178, %179 : vector<2x128xf32>
    %181 = vector.extract_strided_slice %180 {offsets = [0, 0], sizes = [2, 32], strides = [1, 1]} : vector<2x128xf32> to vector<2x32xf32>
    %182 = vector.extract_strided_slice %180 {offsets = [0, 32], sizes = [2, 32], strides = [1, 1]} : vector<2x128xf32> to vector<2x32xf32>
    %183 = vector.extract_strided_slice %180 {offsets = [0, 96], sizes = [2, 32], strides = [1, 1]} : vector<2x128xf32> to vector<2x32xf32>
    %184 = vector.extract_strided_slice %175 {offsets = [0, 64], sizes = [2, 32], strides = [1, 1]} : vector<2x128xf32> to vector<2x32xf32>
    %185 = math.tanh %184 : vector<2x32xf32>
    %186 = arith.mulf %182, %148 : vector<2x32xf32>
    %187 = arith.mulf %181, %185 : vector<2x32xf32>
    %188 = arith.addf %186, %187 : vector<2x32xf32>
    %189 = math.tanh %188 : vector<2x32xf32>
    %190 = arith.mulf %183, %189 : vector<2x32xf32>
    %c8_55 = arith.constant 8 : index
    %c0_56 = arith.constant 0 : index
    %191 = vector.load %arg26[%c8_55, %c0_56] : memref<16x64xf32, #tpu.memory_space<vmem>>, vector<2x32xf32>
    tpu.vector_store %arg26[%c8_55, %c0_56], %190 {strides = array<i32>} : memref<16x64xf32, #tpu.memory_space<vmem>>, vector<2x32xf32>,
    %192 = vector.extract_strided_slice %11 {offsets = [6, 0], sizes = [2, 128], strides = [1, 1]} : vector<16x128xf32> to vector<2x128xf32>
    %c0_57 = arith.constant 0 : index
    %c0_58 = arith.constant 0 : index
    %193 = vector.load %arg5[%c0_57, %c0_58] : memref<32x128xf32, #tpu.memory_space<vmem>>, vector<32x128xf32>
    %cst_59 = arith.constant dense<0.000000e+00> : vector<2x128xf32>
    %194 = tpu.matmul %170, %193, %cst_59 {dimension_numbers = #tpu.dot_dimension_numbers<[1], [0], [0], [1], [0, 0, 1, 1], [], []>} : vector<2x32xf32>, vector<32x128xf32>, vector<2x128xf32> -> vector<2x128xf32>
    %195 = arith.addf %192, %194 : vector<2x128xf32>
    %196 = arith.negf %195 : vector<2x128xf32>
    %197 = math.exp %196 : vector<2x128xf32>
    %cst_60 = arith.constant 1.000000e+00 : f32
    %198 = vector.broadcast %cst_60 : f32 to vector<2x128xf32>
    %199 = arith.addf %198, %197 : vector<2x128xf32>
    %200 = arith.divf %198, %199 : vector<2x128xf32>
    %201 = vector.extract_strided_slice %200 {offsets = [0, 0], sizes = [2, 32], strides = [1, 1]} : vector<2x128xf32> to vector<2x32xf32>
    %202 = vector.extract_strided_slice %200 {offsets = [0, 32], sizes = [2, 32], strides = [1, 1]} : vector<2x128xf32> to vector<2x32xf32>
    %203 = vector.extract_strided_slice %200 {offsets = [0, 96], sizes = [2, 32], strides = [1, 1]} : vector<2x128xf32> to vector<2x32xf32>
    %204 = vector.extract_strided_slice %195 {offsets = [0, 64], sizes = [2, 32], strides = [1, 1]} : vector<2x128xf32> to vector<2x32xf32>
    %205 = math.tanh %204 : vector<2x32xf32>
    %206 = arith.mulf %202, %168 : vector<2x32xf32>
    %207 = arith.mulf %201, %205 : vector<2x32xf32>
    %208 = arith.addf %206, %207 : vector<2x32xf32>
    %209 = math.tanh %208 : vector<2x32xf32>
    %210 = arith.mulf %203, %209 : vector<2x32xf32>
    %c6_61 = arith.constant 6 : index
    %c32_62 = arith.constant 32 : index
    %211 = vector.load %arg26[%c6_61, %c32_62] : memref<16x64xf32, #tpu.memory_space<vmem>>, vector<2x32xf32>
    tpu.vector_store %arg26[%c6_61, %c32_62], %210 {strides = array<i32>} : memref<16x64xf32, #tpu.memory_space<vmem>>, vector<2x32xf32>,
    %212 = vector.extract_strided_slice %6 {offsets = [10, 0], sizes = [2, 128], strides = [1, 1]} : vector<16x128xf32> to vector<2x128xf32>
    %c0_63 = arith.constant 0 : index
    %c0_64 = arith.constant 0 : index
    %213 = vector.load %arg2[%c0_63, %c0_64] : memref<32x128xf32, #tpu.memory_space<vmem>>, vector<32x128xf32>
    %cst_65 = arith.constant dense<0.000000e+00> : vector<2x128xf32>
    %214 = tpu.matmul %190, %213, %cst_65 {dimension_numbers = #tpu.dot_dimension_numbers<[1], [0], [0], [1], [0, 0, 1, 1], [], []>} : vector<2x32xf32>, vector<32x128xf32>, vector<2x128xf32> -> vector<2x128xf32>
    %215 = arith.addf %212, %214 : vector<2x128xf32>
    %216 = arith.negf %215 : vector<2x128xf32>
    %217 = math.exp %216 : vector<2x128xf32>
    %cst_66 = arith.constant 1.000000e+00 : f32
    %218 = vector.broadcast %cst_66 : f32 to vector<2x128xf32>
    %219 = arith.addf %218, %217 : vector<2x128xf32>
    %220 = arith.divf %218, %219 : vector<2x128xf32>
    %221 = vector.extract_strided_slice %220 {offsets = [0, 0], sizes = [2, 32], strides = [1, 1]} : vector<2x128xf32> to vector<2x32xf32>
    %222 = vector.extract_strided_slice %220 {offsets = [0, 32], sizes = [2, 32], strides = [1, 1]} : vector<2x128xf32> to vector<2x32xf32>
    %223 = vector.extract_strided_slice %220 {offsets = [0, 96], sizes = [2, 32], strides = [1, 1]} : vector<2x128xf32> to vector<2x32xf32>
    %224 = vector.extract_strided_slice %215 {offsets = [0, 64], sizes = [2, 32], strides = [1, 1]} : vector<2x128xf32> to vector<2x32xf32>
    %225 = math.tanh %224 : vector<2x32xf32>
    %226 = arith.mulf %222, %188 : vector<2x32xf32>
    %227 = arith.mulf %221, %225 : vector<2x32xf32>
    %228 = arith.addf %226, %227 : vector<2x32xf32>
    %229 = math.tanh %228 : vector<2x32xf32>
    %230 = arith.mulf %223, %229 : vector<2x32xf32>
    %c10_67 = arith.constant 10 : index
    %c0_68 = arith.constant 0 : index
    %231 = vector.load %arg26[%c10_67, %c0_68] : memref<16x64xf32, #tpu.memory_space<vmem>>, vector<2x32xf32>
    tpu.vector_store %arg26[%c10_67, %c0_68], %230 {strides = array<i32>} : memref<16x64xf32, #tpu.memory_space<vmem>>, vector<2x32xf32>,
    %232 = vector.extract_strided_slice %11 {offsets = [4, 0], sizes = [2, 128], strides = [1, 1]} : vector<16x128xf32> to vector<2x128xf32>
    %c0_69 = arith.constant 0 : index
    %c0_70 = arith.constant 0 : index
    %233 = vector.load %arg5[%c0_69, %c0_70] : memref<32x128xf32, #tpu.memory_space<vmem>>, vector<32x128xf32>
    %cst_71 = arith.constant dense<0.000000e+00> : vector<2x128xf32>
    %234 = tpu.matmul %210, %233, %cst_71 {dimension_numbers = #tpu.dot_dimension_numbers<[1], [0], [0], [1], [0, 0, 1, 1], [], []>} : vector<2x32xf32>, vector<32x128xf32>, vector<2x128xf32> -> vector<2x128xf32>
    %235 = arith.addf %232, %234 : vector<2x128xf32>
    %236 = arith.negf %235 : vector<2x128xf32>
    %237 = math.exp %236 : vector<2x128xf32>
    %cst_72 = arith.constant 1.000000e+00 : f32
    %238 = vector.broadcast %cst_72 : f32 to vector<2x128xf32>
    %239 = arith.addf %238, %237 : vector<2x128xf32>
    %240 = arith.divf %238, %239 : vector<2x128xf32>
    %241 = vector.extract_strided_slice %240 {offsets = [0, 0], sizes = [2, 32], strides = [1, 1]} : vector<2x128xf32> to vector<2x32xf32>
    %242 = vector.extract_strided_slice %240 {offsets = [0, 32], sizes = [2, 32], strides = [1, 1]} : vector<2x128xf32> to vector<2x32xf32>
    %243 = vector.extract_strided_slice %240 {offsets = [0, 96], sizes = [2, 32], strides = [1, 1]} : vector<2x128xf32> to vector<2x32xf32>
    %244 = vector.extract_strided_slice %235 {offsets = [0, 64], sizes = [2, 32], strides = [1, 1]} : vector<2x128xf32> to vector<2x32xf32>
    %245 = math.tanh %244 : vector<2x32xf32>
    %246 = arith.mulf %242, %208 : vector<2x32xf32>
    %247 = arith.mulf %241, %245 : vector<2x32xf32>
    %248 = arith.addf %246, %247 : vector<2x32xf32>
    %249 = math.tanh %248 : vector<2x32xf32>
    %250 = arith.mulf %243, %249 : vector<2x32xf32>
    %c4_73 = arith.constant 4 : index
    %c32_74 = arith.constant 32 : index
    %251 = vector.load %arg26[%c4_73, %c32_74] : memref<16x64xf32, #tpu.memory_space<vmem>>, vector<2x32xf32>
    tpu.vector_store %arg26[%c4_73, %c32_74], %250 {strides = array<i32>} : memref<16x64xf32, #tpu.memory_space<vmem>>, vector<2x32xf32>,
    %252 = vector.extract_strided_slice %6 {offsets = [12, 0], sizes = [2, 128], strides = [1, 1]} : vector<16x128xf32> to vector<2x128xf32>
    %c0_75 = arith.constant 0 : index
    %c0_76 = arith.constant 0 : index
    %253 = vector.load %arg2[%c0_75, %c0_76] : memref<32x128xf32, #tpu.memory_space<vmem>>, vector<32x128xf32>
    %cst_77 = arith.constant dense<0.000000e+00> : vector<2x128xf32>
    %254 = tpu.matmul %230, %253, %cst_77 {dimension_numbers = #tpu.dot_dimension_numbers<[1], [0], [0], [1], [0, 0, 1, 1], [], []>} : vector<2x32xf32>, vector<32x128xf32>, vector<2x128xf32> -> vector<2x128xf32>
    %255 = arith.addf %252, %254 : vector<2x128xf32>
    %256 = arith.negf %255 : vector<2x128xf32>
    %257 = math.exp %256 : vector<2x128xf32>
    %cst_78 = arith.constant 1.000000e+00 : f32
    %258 = vector.broadcast %cst_78 : f32 to vector<2x128xf32>
    %259 = arith.addf %258, %257 : vector<2x128xf32>
    %260 = arith.divf %258, %259 : vector<2x128xf32>
    %261 = vector.extract_strided_slice %260 {offsets = [0, 0], sizes = [2, 32], strides = [1, 1]} : vector<2x128xf32> to vector<2x32xf32>
    %262 = vector.extract_strided_slice %260 {offsets = [0, 32], sizes = [2, 32], strides = [1, 1]} : vector<2x128xf32> to vector<2x32xf32>
    %263 = vector.extract_strided_slice %260 {offsets = [0, 96], sizes = [2, 32], strides = [1, 1]} : vector<2x128xf32> to vector<2x32xf32>
    %264 = vector.extract_strided_slice %255 {offsets = [0, 64], sizes = [2, 32], strides = [1, 1]} : vector<2x128xf32> to vector<2x32xf32>
    %265 = math.tanh %264 : vector<2x32xf32>
    %266 = arith.mulf %262, %228 : vector<2x32xf32>
    %267 = arith.mulf %261, %265 : vector<2x32xf32>
    %268 = arith.addf %266, %267 : vector<2x32xf32>
    %269 = math.tanh %268 : vector<2x32xf32>
    %270 = arith.mulf %263, %269 : vector<2x32xf32>
    %c12_79 = arith.constant 12 : index
    %c0_80 = arith.constant 0 : index
    %271 = vector.load %arg26[%c12_79, %c0_80] : memref<16x64xf32, #tpu.memory_space<vmem>>, vector<2x32xf32>
    tpu.vector_store %arg26[%c12_79, %c0_80], %270 {strides = array<i32>} : memref<16x64xf32, #tpu.memory_space<vmem>>, vector<2x32xf32>,
    %272 = vector.extract_strided_slice %11 {offsets = [2, 0], sizes = [2, 128], strides = [1, 1]} : vector<16x128xf32> to vector<2x128xf32>
    %c0_81 = arith.constant 0 : index
    %c0_82 = arith.constant 0 : index
    %273 = vector.load %arg5[%c0_81, %c0_82] : memref<32x128xf32, #tpu.memory_space<vmem>>, vector<32x128xf32>
    %cst_83 = arith.constant dense<0.000000e+00> : vector<2x128xf32>
    %274 = tpu.matmul %250, %273, %cst_83 {dimension_numbers = #tpu.dot_dimension_numbers<[1], [0], [0], [1], [0, 0, 1, 1], [], []>} : vector<2x32xf32>, vector<32x128xf32>, vector<2x128xf32> -> vector<2x128xf32>
    %275 = arith.addf %272, %274 : vector<2x128xf32>
    %276 = arith.negf %275 : vector<2x128xf32>
    %277 = math.exp %276 : vector<2x128xf32>
    %cst_84 = arith.constant 1.000000e+00 : f32
    %278 = vector.broadcast %cst_84 : f32 to vector<2x128xf32>
    %279 = arith.addf %278, %277 : vector<2x128xf32>
    %280 = arith.divf %278, %279 : vector<2x128xf32>
    %281 = vector.extract_strided_slice %280 {offsets = [0, 0], sizes = [2, 32], strides = [1, 1]} : vector<2x128xf32> to vector<2x32xf32>
    %282 = vector.extract_strided_slice %280 {offsets = [0, 32], sizes = [2, 32], strides = [1, 1]} : vector<2x128xf32> to vector<2x32xf32>
    %283 = vector.extract_strided_slice %280 {offsets = [0, 96], sizes = [2, 32], strides = [1, 1]} : vector<2x128xf32> to vector<2x32xf32>
    %284 = vector.extract_strided_slice %275 {offsets = [0, 64], sizes = [2, 32], strides = [1, 1]} : vector<2x128xf32> to vector<2x32xf32>
    %285 = math.tanh %284 : vector<2x32xf32>
    %286 = arith.mulf %282, %248 : vector<2x32xf32>
    %287 = arith.mulf %281, %285 : vector<2x32xf32>
    %288 = arith.addf %286, %287 : vector<2x32xf32>
    %289 = math.tanh %288 : vector<2x32xf32>
    %290 = arith.mulf %283, %289 : vector<2x32xf32>
    %c2_85 = arith.constant 2 : index
    %c32_86 = arith.constant 32 : index
    %291 = vector.load %arg26[%c2_85, %c32_86] : memref<16x64xf32, #tpu.memory_space<vmem>>, vector<2x32xf32>
    tpu.vector_store %arg26[%c2_85, %c32_86], %290 {strides = array<i32>} : memref<16x64xf32, #tpu.memory_space<vmem>>, vector<2x32xf32>,
    %292 = vector.extract_strided_slice %6 {offsets = [14, 0], sizes = [2, 128], strides = [1, 1]} : vector<16x128xf32> to vector<2x128xf32>
    %c0_87 = arith.constant 0 : index
    %c0_88 = arith.constant 0 : index
    %293 = vector.load %arg2[%c0_87, %c0_88] : memref<32x128xf32, #tpu.memory_space<vmem>>, vector<32x128xf32>
    %cst_89 = arith.constant dense<0.000000e+00> : vector<2x128xf32>
    %294 = tpu.matmul %270, %293, %cst_89 {dimension_numbers = #tpu.dot_dimension_numbers<[1], [0], [0], [1], [0, 0, 1, 1], [], []>} : vector<2x32xf32>, vector<32x128xf32>, vector<2x128xf32> -> vector<2x128xf32>
    %295 = arith.addf %292, %294 : vector<2x128xf32>
    %296 = arith.negf %295 : vector<2x128xf32>
    %297 = math.exp %296 : vector<2x128xf32>
    %cst_90 = arith.constant 1.000000e+00 : f32
    %298 = vector.broadcast %cst_90 : f32 to vector<2x128xf32>
    %299 = arith.addf %298, %297 : vector<2x128xf32>
    %300 = arith.divf %298, %299 : vector<2x128xf32>
    %301 = vector.extract_strided_slice %300 {offsets = [0, 0], sizes = [2, 32], strides = [1, 1]} : vector<2x128xf32> to vector<2x32xf32>
    %302 = vector.extract_strided_slice %300 {offsets = [0, 32], sizes = [2, 32], strides = [1, 1]} : vector<2x128xf32> to vector<2x32xf32>
    %303 = vector.extract_strided_slice %300 {offsets = [0, 96], sizes = [2, 32], strides = [1, 1]} : vector<2x128xf32> to vector<2x32xf32>
    %304 = vector.extract_strided_slice %295 {offsets = [0, 64], sizes = [2, 32], strides = [1, 1]} : vector<2x128xf32> to vector<2x32xf32>
    %305 = math.tanh %304 : vector<2x32xf32>
    %306 = arith.mulf %302, %268 : vector<2x32xf32>
    %307 = arith.mulf %301, %305 : vector<2x32xf32>
    %308 = arith.addf %306, %307 : vector<2x32xf32>
    %309 = math.tanh %308 : vector<2x32xf32>
    %310 = arith.mulf %303, %309 : vector<2x32xf32>
    %c14_91 = arith.constant 14 : index
    %c0_92 = arith.constant 0 : index
    %311 = vector.load %arg26[%c14_91, %c0_92] : memref<16x64xf32, #tpu.memory_space<vmem>>, vector<2x32xf32>
    tpu.vector_store %arg26[%c14_91, %c0_92], %310 {strides = array<i32>} : memref<16x64xf32, #tpu.memory_space<vmem>>, vector<2x32xf32>,
    %312 = vector.extract_strided_slice %11 {offsets = [0, 0], sizes = [2, 128], strides = [1, 1]} : vector<16x128xf32> to vector<2x128xf32>
    %c0_93 = arith.constant 0 : index
    %c0_94 = arith.constant 0 : index
    %313 = vector.load %arg5[%c0_93, %c0_94] : memref<32x128xf32, #tpu.memory_space<vmem>>, vector<32x128xf32>
    %cst_95 = arith.constant dense<0.000000e+00> : vector<2x128xf32>
    %314 = tpu.matmul %290, %313, %cst_95 {dimension_numbers = #tpu.dot_dimension_numbers<[1], [0], [0], [1], [0, 0, 1, 1], [], []>} : vector<2x32xf32>, vector<32x128xf32>, vector<2x128xf32> -> vector<2x128xf32>
    %315 = arith.addf %312, %314 : vector<2x128xf32>
    %316 = arith.negf %315 : vector<2x128xf32>
    %317 = math.exp %316 : vector<2x128xf32>
    %cst_96 = arith.constant 1.000000e+00 : f32
    %318 = vector.broadcast %cst_96 : f32 to vector<2x128xf32>
    %319 = arith.addf %318, %317 : vector<2x128xf32>
    %320 = arith.divf %318, %319 : vector<2x128xf32>
    %321 = vector.extract_strided_slice %320 {offsets = [0, 0], sizes = [2, 32], strides = [1, 1]} : vector<2x128xf32> to vector<2x32xf32>
    %322 = vector.extract_strided_slice %320 {offsets = [0, 32], sizes = [2, 32], strides = [1, 1]} : vector<2x128xf32> to vector<2x32xf32>
    %323 = vector.extract_strided_slice %320 {offsets = [0, 96], sizes = [2, 32], strides = [1, 1]} : vector<2x128xf32> to vector<2x32xf32>
    %324 = vector.extract_strided_slice %315 {offsets = [0, 64], sizes = [2, 32], strides = [1, 1]} : vector<2x128xf32> to vector<2x32xf32>
    %325 = math.tanh %324 : vector<2x32xf32>
    %326 = arith.mulf %322, %288 : vector<2x32xf32>
    %327 = arith.mulf %321, %325 : vector<2x32xf32>
    %328 = arith.addf %326, %327 : vector<2x32xf32>
    %329 = math.tanh %328 : vector<2x32xf32>
    %330 = arith.mulf %323, %329 : vector<2x32xf32>
    %c0_97 = arith.constant 0 : index
    %c32_98 = arith.constant 32 : index
    %331 = vector.load %arg26[%c0_97, %c32_98] : memref<16x64xf32, #tpu.memory_space<vmem>>, vector<2x32xf32>
    tpu.vector_store %arg26[%c0_97, %c32_98], %330 {strides = array<i32>} : memref<16x64xf32, #tpu.memory_space<vmem>>, vector<2x32xf32>,
    %c0_99 = arith.constant 0 : index
    %c0_100 = arith.constant 0 : index
    %332 = vector.load %arg26[%c0_99, %c0_100] : memref<16x64xf32, #tpu.memory_space<vmem>>, vector<16x64xf32>
    %c0_101 = arith.constant 0 : index
    %c0_102 = arith.constant 0 : index
    %333 = vector.load %arg7[%c0_101, %c0_102] : memref<64x128xf32, #tpu.memory_space<vmem>>, vector<64x128xf32>
    %cst_103 = arith.constant dense<0.000000e+00> : vector<16x128xf32>
    %334 = tpu.matmul %332, %333, %cst_103 {dimension_numbers = #tpu.dot_dimension_numbers<[1], [0], [0], [1], [0, 0, 1, 1], [], []>} : vector<16x64xf32>, vector<64x128xf32>, vector<16x128xf32> -> vector<16x128xf32>
    %c0_104 = arith.constant 0 : index
    %c0_105 = arith.constant 0 : index
    %335 = vector.load %arg9[%c0_104, %c0_105] : memref<1x128xf32, #tpu.memory_space<vmem>>, vector<1x128xf32>
    %336 = vector.broadcast %335 : vector<1x128xf32> to vector<16x128xf32>
    %337 = arith.addf %334, %336 : vector<16x128xf32>
    %c0_106 = arith.constant 0 : index
    %c0_107 = arith.constant 0 : index
    %338 = vector.load %arg10[%c0_106, %c0_107] : memref<64x128xf32, #tpu.memory_space<vmem>>, vector<64x128xf32>
    %cst_108 = arith.constant dense<0.000000e+00> : vector<16x128xf32>
    %339 = tpu.matmul %332, %338, %cst_108 {dimension_numbers = #tpu.dot_dimension_numbers<[1], [0], [0], [1], [0, 0, 1, 1], [], []>} : vector<16x64xf32>, vector<64x128xf32>, vector<16x128xf32> -> vector<16x128xf32>
    %c0_109 = arith.constant 0 : index
    %c0_110 = arith.constant 0 : index
    %340 = vector.load %arg12[%c0_109, %c0_110] : memref<1x128xf32, #tpu.memory_space<vmem>>, vector<1x128xf32>
    %341 = vector.broadcast %340 : vector<1x128xf32> to vector<16x128xf32>
    %342 = arith.addf %339, %341 : vector<16x128xf32>
    %343 = vector.extract_strided_slice %337 {offsets = [0, 0], sizes = [2, 128], strides = [1, 1]} : vector<16x128xf32> to vector<2x128xf32>
    %c0_111 = arith.constant 0 : index
    %c0_112 = arith.constant 0 : index
    %344 = vector.load %arg8[%c0_111, %c0_112] : memref<32x128xf32, #tpu.memory_space<vmem>>, vector<32x128xf32>
    %cst_113 = arith.constant dense<0.000000e+00> : vector<2x128xf32>
    %345 = tpu.matmul %0, %344, %cst_113 {dimension_numbers = #tpu.dot_dimension_numbers<[1], [0], [0], [1], [0, 0, 1, 1], [], []>} : vector<2x32xf32>, vector<32x128xf32>, vector<2x128xf32> -> vector<2x128xf32>
    %346 = arith.addf %343, %345 : vector<2x128xf32>
    %347 = arith.negf %346 : vector<2x128xf32>
    %348 = math.exp %347 : vector<2x128xf32>
    %cst_114 = arith.constant 1.000000e+00 : f32
    %349 = vector.broadcast %cst_114 : f32 to vector<2x128xf32>
    %350 = arith.addf %349, %348 : vector<2x128xf32>
    %351 = arith.divf %349, %350 : vector<2x128xf32>
    %352 = vector.extract_strided_slice %351 {offsets = [0, 0], sizes = [2, 32], strides = [1, 1]} : vector<2x128xf32> to vector<2x32xf32>
    %353 = vector.extract_strided_slice %351 {offsets = [0, 32], sizes = [2, 32], strides = [1, 1]} : vector<2x128xf32> to vector<2x32xf32>
    %354 = vector.extract_strided_slice %351 {offsets = [0, 96], sizes = [2, 32], strides = [1, 1]} : vector<2x128xf32> to vector<2x32xf32>
    %355 = vector.extract_strided_slice %346 {offsets = [0, 64], sizes = [2, 32], strides = [1, 1]} : vector<2x128xf32> to vector<2x32xf32>
    %356 = math.tanh %355 : vector<2x32xf32>
    %357 = arith.mulf %353, %0 : vector<2x32xf32>
    %358 = arith.mulf %352, %356 : vector<2x32xf32>
    %359 = arith.addf %357, %358 : vector<2x32xf32>
    %360 = math.tanh %359 : vector<2x32xf32>
    %361 = arith.mulf %354, %360 : vector<2x32xf32>
    %c0_115 = arith.constant 0 : index
    %c0_116 = arith.constant 0 : index
    %362 = vector.load %arg26[%c0_115, %c0_116] : memref<16x64xf32, #tpu.memory_space<vmem>>, vector<2x32xf32>
    tpu.vector_store %arg26[%c0_115, %c0_116], %361 {strides = array<i32>} : memref<16x64xf32, #tpu.memory_space<vmem>>, vector<2x32xf32>,
    %363 = vector.extract_strided_slice %342 {offsets = [14, 0], sizes = [2, 128], strides = [1, 1]} : vector<16x128xf32> to vector<2x128xf32>
    %c0_117 = arith.constant 0 : index
    %c0_118 = arith.constant 0 : index
    %364 = vector.load %arg11[%c0_117, %c0_118] : memref<32x128xf32, #tpu.memory_space<vmem>>, vector<32x128xf32>
    %cst_119 = arith.constant dense<0.000000e+00> : vector<2x128xf32>
    %365 = tpu.matmul %0, %364, %cst_119 {dimension_numbers = #tpu.dot_dimension_numbers<[1], [0], [0], [1], [0, 0, 1, 1], [], []>} : vector<2x32xf32>, vector<32x128xf32>, vector<2x128xf32> -> vector<2x128xf32>
    %366 = arith.addf %363, %365 : vector<2x128xf32>
    %367 = arith.negf %366 : vector<2x128xf32>
    %368 = math.exp %367 : vector<2x128xf32>
    %cst_120 = arith.constant 1.000000e+00 : f32
    %369 = vector.broadcast %cst_120 : f32 to vector<2x128xf32>
    %370 = arith.addf %369, %368 : vector<2x128xf32>
    %371 = arith.divf %369, %370 : vector<2x128xf32>
    %372 = vector.extract_strided_slice %371 {offsets = [0, 0], sizes = [2, 32], strides = [1, 1]} : vector<2x128xf32> to vector<2x32xf32>
    %373 = vector.extract_strided_slice %371 {offsets = [0, 32], sizes = [2, 32], strides = [1, 1]} : vector<2x128xf32> to vector<2x32xf32>
    %374 = vector.extract_strided_slice %371 {offsets = [0, 96], sizes = [2, 32], strides = [1, 1]} : vector<2x128xf32> to vector<2x32xf32>
    %375 = vector.extract_strided_slice %366 {offsets = [0, 64], sizes = [2, 32], strides = [1, 1]} : vector<2x128xf32> to vector<2x32xf32>
    %376 = math.tanh %375 : vector<2x32xf32>
    %377 = arith.mulf %373, %0 : vector<2x32xf32>
    %378 = arith.mulf %372, %376 : vector<2x32xf32>
    %379 = arith.addf %377, %378 : vector<2x32xf32>
    %380 = math.tanh %379 : vector<2x32xf32>
    %381 = arith.mulf %374, %380 : vector<2x32xf32>
    %c14_121 = arith.constant 14 : index
    %c32_122 = arith.constant 32 : index
    %382 = vector.load %arg26[%c14_121, %c32_122] : memref<16x64xf32, #tpu.memory_space<vmem>>, vector<2x32xf32>
    tpu.vector_store %arg26[%c14_121, %c32_122], %381 {strides = array<i32>} : memref<16x64xf32, #tpu.memory_space<vmem>>, vector<2x32xf32>,
    %383 = vector.extract_strided_slice %337 {offsets = [2, 0], sizes = [2, 128], strides = [1, 1]} : vector<16x128xf32> to vector<2x128xf32>
    %c0_123 = arith.constant 0 : index
    %c0_124 = arith.constant 0 : index
    %384 = vector.load %arg8[%c0_123, %c0_124] : memref<32x128xf32, #tpu.memory_space<vmem>>, vector<32x128xf32>
    %cst_125 = arith.constant dense<0.000000e+00> : vector<2x128xf32>
    %385 = tpu.matmul %361, %384, %cst_125 {dimension_numbers = #tpu.dot_dimension_numbers<[1], [0], [0], [1], [0, 0, 1, 1], [], []>} : vector<2x32xf32>, vector<32x128xf32>, vector<2x128xf32> -> vector<2x128xf32>
    %386 = arith.addf %383, %385 : vector<2x128xf32>
    %387 = arith.negf %386 : vector<2x128xf32>
    %388 = math.exp %387 : vector<2x128xf32>
    %cst_126 = arith.constant 1.000000e+00 : f32
    %389 = vector.broadcast %cst_126 : f32 to vector<2x128xf32>
    %390 = arith.addf %389, %388 : vector<2x128xf32>
    %391 = arith.divf %389, %390 : vector<2x128xf32>
    %392 = vector.extract_strided_slice %391 {offsets = [0, 0], sizes = [2, 32], strides = [1, 1]} : vector<2x128xf32> to vector<2x32xf32>
    %393 = vector.extract_strided_slice %391 {offsets = [0, 32], sizes = [2, 32], strides = [1, 1]} : vector<2x128xf32> to vector<2x32xf32>
    %394 = vector.extract_strided_slice %391 {offsets = [0, 96], sizes = [2, 32], strides = [1, 1]} : vector<2x128xf32> to vector<2x32xf32>
    %395 = vector.extract_strided_slice %386 {offsets = [0, 64], sizes = [2, 32], strides = [1, 1]} : vector<2x128xf32> to vector<2x32xf32>
    %396 = math.tanh %395 : vector<2x32xf32>
    %397 = arith.mulf %393, %359 : vector<2x32xf32>
    %398 = arith.mulf %392, %396 : vector<2x32xf32>
    %399 = arith.addf %397, %398 : vector<2x32xf32>
    %400 = math.tanh %399 : vector<2x32xf32>
    %401 = arith.mulf %394, %400 : vector<2x32xf32>
    %c2_127 = arith.constant 2 : index
    %c0_128 = arith.constant 0 : index
    %402 = vector.load %arg26[%c2_127, %c0_128] : memref<16x64xf32, #tpu.memory_space<vmem>>, vector<2x32xf32>
    tpu.vector_store %arg26[%c2_127, %c0_128], %401 {strides = array<i32>} : memref<16x64xf32, #tpu.memory_space<vmem>>, vector<2x32xf32>,
    %403 = vector.extract_strided_slice %342 {offsets = [12, 0], sizes = [2, 128], strides = [1, 1]} : vector<16x128xf32> to vector<2x128xf32>
    %c0_129 = arith.constant 0 : index
    %c0_130 = arith.constant 0 : index
    %404 = vector.load %arg11[%c0_129, %c0_130] : memref<32x128xf32, #tpu.memory_space<vmem>>, vector<32x128xf32>
    %cst_131 = arith.constant dense<0.000000e+00> : vector<2x128xf32>
    %405 = tpu.matmul %381, %404, %cst_131 {dimension_numbers = #tpu.dot_dimension_numbers<[1], [0], [0], [1], [0, 0, 1, 1], [], []>} : vector<2x32xf32>, vector<32x128xf32>, vector<2x128xf32> -> vector<2x128xf32>
    %406 = arith.addf %403, %405 : vector<2x128xf32>
    %407 = arith.negf %406 : vector<2x128xf32>
    %408 = math.exp %407 : vector<2x128xf32>
    %cst_132 = arith.constant 1.000000e+00 : f32
    %409 = vector.broadcast %cst_132 : f32 to vector<2x128xf32>
    %410 = arith.addf %409, %408 : vector<2x128xf32>
    %411 = arith.divf %409, %410 : vector<2x128xf32>
    %412 = vector.extract_strided_slice %411 {offsets = [0, 0], sizes = [2, 32], strides = [1, 1]} : vector<2x128xf32> to vector<2x32xf32>
    %413 = vector.extract_strided_slice %411 {offsets = [0, 32], sizes = [2, 32], strides = [1, 1]} : vector<2x128xf32> to vector<2x32xf32>
    %414 = vector.extract_strided_slice %411 {offsets = [0, 96], sizes = [2, 32], strides = [1, 1]} : vector<2x128xf32> to vector<2x32xf32>
    %415 = vector.extract_strided_slice %406 {offsets = [0, 64], sizes = [2, 32], strides = [1, 1]} : vector<2x128xf32> to vector<2x32xf32>
    %416 = math.tanh %415 : vector<2x32xf32>
    %417 = arith.mulf %413, %379 : vector<2x32xf32>
    %418 = arith.mulf %412, %416 : vector<2x32xf32>
    %419 = arith.addf %417, %418 : vector<2x32xf32>
    %420 = math.tanh %419 : vector<2x32xf32>
    %421 = arith.mulf %414, %420 : vector<2x32xf32>
    %c12_133 = arith.constant 12 : index
    %c32_134 = arith.constant 32 : index
    %422 = vector.load %arg26[%c12_133, %c32_134] : memref<16x64xf32, #tpu.memory_space<vmem>>, vector<2x32xf32>
    tpu.vector_store %arg26[%c12_133, %c32_134], %421 {strides = array<i32>} : memref<16x64xf32, #tpu.memory_space<vmem>>, vector<2x32xf32>,
    %423 = vector.extract_strided_slice %337 {offsets = [4, 0], sizes = [2, 128], strides = [1, 1]} : vector<16x128xf32> to vector<2x128xf32>
    %c0_135 = arith.constant 0 : index
    %c0_136 = arith.constant 0 : index
    %424 = vector.load %arg8[%c0_135, %c0_136] : memref<32x128xf32, #tpu.memory_space<vmem>>, vector<32x128xf32>
    %cst_137 = arith.constant dense<0.000000e+00> : vector<2x128xf32>
    %425 = tpu.matmul %401, %424, %cst_137 {dimension_numbers = #tpu.dot_dimension_numbers<[1], [0], [0], [1], [0, 0, 1, 1], [], []>} : vector<2x32xf32>, vector<32x128xf32>, vector<2x128xf32> -> vector<2x128xf32>
    %426 = arith.addf %423, %425 : vector<2x128xf32>
    %427 = arith.negf %426 : vector<2x128xf32>
    %428 = math.exp %427 : vector<2x128xf32>
    %cst_138 = arith.constant 1.000000e+00 : f32
    %429 = vector.broadcast %cst_138 : f32 to vector<2x128xf32>
    %430 = arith.addf %429, %428 : vector<2x128xf32>
    %431 = arith.divf %429, %430 : vector<2x128xf32>
    %432 = vector.extract_strided_slice %431 {offsets = [0, 0], sizes = [2, 32], strides = [1, 1]} : vector<2x128xf32> to vector<2x32xf32>
    %433 = vector.extract_strided_slice %431 {offsets = [0, 32], sizes = [2, 32], strides = [1, 1]} : vector<2x128xf32> to vector<2x32xf32>
    %434 = vector.extract_strided_slice %431 {offsets = [0, 96], sizes = [2, 32], strides = [1, 1]} : vector<2x128xf32> to vector<2x32xf32>
    %435 = vector.extract_strided_slice %426 {offsets = [0, 64], sizes = [2, 32], strides = [1, 1]} : vector<2x128xf32> to vector<2x32xf32>
    %436 = math.tanh %435 : vector<2x32xf32>
    %437 = arith.mulf %433, %399 : vector<2x32xf32>
    %438 = arith.mulf %432, %436 : vector<2x32xf32>
    %439 = arith.addf %437, %438 : vector<2x32xf32>
    %440 = math.tanh %439 : vector<2x32xf32>
    %441 = arith.mulf %434, %440 : vector<2x32xf32>
    %c4_139 = arith.constant 4 : index
    %c0_140 = arith.constant 0 : index
    %442 = vector.load %arg26[%c4_139, %c0_140] : memref<16x64xf32, #tpu.memory_space<vmem>>, vector<2x32xf32>
    tpu.vector_store %arg26[%c4_139, %c0_140], %441 {strides = array<i32>} : memref<16x64xf32, #tpu.memory_space<vmem>>, vector<2x32xf32>,
    %443 = vector.extract_strided_slice %342 {offsets = [10, 0], sizes = [2, 128], strides = [1, 1]} : vector<16x128xf32> to vector<2x128xf32>
    %c0_141 = arith.constant 0 : index
    %c0_142 = arith.constant 0 : index
    %444 = vector.load %arg11[%c0_141, %c0_142] : memref<32x128xf32, #tpu.memory_space<vmem>>, vector<32x128xf32>
    %cst_143 = arith.constant dense<0.000000e+00> : vector<2x128xf32>
    %445 = tpu.matmul %421, %444, %cst_143 {dimension_numbers = #tpu.dot_dimension_numbers<[1], [0], [0], [1], [0, 0, 1, 1], [], []>} : vector<2x32xf32>, vector<32x128xf32>, vector<2x128xf32> -> vector<2x128xf32>
    %446 = arith.addf %443, %445 : vector<2x128xf32>
    %447 = arith.negf %446 : vector<2x128xf32>
    %448 = math.exp %447 : vector<2x128xf32>
    %cst_144 = arith.constant 1.000000e+00 : f32
    %449 = vector.broadcast %cst_144 : f32 to vector<2x128xf32>
    %450 = arith.addf %449, %448 : vector<2x128xf32>
    %451 = arith.divf %449, %450 : vector<2x128xf32>
    %452 = vector.extract_strided_slice %451 {offsets = [0, 0], sizes = [2, 32], strides = [1, 1]} : vector<2x128xf32> to vector<2x32xf32>
    %453 = vector.extract_strided_slice %451 {offsets = [0, 32], sizes = [2, 32], strides = [1, 1]} : vector<2x128xf32> to vector<2x32xf32>
    %454 = vector.extract_strided_slice %451 {offsets = [0, 96], sizes = [2, 32], strides = [1, 1]} : vector<2x128xf32> to vector<2x32xf32>
    %455 = vector.extract_strided_slice %446 {offsets = [0, 64], sizes = [2, 32], strides = [1, 1]} : vector<2x128xf32> to vector<2x32xf32>
    %456 = math.tanh %455 : vector<2x32xf32>
    %457 = arith.mulf %453, %419 : vector<2x32xf32>
    %458 = arith.mulf %452, %456 : vector<2x32xf32>
    %459 = arith.addf %457, %458 : vector<2x32xf32>
    %460 = math.tanh %459 : vector<2x32xf32>
    %461 = arith.mulf %454, %460 : vector<2x32xf32>
    %c10_145 = arith.constant 10 : index
    %c32_146 = arith.constant 32 : index
    %462 = vector.load %arg26[%c10_145, %c32_146] : memref<16x64xf32, #tpu.memory_space<vmem>>, vector<2x32xf32>
    tpu.vector_store %arg26[%c10_145, %c32_146], %461 {strides = array<i32>} : memref<16x64xf32, #tpu.memory_space<vmem>>, vector<2x32xf32>,
    %463 = vector.extract_strided_slice %337 {offsets = [6, 0], sizes = [2, 128], strides = [1, 1]} : vector<16x128xf32> to vector<2x128xf32>
    %c0_147 = arith.constant 0 : index
    %c0_148 = arith.constant 0 : index
    %464 = vector.load %arg8[%c0_147, %c0_148] : memref<32x128xf32, #tpu.memory_space<vmem>>, vector<32x128xf32>
    %cst_149 = arith.constant dense<0.000000e+00> : vector<2x128xf32>
    %465 = tpu.matmul %441, %464, %cst_149 {dimension_numbers = #tpu.dot_dimension_numbers<[1], [0], [0], [1], [0, 0, 1, 1], [], []>} : vector<2x32xf32>, vector<32x128xf32>, vector<2x128xf32> -> vector<2x128xf32>
    %466 = arith.addf %463, %465 : vector<2x128xf32>
    %467 = arith.negf %466 : vector<2x128xf32>
    %468 = math.exp %467 : vector<2x128xf32>
    %cst_150 = arith.constant 1.000000e+00 : f32
    %469 = vector.broadcast %cst_150 : f32 to vector<2x128xf32>
    %470 = arith.addf %469, %468 : vector<2x128xf32>
    %471 = arith.divf %469, %470 : vector<2x128xf32>
    %472 = vector.extract_strided_slice %471 {offsets = [0, 0], sizes = [2, 32], strides = [1, 1]} : vector<2x128xf32> to vector<2x32xf32>
    %473 = vector.extract_strided_slice %471 {offsets = [0, 32], sizes = [2, 32], strides = [1, 1]} : vector<2x128xf32> to vector<2x32xf32>
    %474 = vector.extract_strided_slice %471 {offsets = [0, 96], sizes = [2, 32], strides = [1, 1]} : vector<2x128xf32> to vector<2x32xf32>
    %475 = vector.extract_strided_slice %466 {offsets = [0, 64], sizes = [2, 32], strides = [1, 1]} : vector<2x128xf32> to vector<2x32xf32>
    %476 = math.tanh %475 : vector<2x32xf32>
    %477 = arith.mulf %473, %439 : vector<2x32xf32>
    %478 = arith.mulf %472, %476 : vector<2x32xf32>
    %479 = arith.addf %477, %478 : vector<2x32xf32>
    %480 = math.tanh %479 : vector<2x32xf32>
    %481 = arith.mulf %474, %480 : vector<2x32xf32>
    %c6_151 = arith.constant 6 : index
    %c0_152 = arith.constant 0 : index
    %482 = vector.load %arg26[%c6_151, %c0_152] : memref<16x64xf32, #tpu.memory_space<vmem>>, vector<2x32xf32>
    tpu.vector_store %arg26[%c6_151, %c0_152], %481 {strides = array<i32>} : memref<16x64xf32, #tpu.memory_space<vmem>>, vector<2x32xf32>,
    %483 = vector.extract_strided_slice %342 {offsets = [8, 0], sizes = [2, 128], strides = [1, 1]} : vector<16x128xf32> to vector<2x128xf32>
    %c0_153 = arith.constant 0 : index
    %c0_154 = arith.constant 0 : index
    %484 = vector.load %arg11[%c0_153, %c0_154] : memref<32x128xf32, #tpu.memory_space<vmem>>, vector<32x128xf32>
    %cst_155 = arith.constant dense<0.000000e+00> : vector<2x128xf32>
    %485 = tpu.matmul %461, %484, %cst_155 {dimension_numbers = #tpu.dot_dimension_numbers<[1], [0], [0], [1], [0, 0, 1, 1], [], []>} : vector<2x32xf32>, vector<32x128xf32>, vector<2x128xf32> -> vector<2x128xf32>
    %486 = arith.addf %483, %485 : vector<2x128xf32>
    %487 = arith.negf %486 : vector<2x128xf32>
    %488 = math.exp %487 : vector<2x128xf32>
    %cst_156 = arith.constant 1.000000e+00 : f32
    %489 = vector.broadcast %cst_156 : f32 to vector<2x128xf32>
    %490 = arith.addf %489, %488 : vector<2x128xf32>
    %491 = arith.divf %489, %490 : vector<2x128xf32>
    %492 = vector.extract_strided_slice %491 {offsets = [0, 0], sizes = [2, 32], strides = [1, 1]} : vector<2x128xf32> to vector<2x32xf32>
    %493 = vector.extract_strided_slice %491 {offsets = [0, 32], sizes = [2, 32], strides = [1, 1]} : vector<2x128xf32> to vector<2x32xf32>
    %494 = vector.extract_strided_slice %491 {offsets = [0, 96], sizes = [2, 32], strides = [1, 1]} : vector<2x128xf32> to vector<2x32xf32>
    %495 = vector.extract_strided_slice %486 {offsets = [0, 64], sizes = [2, 32], strides = [1, 1]} : vector<2x128xf32> to vector<2x32xf32>
    %496 = math.tanh %495 : vector<2x32xf32>
    %497 = arith.mulf %493, %459 : vector<2x32xf32>
    %498 = arith.mulf %492, %496 : vector<2x32xf32>
    %499 = arith.addf %497, %498 : vector<2x32xf32>
    %500 = math.tanh %499 : vector<2x32xf32>
    %501 = arith.mulf %494, %500 : vector<2x32xf32>
    %c8_157 = arith.constant 8 : index
    %c32_158 = arith.constant 32 : index
    %502 = vector.load %arg26[%c8_157, %c32_158] : memref<16x64xf32, #tpu.memory_space<vmem>>, vector<2x32xf32>
    tpu.vector_store %arg26[%c8_157, %c32_158], %501 {strides = array<i32>} : memref<16x64xf32, #tpu.memory_space<vmem>>, vector<2x32xf32>,
    %503 = vector.extract_strided_slice %337 {offsets = [8, 0], sizes = [2, 128], strides = [1, 1]} : vector<16x128xf32> to vector<2x128xf32>
    %c0_159 = arith.constant 0 : index
    %c0_160 = arith.constant 0 : index
    %504 = vector.load %arg8[%c0_159, %c0_160] : memref<32x128xf32, #tpu.memory_space<vmem>>, vector<32x128xf32>
    %cst_161 = arith.constant dense<0.000000e+00> : vector<2x128xf32>
    %505 = tpu.matmul %481, %504, %cst_161 {dimension_numbers = #tpu.dot_dimension_numbers<[1], [0], [0], [1], [0, 0, 1, 1], [], []>} : vector<2x32xf32>, vector<32x128xf32>, vector<2x128xf32> -> vector<2x128xf32>
    %506 = arith.addf %503, %505 : vector<2x128xf32>
    %507 = arith.negf %506 : vector<2x128xf32>
    %508 = math.exp %507 : vector<2x128xf32>
    %cst_162 = arith.constant 1.000000e+00 : f32
    %509 = vector.broadcast %cst_162 : f32 to vector<2x128xf32>
    %510 = arith.addf %509, %508 : vector<2x128xf32>
    %511 = arith.divf %509, %510 : vector<2x128xf32>
    %512 = vector.extract_strided_slice %511 {offsets = [0, 0], sizes = [2, 32], strides = [1, 1]} : vector<2x128xf32> to vector<2x32xf32>
    %513 = vector.extract_strided_slice %511 {offsets = [0, 32], sizes = [2, 32], strides = [1, 1]} : vector<2x128xf32> to vector<2x32xf32>
    %514 = vector.extract_strided_slice %511 {offsets = [0, 96], sizes = [2, 32], strides = [1, 1]} : vector<2x128xf32> to vector<2x32xf32>
    %515 = vector.extract_strided_slice %506 {offsets = [0, 64], sizes = [2, 32], strides = [1, 1]} : vector<2x128xf32> to vector<2x32xf32>
    %516 = math.tanh %515 : vector<2x32xf32>
    %517 = arith.mulf %513, %479 : vector<2x32xf32>
    %518 = arith.mulf %512, %516 : vector<2x32xf32>
    %519 = arith.addf %517, %518 : vector<2x32xf32>
    %520 = math.tanh %519 : vector<2x32xf32>
    %521 = arith.mulf %514, %520 : vector<2x32xf32>
    %c8_163 = arith.constant 8 : index
    %c0_164 = arith.constant 0 : index
    %522 = vector.load %arg26[%c8_163, %c0_164] : memref<16x64xf32, #tpu.memory_space<vmem>>, vector<2x32xf32>
    tpu.vector_store %arg26[%c8_163, %c0_164], %521 {strides = array<i32>} : memref<16x64xf32, #tpu.memory_space<vmem>>, vector<2x32xf32>,
    %523 = vector.extract_strided_slice %342 {offsets = [6, 0], sizes = [2, 128], strides = [1, 1]} : vector<16x128xf32> to vector<2x128xf32>
    %c0_165 = arith.constant 0 : index
    %c0_166 = arith.constant 0 : index
    %524 = vector.load %arg11[%c0_165, %c0_166] : memref<32x128xf32, #tpu.memory_space<vmem>>, vector<32x128xf32>
    %cst_167 = arith.constant dense<0.000000e+00> : vector<2x128xf32>
    %525 = tpu.matmul %501, %524, %cst_167 {dimension_numbers = #tpu.dot_dimension_numbers<[1], [0], [0], [1], [0, 0, 1, 1], [], []>} : vector<2x32xf32>, vector<32x128xf32>, vector<2x128xf32> -> vector<2x128xf32>
    %526 = arith.addf %523, %525 : vector<2x128xf32>
    %527 = arith.negf %526 : vector<2x128xf32>
    %528 = math.exp %527 : vector<2x128xf32>
    %cst_168 = arith.constant 1.000000e+00 : f32
    %529 = vector.broadcast %cst_168 : f32 to vector<2x128xf32>
    %530 = arith.addf %529, %528 : vector<2x128xf32>
    %531 = arith.divf %529, %530 : vector<2x128xf32>
    %532 = vector.extract_strided_slice %531 {offsets = [0, 0], sizes = [2, 32], strides = [1, 1]} : vector<2x128xf32> to vector<2x32xf32>
    %533 = vector.extract_strided_slice %531 {offsets = [0, 32], sizes = [2, 32], strides = [1, 1]} : vector<2x128xf32> to vector<2x32xf32>
    %534 = vector.extract_strided_slice %531 {offsets = [0, 96], sizes = [2, 32], strides = [1, 1]} : vector<2x128xf32> to vector<2x32xf32>
    %535 = vector.extract_strided_slice %526 {offsets = [0, 64], sizes = [2, 32], strides = [1, 1]} : vector<2x128xf32> to vector<2x32xf32>
    %536 = math.tanh %535 : vector<2x32xf32>
    %537 = arith.mulf %533, %499 : vector<2x32xf32>
    %538 = arith.mulf %532, %536 : vector<2x32xf32>
    %539 = arith.addf %537, %538 : vector<2x32xf32>
    %540 = math.tanh %539 : vector<2x32xf32>
    %541 = arith.mulf %534, %540 : vector<2x32xf32>
    %c6_169 = arith.constant 6 : index
    %c32_170 = arith.constant 32 : index
    %542 = vector.load %arg26[%c6_169, %c32_170] : memref<16x64xf32, #tpu.memory_space<vmem>>, vector<2x32xf32>
    tpu.vector_store %arg26[%c6_169, %c32_170], %541 {strides = array<i32>} : memref<16x64xf32, #tpu.memory_space<vmem>>, vector<2x32xf32>,
    %543 = vector.extract_strided_slice %337 {offsets = [10, 0], sizes = [2, 128], strides = [1, 1]} : vector<16x128xf32> to vector<2x128xf32>
    %c0_171 = arith.constant 0 : index
    %c0_172 = arith.constant 0 : index
    %544 = vector.load %arg8[%c0_171, %c0_172] : memref<32x128xf32, #tpu.memory_space<vmem>>, vector<32x128xf32>
    %cst_173 = arith.constant dense<0.000000e+00> : vector<2x128xf32>
    %545 = tpu.matmul %521, %544, %cst_173 {dimension_numbers = #tpu.dot_dimension_numbers<[1], [0], [0], [1], [0, 0, 1, 1], [], []>} : vector<2x32xf32>, vector<32x128xf32>, vector<2x128xf32> -> vector<2x128xf32>
    %546 = arith.addf %543, %545 : vector<2x128xf32>
    %547 = arith.negf %546 : vector<2x128xf32>
    %548 = math.exp %547 : vector<2x128xf32>
    %cst_174 = arith.constant 1.000000e+00 : f32
    %549 = vector.broadcast %cst_174 : f32 to vector<2x128xf32>
    %550 = arith.addf %549, %548 : vector<2x128xf32>
    %551 = arith.divf %549, %550 : vector<2x128xf32>
    %552 = vector.extract_strided_slice %551 {offsets = [0, 0], sizes = [2, 32], strides = [1, 1]} : vector<2x128xf32> to vector<2x32xf32>
    %553 = vector.extract_strided_slice %551 {offsets = [0, 32], sizes = [2, 32], strides = [1, 1]} : vector<2x128xf32> to vector<2x32xf32>
    %554 = vector.extract_strided_slice %551 {offsets = [0, 96], sizes = [2, 32], strides = [1, 1]} : vector<2x128xf32> to vector<2x32xf32>
    %555 = vector.extract_strided_slice %546 {offsets = [0, 64], sizes = [2, 32], strides = [1, 1]} : vector<2x128xf32> to vector<2x32xf32>
    %556 = math.tanh %555 : vector<2x32xf32>
    %557 = arith.mulf %553, %519 : vector<2x32xf32>
    %558 = arith.mulf %552, %556 : vector<2x32xf32>
    %559 = arith.addf %557, %558 : vector<2x32xf32>
    %560 = math.tanh %559 : vector<2x32xf32>
    %561 = arith.mulf %554, %560 : vector<2x32xf32>
    %c10_175 = arith.constant 10 : index
    %c0_176 = arith.constant 0 : index
    %562 = vector.load %arg26[%c10_175, %c0_176] : memref<16x64xf32, #tpu.memory_space<vmem>>, vector<2x32xf32>
    tpu.vector_store %arg26[%c10_175, %c0_176], %561 {strides = array<i32>} : memref<16x64xf32, #tpu.memory_space<vmem>>, vector<2x32xf32>,
    %563 = vector.extract_strided_slice %342 {offsets = [4, 0], sizes = [2, 128], strides = [1, 1]} : vector<16x128xf32> to vector<2x128xf32>
    %c0_177 = arith.constant 0 : index
    %c0_178 = arith.constant 0 : index
    %564 = vector.load %arg11[%c0_177, %c0_178] : memref<32x128xf32, #tpu.memory_space<vmem>>, vector<32x128xf32>
    %cst_179 = arith.constant dense<0.000000e+00> : vector<2x128xf32>
    %565 = tpu.matmul %541, %564, %cst_179 {dimension_numbers = #tpu.dot_dimension_numbers<[1], [0], [0], [1], [0, 0, 1, 1], [], []>} : vector<2x32xf32>, vector<32x128xf32>, vector<2x128xf32> -> vector<2x128xf32>
    %566 = arith.addf %563, %565 : vector<2x128xf32>
    %567 = arith.negf %566 : vector<2x128xf32>
    %568 = math.exp %567 : vector<2x128xf32>
    %cst_180 = arith.constant 1.000000e+00 : f32
    %569 = vector.broadcast %cst_180 : f32 to vector<2x128xf32>
    %570 = arith.addf %569, %568 : vector<2x128xf32>
    %571 = arith.divf %569, %570 : vector<2x128xf32>
    %572 = vector.extract_strided_slice %571 {offsets = [0, 0], sizes = [2, 32], strides = [1, 1]} : vector<2x128xf32> to vector<2x32xf32>
    %573 = vector.extract_strided_slice %571 {offsets = [0, 32], sizes = [2, 32], strides = [1, 1]} : vector<2x128xf32> to vector<2x32xf32>
    %574 = vector.extract_strided_slice %571 {offsets = [0, 96], sizes = [2, 32], strides = [1, 1]} : vector<2x128xf32> to vector<2x32xf32>
    %575 = vector.extract_strided_slice %566 {offsets = [0, 64], sizes = [2, 32], strides = [1, 1]} : vector<2x128xf32> to vector<2x32xf32>
    %576 = math.tanh %575 : vector<2x32xf32>
    %577 = arith.mulf %573, %539 : vector<2x32xf32>
    %578 = arith.mulf %572, %576 : vector<2x32xf32>
    %579 = arith.addf %577, %578 : vector<2x32xf32>
    %580 = math.tanh %579 : vector<2x32xf32>
    %581 = arith.mulf %574, %580 : vector<2x32xf32>
    %c4_181 = arith.constant 4 : index
    %c32_182 = arith.constant 32 : index
    %582 = vector.load %arg26[%c4_181, %c32_182] : memref<16x64xf32, #tpu.memory_space<vmem>>, vector<2x32xf32>
    tpu.vector_store %arg26[%c4_181, %c32_182], %581 {strides = array<i32>} : memref<16x64xf32, #tpu.memory_space<vmem>>, vector<2x32xf32>,
    %583 = vector.extract_strided_slice %337 {offsets = [12, 0], sizes = [2, 128], strides = [1, 1]} : vector<16x128xf32> to vector<2x128xf32>
    %c0_183 = arith.constant 0 : index
    %c0_184 = arith.constant 0 : index
    %584 = vector.load %arg8[%c0_183, %c0_184] : memref<32x128xf32, #tpu.memory_space<vmem>>, vector<32x128xf32>
    %cst_185 = arith.constant dense<0.000000e+00> : vector<2x128xf32>
    %585 = tpu.matmul %561, %584, %cst_185 {dimension_numbers = #tpu.dot_dimension_numbers<[1], [0], [0], [1], [0, 0, 1, 1], [], []>} : vector<2x32xf32>, vector<32x128xf32>, vector<2x128xf32> -> vector<2x128xf32>
    %586 = arith.addf %583, %585 : vector<2x128xf32>
    %587 = arith.negf %586 : vector<2x128xf32>
    %588 = math.exp %587 : vector<2x128xf32>
    %cst_186 = arith.constant 1.000000e+00 : f32
    %589 = vector.broadcast %cst_186 : f32 to vector<2x128xf32>
    %590 = arith.addf %589, %588 : vector<2x128xf32>
    %591 = arith.divf %589, %590 : vector<2x128xf32>
    %592 = vector.extract_strided_slice %591 {offsets = [0, 0], sizes = [2, 32], strides = [1, 1]} : vector<2x128xf32> to vector<2x32xf32>
    %593 = vector.extract_strided_slice %591 {offsets = [0, 32], sizes = [2, 32], strides = [1, 1]} : vector<2x128xf32> to vector<2x32xf32>
    %594 = vector.extract_strided_slice %591 {offsets = [0, 96], sizes = [2, 32], strides = [1, 1]} : vector<2x128xf32> to vector<2x32xf32>
    %595 = vector.extract_strided_slice %586 {offsets = [0, 64], sizes = [2, 32], strides = [1, 1]} : vector<2x128xf32> to vector<2x32xf32>
    %596 = math.tanh %595 : vector<2x32xf32>
    %597 = arith.mulf %593, %559 : vector<2x32xf32>
    %598 = arith.mulf %592, %596 : vector<2x32xf32>
    %599 = arith.addf %597, %598 : vector<2x32xf32>
    %600 = math.tanh %599 : vector<2x32xf32>
    %601 = arith.mulf %594, %600 : vector<2x32xf32>
    %c12_187 = arith.constant 12 : index
    %c0_188 = arith.constant 0 : index
    %602 = vector.load %arg26[%c12_187, %c0_188] : memref<16x64xf32, #tpu.memory_space<vmem>>, vector<2x32xf32>
    tpu.vector_store %arg26[%c12_187, %c0_188], %601 {strides = array<i32>} : memref<16x64xf32, #tpu.memory_space<vmem>>, vector<2x32xf32>,
    %603 = vector.extract_strided_slice %342 {offsets = [2, 0], sizes = [2, 128], strides = [1, 1]} : vector<16x128xf32> to vector<2x128xf32>
    %c0_189 = arith.constant 0 : index
    %c0_190 = arith.constant 0 : index
    %604 = vector.load %arg11[%c0_189, %c0_190] : memref<32x128xf32, #tpu.memory_space<vmem>>, vector<32x128xf32>
    %cst_191 = arith.constant dense<0.000000e+00> : vector<2x128xf32>
    %605 = tpu.matmul %581, %604, %cst_191 {dimension_numbers = #tpu.dot_dimension_numbers<[1], [0], [0], [1], [0, 0, 1, 1], [], []>} : vector<2x32xf32>, vector<32x128xf32>, vector<2x128xf32> -> vector<2x128xf32>
    %606 = arith.addf %603, %605 : vector<2x128xf32>
    %607 = arith.negf %606 : vector<2x128xf32>
    %608 = math.exp %607 : vector<2x128xf32>
    %cst_192 = arith.constant 1.000000e+00 : f32
    %609 = vector.broadcast %cst_192 : f32 to vector<2x128xf32>
    %610 = arith.addf %609, %608 : vector<2x128xf32>
    %611 = arith.divf %609, %610 : vector<2x128xf32>
    %612 = vector.extract_strided_slice %611 {offsets = [0, 0], sizes = [2, 32], strides = [1, 1]} : vector<2x128xf32> to vector<2x32xf32>
    %613 = vector.extract_strided_slice %611 {offsets = [0, 32], sizes = [2, 32], strides = [1, 1]} : vector<2x128xf32> to vector<2x32xf32>
    %614 = vector.extract_strided_slice %611 {offsets = [0, 96], sizes = [2, 32], strides = [1, 1]} : vector<2x128xf32> to vector<2x32xf32>
    %615 = vector.extract_strided_slice %606 {offsets = [0, 64], sizes = [2, 32], strides = [1, 1]} : vector<2x128xf32> to vector<2x32xf32>
    %616 = math.tanh %615 : vector<2x32xf32>
    %617 = arith.mulf %613, %579 : vector<2x32xf32>
    %618 = arith.mulf %612, %616 : vector<2x32xf32>
    %619 = arith.addf %617, %618 : vector<2x32xf32>
    %620 = math.tanh %619 : vector<2x32xf32>
    %621 = arith.mulf %614, %620 : vector<2x32xf32>
    %c2_193 = arith.constant 2 : index
    %c32_194 = arith.constant 32 : index
    %622 = vector.load %arg26[%c2_193, %c32_194] : memref<16x64xf32, #tpu.memory_space<vmem>>, vector<2x32xf32>
    tpu.vector_store %arg26[%c2_193, %c32_194], %621 {strides = array<i32>} : memref<16x64xf32, #tpu.memory_space<vmem>>, vector<2x32xf32>,
    %623 = vector.extract_strided_slice %337 {offsets = [14, 0], sizes = [2, 128], strides = [1, 1]} : vector<16x128xf32> to vector<2x128xf32>
    %c0_195 = arith.constant 0 : index
    %c0_196 = arith.constant 0 : index
    %624 = vector.load %arg8[%c0_195, %c0_196] : memref<32x128xf32, #tpu.memory_space<vmem>>, vector<32x128xf32>
    %cst_197 = arith.constant dense<0.000000e+00> : vector<2x128xf32>
    %625 = tpu.matmul %601, %624, %cst_197 {dimension_numbers = #tpu.dot_dimension_numbers<[1], [0], [0], [1], [0, 0, 1, 1], [], []>} : vector<2x32xf32>, vector<32x128xf32>, vector<2x128xf32> -> vector<2x128xf32>
    %626 = arith.addf %623, %625 : vector<2x128xf32>
    %627 = arith.negf %626 : vector<2x128xf32>
    %628 = math.exp %627 : vector<2x128xf32>
    %cst_198 = arith.constant 1.000000e+00 : f32
    %629 = vector.broadcast %cst_198 : f32 to vector<2x128xf32>
    %630 = arith.addf %629, %628 : vector<2x128xf32>
    %631 = arith.divf %629, %630 : vector<2x128xf32>
    %632 = vector.extract_strided_slice %631 {offsets = [0, 0], sizes = [2, 32], strides = [1, 1]} : vector<2x128xf32> to vector<2x32xf32>
    %633 = vector.extract_strided_slice %631 {offsets = [0, 32], sizes = [2, 32], strides = [1, 1]} : vector<2x128xf32> to vector<2x32xf32>
    %634 = vector.extract_strided_slice %631 {offsets = [0, 96], sizes = [2, 32], strides = [1, 1]} : vector<2x128xf32> to vector<2x32xf32>
    %635 = vector.extract_strided_slice %626 {offsets = [0, 64], sizes = [2, 32], strides = [1, 1]} : vector<2x128xf32> to vector<2x32xf32>
    %636 = math.tanh %635 : vector<2x32xf32>
    %637 = arith.mulf %633, %599 : vector<2x32xf32>
    %638 = arith.mulf %632, %636 : vector<2x32xf32>
    %639 = arith.addf %637, %638 : vector<2x32xf32>
    %640 = math.tanh %639 : vector<2x32xf32>
    %641 = arith.mulf %634, %640 : vector<2x32xf32>
    %c14_199 = arith.constant 14 : index
    %c0_200 = arith.constant 0 : index
    %642 = vector.load %arg26[%c14_199, %c0_200] : memref<16x64xf32, #tpu.memory_space<vmem>>, vector<2x32xf32>
    tpu.vector_store %arg26[%c14_199, %c0_200], %641 {strides = array<i32>} : memref<16x64xf32, #tpu.memory_space<vmem>>, vector<2x32xf32>,
    %643 = vector.extract_strided_slice %342 {offsets = [0, 0], sizes = [2, 128], strides = [1, 1]} : vector<16x128xf32> to vector<2x128xf32>
    %c0_201 = arith.constant 0 : index
    %c0_202 = arith.constant 0 : index
    %644 = vector.load %arg11[%c0_201, %c0_202] : memref<32x128xf32, #tpu.memory_space<vmem>>, vector<32x128xf32>
    %cst_203 = arith.constant dense<0.000000e+00> : vector<2x128xf32>
    %645 = tpu.matmul %621, %644, %cst_203 {dimension_numbers = #tpu.dot_dimension_numbers<[1], [0], [0], [1], [0, 0, 1, 1], [], []>} : vector<2x32xf32>, vector<32x128xf32>, vector<2x128xf32> -> vector<2x128xf32>
    %646 = arith.addf %643, %645 : vector<2x128xf32>
    %647 = arith.negf %646 : vector<2x128xf32>
    %648 = math.exp %647 : vector<2x128xf32>
    %cst_204 = arith.constant 1.000000e+00 : f32
    %649 = vector.broadcast %cst_204 : f32 to vector<2x128xf32>
    %650 = arith.addf %649, %648 : vector<2x128xf32>
    %651 = arith.divf %649, %650 : vector<2x128xf32>
    %652 = vector.extract_strided_slice %651 {offsets = [0, 0], sizes = [2, 32], strides = [1, 1]} : vector<2x128xf32> to vector<2x32xf32>
    %653 = vector.extract_strided_slice %651 {offsets = [0, 32], sizes = [2, 32], strides = [1, 1]} : vector<2x128xf32> to vector<2x32xf32>
    %654 = vector.extract_strided_slice %651 {offsets = [0, 96], sizes = [2, 32], strides = [1, 1]} : vector<2x128xf32> to vector<2x32xf32>
    %655 = vector.extract_strided_slice %646 {offsets = [0, 64], sizes = [2, 32], strides = [1, 1]} : vector<2x128xf32> to vector<2x32xf32>
    %656 = math.tanh %655 : vector<2x32xf32>
    %657 = arith.mulf %653, %619 : vector<2x32xf32>
    %658 = arith.mulf %652, %656 : vector<2x32xf32>
    %659 = arith.addf %657, %658 : vector<2x32xf32>
    %660 = math.tanh %659 : vector<2x32xf32>
    %661 = arith.mulf %654, %660 : vector<2x32xf32>
    %c0_205 = arith.constant 0 : index
    %c32_206 = arith.constant 32 : index
    %662 = vector.load %arg26[%c0_205, %c32_206] : memref<16x64xf32, #tpu.memory_space<vmem>>, vector<2x32xf32>
    tpu.vector_store %arg26[%c0_205, %c32_206], %661 {strides = array<i32>} : memref<16x64xf32, #tpu.memory_space<vmem>>, vector<2x32xf32>,
    %c0_207 = arith.constant 0 : index
    %c0_208 = arith.constant 0 : index
    %663 = vector.load %arg26[%c0_207, %c0_208] : memref<16x64xf32, #tpu.memory_space<vmem>>, vector<16x64xf32>
    %c0_209 = arith.constant 0 : index
    %c0_210 = arith.constant 0 : index
    %664 = vector.load %arg13[%c0_209, %c0_210] : memref<64x128xf32, #tpu.memory_space<vmem>>, vector<64x128xf32>
    %cst_211 = arith.constant dense<0.000000e+00> : vector<16x128xf32>
    %665 = tpu.matmul %663, %664, %cst_211 {dimension_numbers = #tpu.dot_dimension_numbers<[1], [0], [0], [1], [0, 0, 1, 1], [], []>} : vector<16x64xf32>, vector<64x128xf32>, vector<16x128xf32> -> vector<16x128xf32>
    %c0_212 = arith.constant 0 : index
    %c0_213 = arith.constant 0 : index
    %666 = vector.load %arg15[%c0_212, %c0_213] : memref<1x128xf32, #tpu.memory_space<vmem>>, vector<1x128xf32>
    %667 = vector.broadcast %666 : vector<1x128xf32> to vector<16x128xf32>
    %668 = arith.addf %665, %667 : vector<16x128xf32>
    %c0_214 = arith.constant 0 : index
    %c0_215 = arith.constant 0 : index
    %669 = vector.load %arg16[%c0_214, %c0_215] : memref<64x128xf32, #tpu.memory_space<vmem>>, vector<64x128xf32>
    %cst_216 = arith.constant dense<0.000000e+00> : vector<16x128xf32>
    %670 = tpu.matmul %663, %669, %cst_216 {dimension_numbers = #tpu.dot_dimension_numbers<[1], [0], [0], [1], [0, 0, 1, 1], [], []>} : vector<16x64xf32>, vector<64x128xf32>, vector<16x128xf32> -> vector<16x128xf32>
    %c0_217 = arith.constant 0 : index
    %c0_218 = arith.constant 0 : index
    %671 = vector.load %arg18[%c0_217, %c0_218] : memref<1x128xf32, #tpu.memory_space<vmem>>, vector<1x128xf32>
    %672 = vector.broadcast %671 : vector<1x128xf32> to vector<16x128xf32>
    %673 = arith.addf %670, %672 : vector<16x128xf32>
    %674 = vector.extract_strided_slice %668 {offsets = [0, 0], sizes = [2, 128], strides = [1, 1]} : vector<16x128xf32> to vector<2x128xf32>
    %c0_219 = arith.constant 0 : index
    %c0_220 = arith.constant 0 : index
    %675 = vector.load %arg14[%c0_219, %c0_220] : memref<32x128xf32, #tpu.memory_space<vmem>>, vector<32x128xf32>
    %cst_221 = arith.constant dense<0.000000e+00> : vector<2x128xf32>
    %676 = tpu.matmul %0, %675, %cst_221 {dimension_numbers = #tpu.dot_dimension_numbers<[1], [0], [0], [1], [0, 0, 1, 1], [], []>} : vector<2x32xf32>, vector<32x128xf32>, vector<2x128xf32> -> vector<2x128xf32>
    %677 = arith.addf %674, %676 : vector<2x128xf32>
    %678 = arith.negf %677 : vector<2x128xf32>
    %679 = math.exp %678 : vector<2x128xf32>
    %cst_222 = arith.constant 1.000000e+00 : f32
    %680 = vector.broadcast %cst_222 : f32 to vector<2x128xf32>
    %681 = arith.addf %680, %679 : vector<2x128xf32>
    %682 = arith.divf %680, %681 : vector<2x128xf32>
    %683 = vector.extract_strided_slice %682 {offsets = [0, 0], sizes = [2, 32], strides = [1, 1]} : vector<2x128xf32> to vector<2x32xf32>
    %684 = vector.extract_strided_slice %682 {offsets = [0, 32], sizes = [2, 32], strides = [1, 1]} : vector<2x128xf32> to vector<2x32xf32>
    %685 = vector.extract_strided_slice %682 {offsets = [0, 96], sizes = [2, 32], strides = [1, 1]} : vector<2x128xf32> to vector<2x32xf32>
    %686 = vector.extract_strided_slice %677 {offsets = [0, 64], sizes = [2, 32], strides = [1, 1]} : vector<2x128xf32> to vector<2x32xf32>
    %687 = math.tanh %686 : vector<2x32xf32>
    %688 = arith.mulf %684, %0 : vector<2x32xf32>
    %689 = arith.mulf %683, %687 : vector<2x32xf32>
    %690 = arith.addf %688, %689 : vector<2x32xf32>
    %691 = math.tanh %690 : vector<2x32xf32>
    %692 = arith.mulf %685, %691 : vector<2x32xf32>
    %c0_223 = arith.constant 0 : index
    %c0_224 = arith.constant 0 : index
    %693 = vector.load %arg26[%c0_223, %c0_224] : memref<16x64xf32, #tpu.memory_space<vmem>>, vector<2x32xf32>
    tpu.vector_store %arg26[%c0_223, %c0_224], %692 {strides = array<i32>} : memref<16x64xf32, #tpu.memory_space<vmem>>, vector<2x32xf32>,
    %694 = vector.extract_strided_slice %673 {offsets = [14, 0], sizes = [2, 128], strides = [1, 1]} : vector<16x128xf32> to vector<2x128xf32>
    %c0_225 = arith.constant 0 : index
    %c0_226 = arith.constant 0 : index
    %695 = vector.load %arg17[%c0_225, %c0_226] : memref<32x128xf32, #tpu.memory_space<vmem>>, vector<32x128xf32>
    %cst_227 = arith.constant dense<0.000000e+00> : vector<2x128xf32>
    %696 = tpu.matmul %0, %695, %cst_227 {dimension_numbers = #tpu.dot_dimension_numbers<[1], [0], [0], [1], [0, 0, 1, 1], [], []>} : vector<2x32xf32>, vector<32x128xf32>, vector<2x128xf32> -> vector<2x128xf32>
    %697 = arith.addf %694, %696 : vector<2x128xf32>
    %698 = arith.negf %697 : vector<2x128xf32>
    %699 = math.exp %698 : vector<2x128xf32>
    %cst_228 = arith.constant 1.000000e+00 : f32
    %700 = vector.broadcast %cst_228 : f32 to vector<2x128xf32>
    %701 = arith.addf %700, %699 : vector<2x128xf32>
    %702 = arith.divf %700, %701 : vector<2x128xf32>
    %703 = vector.extract_strided_slice %702 {offsets = [0, 0], sizes = [2, 32], strides = [1, 1]} : vector<2x128xf32> to vector<2x32xf32>
    %704 = vector.extract_strided_slice %702 {offsets = [0, 32], sizes = [2, 32], strides = [1, 1]} : vector<2x128xf32> to vector<2x32xf32>
    %705 = vector.extract_strided_slice %702 {offsets = [0, 96], sizes = [2, 32], strides = [1, 1]} : vector<2x128xf32> to vector<2x32xf32>
    %706 = vector.extract_strided_slice %697 {offsets = [0, 64], sizes = [2, 32], strides = [1, 1]} : vector<2x128xf32> to vector<2x32xf32>
    %707 = math.tanh %706 : vector<2x32xf32>
    %708 = arith.mulf %704, %0 : vector<2x32xf32>
    %709 = arith.mulf %703, %707 : vector<2x32xf32>
    %710 = arith.addf %708, %709 : vector<2x32xf32>
    %711 = math.tanh %710 : vector<2x32xf32>
    %712 = arith.mulf %705, %711 : vector<2x32xf32>
    %c14_229 = arith.constant 14 : index
    %c32_230 = arith.constant 32 : index
    %713 = vector.load %arg26[%c14_229, %c32_230] : memref<16x64xf32, #tpu.memory_space<vmem>>, vector<2x32xf32>
    tpu.vector_store %arg26[%c14_229, %c32_230], %712 {strides = array<i32>} : memref<16x64xf32, #tpu.memory_space<vmem>>, vector<2x32xf32>,
    %714 = vector.extract_strided_slice %668 {offsets = [2, 0], sizes = [2, 128], strides = [1, 1]} : vector<16x128xf32> to vector<2x128xf32>
    %c0_231 = arith.constant 0 : index
    %c0_232 = arith.constant 0 : index
    %715 = vector.load %arg14[%c0_231, %c0_232] : memref<32x128xf32, #tpu.memory_space<vmem>>, vector<32x128xf32>
    %cst_233 = arith.constant dense<0.000000e+00> : vector<2x128xf32>
    %716 = tpu.matmul %692, %715, %cst_233 {dimension_numbers = #tpu.dot_dimension_numbers<[1], [0], [0], [1], [0, 0, 1, 1], [], []>} : vector<2x32xf32>, vector<32x128xf32>, vector<2x128xf32> -> vector<2x128xf32>
    %717 = arith.addf %714, %716 : vector<2x128xf32>
    %718 = arith.negf %717 : vector<2x128xf32>
    %719 = math.exp %718 : vector<2x128xf32>
    %cst_234 = arith.constant 1.000000e+00 : f32
    %720 = vector.broadcast %cst_234 : f32 to vector<2x128xf32>
    %721 = arith.addf %720, %719 : vector<2x128xf32>
    %722 = arith.divf %720, %721 : vector<2x128xf32>
    %723 = vector.extract_strided_slice %722 {offsets = [0, 0], sizes = [2, 32], strides = [1, 1]} : vector<2x128xf32> to vector<2x32xf32>
    %724 = vector.extract_strided_slice %722 {offsets = [0, 32], sizes = [2, 32], strides = [1, 1]} : vector<2x128xf32> to vector<2x32xf32>
    %725 = vector.extract_strided_slice %722 {offsets = [0, 96], sizes = [2, 32], strides = [1, 1]} : vector<2x128xf32> to vector<2x32xf32>
    %726 = vector.extract_strided_slice %717 {offsets = [0, 64], sizes = [2, 32], strides = [1, 1]} : vector<2x128xf32> to vector<2x32xf32>
    %727 = math.tanh %726 : vector<2x32xf32>
    %728 = arith.mulf %724, %690 : vector<2x32xf32>
    %729 = arith.mulf %723, %727 : vector<2x32xf32>
    %730 = arith.addf %728, %729 : vector<2x32xf32>
    %731 = math.tanh %730 : vector<2x32xf32>
    %732 = arith.mulf %725, %731 : vector<2x32xf32>
    %c2_235 = arith.constant 2 : index
    %c0_236 = arith.constant 0 : index
    %733 = vector.load %arg26[%c2_235, %c0_236] : memref<16x64xf32, #tpu.memory_space<vmem>>, vector<2x32xf32>
    tpu.vector_store %arg26[%c2_235, %c0_236], %732 {strides = array<i32>} : memref<16x64xf32, #tpu.memory_space<vmem>>, vector<2x32xf32>,
    %734 = vector.extract_strided_slice %673 {offsets = [12, 0], sizes = [2, 128], strides = [1, 1]} : vector<16x128xf32> to vector<2x128xf32>
    %c0_237 = arith.constant 0 : index
    %c0_238 = arith.constant 0 : index
    %735 = vector.load %arg17[%c0_237, %c0_238] : memref<32x128xf32, #tpu.memory_space<vmem>>, vector<32x128xf32>
    %cst_239 = arith.constant dense<0.000000e+00> : vector<2x128xf32>
    %736 = tpu.matmul %712, %735, %cst_239 {dimension_numbers = #tpu.dot_dimension_numbers<[1], [0], [0], [1], [0, 0, 1, 1], [], []>} : vector<2x32xf32>, vector<32x128xf32>, vector<2x128xf32> -> vector<2x128xf32>
    %737 = arith.addf %734, %736 : vector<2x128xf32>
    %738 = arith.negf %737 : vector<2x128xf32>
    %739 = math.exp %738 : vector<2x128xf32>
    %cst_240 = arith.constant 1.000000e+00 : f32
    %740 = vector.broadcast %cst_240 : f32 to vector<2x128xf32>
    %741 = arith.addf %740, %739 : vector<2x128xf32>
    %742 = arith.divf %740, %741 : vector<2x128xf32>
    %743 = vector.extract_strided_slice %742 {offsets = [0, 0], sizes = [2, 32], strides = [1, 1]} : vector<2x128xf32> to vector<2x32xf32>
    %744 = vector.extract_strided_slice %742 {offsets = [0, 32], sizes = [2, 32], strides = [1, 1]} : vector<2x128xf32> to vector<2x32xf32>
    %745 = vector.extract_strided_slice %742 {offsets = [0, 96], sizes = [2, 32], strides = [1, 1]} : vector<2x128xf32> to vector<2x32xf32>
    %746 = vector.extract_strided_slice %737 {offsets = [0, 64], sizes = [2, 32], strides = [1, 1]} : vector<2x128xf32> to vector<2x32xf32>
    %747 = math.tanh %746 : vector<2x32xf32>
    %748 = arith.mulf %744, %710 : vector<2x32xf32>
    %749 = arith.mulf %743, %747 : vector<2x32xf32>
    %750 = arith.addf %748, %749 : vector<2x32xf32>
    %751 = math.tanh %750 : vector<2x32xf32>
    %752 = arith.mulf %745, %751 : vector<2x32xf32>
    %c12_241 = arith.constant 12 : index
    %c32_242 = arith.constant 32 : index
    %753 = vector.load %arg26[%c12_241, %c32_242] : memref<16x64xf32, #tpu.memory_space<vmem>>, vector<2x32xf32>
    tpu.vector_store %arg26[%c12_241, %c32_242], %752 {strides = array<i32>} : memref<16x64xf32, #tpu.memory_space<vmem>>, vector<2x32xf32>,
    %754 = vector.extract_strided_slice %668 {offsets = [4, 0], sizes = [2, 128], strides = [1, 1]} : vector<16x128xf32> to vector<2x128xf32>
    %c0_243 = arith.constant 0 : index
    %c0_244 = arith.constant 0 : index
    %755 = vector.load %arg14[%c0_243, %c0_244] : memref<32x128xf32, #tpu.memory_space<vmem>>, vector<32x128xf32>
    %cst_245 = arith.constant dense<0.000000e+00> : vector<2x128xf32>
    %756 = tpu.matmul %732, %755, %cst_245 {dimension_numbers = #tpu.dot_dimension_numbers<[1], [0], [0], [1], [0, 0, 1, 1], [], []>} : vector<2x32xf32>, vector<32x128xf32>, vector<2x128xf32> -> vector<2x128xf32>
    %757 = arith.addf %754, %756 : vector<2x128xf32>
    %758 = arith.negf %757 : vector<2x128xf32>
    %759 = math.exp %758 : vector<2x128xf32>
    %cst_246 = arith.constant 1.000000e+00 : f32
    %760 = vector.broadcast %cst_246 : f32 to vector<2x128xf32>
    %761 = arith.addf %760, %759 : vector<2x128xf32>
    %762 = arith.divf %760, %761 : vector<2x128xf32>
    %763 = vector.extract_strided_slice %762 {offsets = [0, 0], sizes = [2, 32], strides = [1, 1]} : vector<2x128xf32> to vector<2x32xf32>
    %764 = vector.extract_strided_slice %762 {offsets = [0, 32], sizes = [2, 32], strides = [1, 1]} : vector<2x128xf32> to vector<2x32xf32>
    %765 = vector.extract_strided_slice %762 {offsets = [0, 96], sizes = [2, 32], strides = [1, 1]} : vector<2x128xf32> to vector<2x32xf32>
    %766 = vector.extract_strided_slice %757 {offsets = [0, 64], sizes = [2, 32], strides = [1, 1]} : vector<2x128xf32> to vector<2x32xf32>
    %767 = math.tanh %766 : vector<2x32xf32>
    %768 = arith.mulf %764, %730 : vector<2x32xf32>
    %769 = arith.mulf %763, %767 : vector<2x32xf32>
    %770 = arith.addf %768, %769 : vector<2x32xf32>
    %771 = math.tanh %770 : vector<2x32xf32>
    %772 = arith.mulf %765, %771 : vector<2x32xf32>
    %c4_247 = arith.constant 4 : index
    %c0_248 = arith.constant 0 : index
    %773 = vector.load %arg26[%c4_247, %c0_248] : memref<16x64xf32, #tpu.memory_space<vmem>>, vector<2x32xf32>
    tpu.vector_store %arg26[%c4_247, %c0_248], %772 {strides = array<i32>} : memref<16x64xf32, #tpu.memory_space<vmem>>, vector<2x32xf32>,
    %774 = vector.extract_strided_slice %673 {offsets = [10, 0], sizes = [2, 128], strides = [1, 1]} : vector<16x128xf32> to vector<2x128xf32>
    %c0_249 = arith.constant 0 : index
    %c0_250 = arith.constant 0 : index
    %775 = vector.load %arg17[%c0_249, %c0_250] : memref<32x128xf32, #tpu.memory_space<vmem>>, vector<32x128xf32>
    %cst_251 = arith.constant dense<0.000000e+00> : vector<2x128xf32>
    %776 = tpu.matmul %752, %775, %cst_251 {dimension_numbers = #tpu.dot_dimension_numbers<[1], [0], [0], [1], [0, 0, 1, 1], [], []>} : vector<2x32xf32>, vector<32x128xf32>, vector<2x128xf32> -> vector<2x128xf32>
    %777 = arith.addf %774, %776 : vector<2x128xf32>
    %778 = arith.negf %777 : vector<2x128xf32>
    %779 = math.exp %778 : vector<2x128xf32>
    %cst_252 = arith.constant 1.000000e+00 : f32
    %780 = vector.broadcast %cst_252 : f32 to vector<2x128xf32>
    %781 = arith.addf %780, %779 : vector<2x128xf32>
    %782 = arith.divf %780, %781 : vector<2x128xf32>
    %783 = vector.extract_strided_slice %782 {offsets = [0, 0], sizes = [2, 32], strides = [1, 1]} : vector<2x128xf32> to vector<2x32xf32>
    %784 = vector.extract_strided_slice %782 {offsets = [0, 32], sizes = [2, 32], strides = [1, 1]} : vector<2x128xf32> to vector<2x32xf32>
    %785 = vector.extract_strided_slice %782 {offsets = [0, 96], sizes = [2, 32], strides = [1, 1]} : vector<2x128xf32> to vector<2x32xf32>
    %786 = vector.extract_strided_slice %777 {offsets = [0, 64], sizes = [2, 32], strides = [1, 1]} : vector<2x128xf32> to vector<2x32xf32>
    %787 = math.tanh %786 : vector<2x32xf32>
    %788 = arith.mulf %784, %750 : vector<2x32xf32>
    %789 = arith.mulf %783, %787 : vector<2x32xf32>
    %790 = arith.addf %788, %789 : vector<2x32xf32>
    %791 = math.tanh %790 : vector<2x32xf32>
    %792 = arith.mulf %785, %791 : vector<2x32xf32>
    %c10_253 = arith.constant 10 : index
    %c32_254 = arith.constant 32 : index
    %793 = vector.load %arg26[%c10_253, %c32_254] : memref<16x64xf32, #tpu.memory_space<vmem>>, vector<2x32xf32>
    tpu.vector_store %arg26[%c10_253, %c32_254], %792 {strides = array<i32>} : memref<16x64xf32, #tpu.memory_space<vmem>>, vector<2x32xf32>,
    %794 = vector.extract_strided_slice %668 {offsets = [6, 0], sizes = [2, 128], strides = [1, 1]} : vector<16x128xf32> to vector<2x128xf32>
    %c0_255 = arith.constant 0 : index
    %c0_256 = arith.constant 0 : index
    %795 = vector.load %arg14[%c0_255, %c0_256] : memref<32x128xf32, #tpu.memory_space<vmem>>, vector<32x128xf32>
    %cst_257 = arith.constant dense<0.000000e+00> : vector<2x128xf32>
    %796 = tpu.matmul %772, %795, %cst_257 {dimension_numbers = #tpu.dot_dimension_numbers<[1], [0], [0], [1], [0, 0, 1, 1], [], []>} : vector<2x32xf32>, vector<32x128xf32>, vector<2x128xf32> -> vector<2x128xf32>
    %797 = arith.addf %794, %796 : vector<2x128xf32>
    %798 = arith.negf %797 : vector<2x128xf32>
    %799 = math.exp %798 : vector<2x128xf32>
    %cst_258 = arith.constant 1.000000e+00 : f32
    %800 = vector.broadcast %cst_258 : f32 to vector<2x128xf32>
    %801 = arith.addf %800, %799 : vector<2x128xf32>
    %802 = arith.divf %800, %801 : vector<2x128xf32>
    %803 = vector.extract_strided_slice %802 {offsets = [0, 0], sizes = [2, 32], strides = [1, 1]} : vector<2x128xf32> to vector<2x32xf32>
    %804 = vector.extract_strided_slice %802 {offsets = [0, 32], sizes = [2, 32], strides = [1, 1]} : vector<2x128xf32> to vector<2x32xf32>
    %805 = vector.extract_strided_slice %802 {offsets = [0, 96], sizes = [2, 32], strides = [1, 1]} : vector<2x128xf32> to vector<2x32xf32>
    %806 = vector.extract_strided_slice %797 {offsets = [0, 64], sizes = [2, 32], strides = [1, 1]} : vector<2x128xf32> to vector<2x32xf32>
    %807 = math.tanh %806 : vector<2x32xf32>
    %808 = arith.mulf %804, %770 : vector<2x32xf32>
    %809 = arith.mulf %803, %807 : vector<2x32xf32>
    %810 = arith.addf %808, %809 : vector<2x32xf32>
    %811 = math.tanh %810 : vector<2x32xf32>
    %812 = arith.mulf %805, %811 : vector<2x32xf32>
    %c6_259 = arith.constant 6 : index
    %c0_260 = arith.constant 0 : index
    %813 = vector.load %arg26[%c6_259, %c0_260] : memref<16x64xf32, #tpu.memory_space<vmem>>, vector<2x32xf32>
    tpu.vector_store %arg26[%c6_259, %c0_260], %812 {strides = array<i32>} : memref<16x64xf32, #tpu.memory_space<vmem>>, vector<2x32xf32>,
    %814 = vector.extract_strided_slice %673 {offsets = [8, 0], sizes = [2, 128], strides = [1, 1]} : vector<16x128xf32> to vector<2x128xf32>
    %c0_261 = arith.constant 0 : index
    %c0_262 = arith.constant 0 : index
    %815 = vector.load %arg17[%c0_261, %c0_262] : memref<32x128xf32, #tpu.memory_space<vmem>>, vector<32x128xf32>
    %cst_263 = arith.constant dense<0.000000e+00> : vector<2x128xf32>
    %816 = tpu.matmul %792, %815, %cst_263 {dimension_numbers = #tpu.dot_dimension_numbers<[1], [0], [0], [1], [0, 0, 1, 1], [], []>} : vector<2x32xf32>, vector<32x128xf32>, vector<2x128xf32> -> vector<2x128xf32>
    %817 = arith.addf %814, %816 : vector<2x128xf32>
    %818 = arith.negf %817 : vector<2x128xf32>
    %819 = math.exp %818 : vector<2x128xf32>
    %cst_264 = arith.constant 1.000000e+00 : f32
    %820 = vector.broadcast %cst_264 : f32 to vector<2x128xf32>
    %821 = arith.addf %820, %819 : vector<2x128xf32>
    %822 = arith.divf %820, %821 : vector<2x128xf32>
    %823 = vector.extract_strided_slice %822 {offsets = [0, 0], sizes = [2, 32], strides = [1, 1]} : vector<2x128xf32> to vector<2x32xf32>
    %824 = vector.extract_strided_slice %822 {offsets = [0, 32], sizes = [2, 32], strides = [1, 1]} : vector<2x128xf32> to vector<2x32xf32>
    %825 = vector.extract_strided_slice %822 {offsets = [0, 96], sizes = [2, 32], strides = [1, 1]} : vector<2x128xf32> to vector<2x32xf32>
    %826 = vector.extract_strided_slice %817 {offsets = [0, 64], sizes = [2, 32], strides = [1, 1]} : vector<2x128xf32> to vector<2x32xf32>
    %827 = math.tanh %826 : vector<2x32xf32>
    %828 = arith.mulf %824, %790 : vector<2x32xf32>
    %829 = arith.mulf %823, %827 : vector<2x32xf32>
    %830 = arith.addf %828, %829 : vector<2x32xf32>
    %831 = math.tanh %830 : vector<2x32xf32>
    %832 = arith.mulf %825, %831 : vector<2x32xf32>
    %c8_265 = arith.constant 8 : index
    %c32_266 = arith.constant 32 : index
    %833 = vector.load %arg26[%c8_265, %c32_266] : memref<16x64xf32, #tpu.memory_space<vmem>>, vector<2x32xf32>
    tpu.vector_store %arg26[%c8_265, %c32_266], %832 {strides = array<i32>} : memref<16x64xf32, #tpu.memory_space<vmem>>, vector<2x32xf32>,
    %834 = vector.extract_strided_slice %668 {offsets = [8, 0], sizes = [2, 128], strides = [1, 1]} : vector<16x128xf32> to vector<2x128xf32>
    %c0_267 = arith.constant 0 : index
    %c0_268 = arith.constant 0 : index
    %835 = vector.load %arg14[%c0_267, %c0_268] : memref<32x128xf32, #tpu.memory_space<vmem>>, vector<32x128xf32>
    %cst_269 = arith.constant dense<0.000000e+00> : vector<2x128xf32>
    %836 = tpu.matmul %812, %835, %cst_269 {dimension_numbers = #tpu.dot_dimension_numbers<[1], [0], [0], [1], [0, 0, 1, 1], [], []>} : vector<2x32xf32>, vector<32x128xf32>, vector<2x128xf32> -> vector<2x128xf32>
    %837 = arith.addf %834, %836 : vector<2x128xf32>
    %838 = arith.negf %837 : vector<2x128xf32>
    %839 = math.exp %838 : vector<2x128xf32>
    %cst_270 = arith.constant 1.000000e+00 : f32
    %840 = vector.broadcast %cst_270 : f32 to vector<2x128xf32>
    %841 = arith.addf %840, %839 : vector<2x128xf32>
    %842 = arith.divf %840, %841 : vector<2x128xf32>
    %843 = vector.extract_strided_slice %842 {offsets = [0, 0], sizes = [2, 32], strides = [1, 1]} : vector<2x128xf32> to vector<2x32xf32>
    %844 = vector.extract_strided_slice %842 {offsets = [0, 32], sizes = [2, 32], strides = [1, 1]} : vector<2x128xf32> to vector<2x32xf32>
    %845 = vector.extract_strided_slice %842 {offsets = [0, 96], sizes = [2, 32], strides = [1, 1]} : vector<2x128xf32> to vector<2x32xf32>
    %846 = vector.extract_strided_slice %837 {offsets = [0, 64], sizes = [2, 32], strides = [1, 1]} : vector<2x128xf32> to vector<2x32xf32>
    %847 = math.tanh %846 : vector<2x32xf32>
    %848 = arith.mulf %844, %810 : vector<2x32xf32>
    %849 = arith.mulf %843, %847 : vector<2x32xf32>
    %850 = arith.addf %848, %849 : vector<2x32xf32>
    %851 = math.tanh %850 : vector<2x32xf32>
    %852 = arith.mulf %845, %851 : vector<2x32xf32>
    %c8_271 = arith.constant 8 : index
    %c0_272 = arith.constant 0 : index
    %853 = vector.load %arg26[%c8_271, %c0_272] : memref<16x64xf32, #tpu.memory_space<vmem>>, vector<2x32xf32>
    tpu.vector_store %arg26[%c8_271, %c0_272], %852 {strides = array<i32>} : memref<16x64xf32, #tpu.memory_space<vmem>>, vector<2x32xf32>,
    %854 = vector.extract_strided_slice %673 {offsets = [6, 0], sizes = [2, 128], strides = [1, 1]} : vector<16x128xf32> to vector<2x128xf32>
    %c0_273 = arith.constant 0 : index
    %c0_274 = arith.constant 0 : index
    %855 = vector.load %arg17[%c0_273, %c0_274] : memref<32x128xf32, #tpu.memory_space<vmem>>, vector<32x128xf32>
    %cst_275 = arith.constant dense<0.000000e+00> : vector<2x128xf32>
    %856 = tpu.matmul %832, %855, %cst_275 {dimension_numbers = #tpu.dot_dimension_numbers<[1], [0], [0], [1], [0, 0, 1, 1], [], []>} : vector<2x32xf32>, vector<32x128xf32>, vector<2x128xf32> -> vector<2x128xf32>
    %857 = arith.addf %854, %856 : vector<2x128xf32>
    %858 = arith.negf %857 : vector<2x128xf32>
    %859 = math.exp %858 : vector<2x128xf32>
    %cst_276 = arith.constant 1.000000e+00 : f32
    %860 = vector.broadcast %cst_276 : f32 to vector<2x128xf32>
    %861 = arith.addf %860, %859 : vector<2x128xf32>
    %862 = arith.divf %860, %861 : vector<2x128xf32>
    %863 = vector.extract_strided_slice %862 {offsets = [0, 0], sizes = [2, 32], strides = [1, 1]} : vector<2x128xf32> to vector<2x32xf32>
    %864 = vector.extract_strided_slice %862 {offsets = [0, 32], sizes = [2, 32], strides = [1, 1]} : vector<2x128xf32> to vector<2x32xf32>
    %865 = vector.extract_strided_slice %862 {offsets = [0, 96], sizes = [2, 32], strides = [1, 1]} : vector<2x128xf32> to vector<2x32xf32>
    %866 = vector.extract_strided_slice %857 {offsets = [0, 64], sizes = [2, 32], strides = [1, 1]} : vector<2x128xf32> to vector<2x32xf32>
    %867 = math.tanh %866 : vector<2x32xf32>
    %868 = arith.mulf %864, %830 : vector<2x32xf32>
    %869 = arith.mulf %863, %867 : vector<2x32xf32>
    %870 = arith.addf %868, %869 : vector<2x32xf32>
    %871 = math.tanh %870 : vector<2x32xf32>
    %872 = arith.mulf %865, %871 : vector<2x32xf32>
    %c6_277 = arith.constant 6 : index
    %c32_278 = arith.constant 32 : index
    %873 = vector.load %arg26[%c6_277, %c32_278] : memref<16x64xf32, #tpu.memory_space<vmem>>, vector<2x32xf32>
    tpu.vector_store %arg26[%c6_277, %c32_278], %872 {strides = array<i32>} : memref<16x64xf32, #tpu.memory_space<vmem>>, vector<2x32xf32>,
    %874 = vector.extract_strided_slice %668 {offsets = [10, 0], sizes = [2, 128], strides = [1, 1]} : vector<16x128xf32> to vector<2x128xf32>
    %c0_279 = arith.constant 0 : index
    %c0_280 = arith.constant 0 : index
    %875 = vector.load %arg14[%c0_279, %c0_280] : memref<32x128xf32, #tpu.memory_space<vmem>>, vector<32x128xf32>
    %cst_281 = arith.constant dense<0.000000e+00> : vector<2x128xf32>
    %876 = tpu.matmul %852, %875, %cst_281 {dimension_numbers = #tpu.dot_dimension_numbers<[1], [0], [0], [1], [0, 0, 1, 1], [], []>} : vector<2x32xf32>, vector<32x128xf32>, vector<2x128xf32> -> vector<2x128xf32>
    %877 = arith.addf %874, %876 : vector<2x128xf32>
    %878 = arith.negf %877 : vector<2x128xf32>
    %879 = math.exp %878 : vector<2x128xf32>
    %cst_282 = arith.constant 1.000000e+00 : f32
    %880 = vector.broadcast %cst_282 : f32 to vector<2x128xf32>
    %881 = arith.addf %880, %879 : vector<2x128xf32>
    %882 = arith.divf %880, %881 : vector<2x128xf32>
    %883 = vector.extract_strided_slice %882 {offsets = [0, 0], sizes = [2, 32], strides = [1, 1]} : vector<2x128xf32> to vector<2x32xf32>
    %884 = vector.extract_strided_slice %882 {offsets = [0, 32], sizes = [2, 32], strides = [1, 1]} : vector<2x128xf32> to vector<2x32xf32>
    %885 = vector.extract_strided_slice %882 {offsets = [0, 96], sizes = [2, 32], strides = [1, 1]} : vector<2x128xf32> to vector<2x32xf32>
    %886 = vector.extract_strided_slice %877 {offsets = [0, 64], sizes = [2, 32], strides = [1, 1]} : vector<2x128xf32> to vector<2x32xf32>
    %887 = math.tanh %886 : vector<2x32xf32>
    %888 = arith.mulf %884, %850 : vector<2x32xf32>
    %889 = arith.mulf %883, %887 : vector<2x32xf32>
    %890 = arith.addf %888, %889 : vector<2x32xf32>
    %891 = math.tanh %890 : vector<2x32xf32>
    %892 = arith.mulf %885, %891 : vector<2x32xf32>
    %c10_283 = arith.constant 10 : index
    %c0_284 = arith.constant 0 : index
    %893 = vector.load %arg26[%c10_283, %c0_284] : memref<16x64xf32, #tpu.memory_space<vmem>>, vector<2x32xf32>
    tpu.vector_store %arg26[%c10_283, %c0_284], %892 {strides = array<i32>} : memref<16x64xf32, #tpu.memory_space<vmem>>, vector<2x32xf32>,
    %894 = vector.extract_strided_slice %673 {offsets = [4, 0], sizes = [2, 128], strides = [1, 1]} : vector<16x128xf32> to vector<2x128xf32>
    %c0_285 = arith.constant 0 : index
    %c0_286 = arith.constant 0 : index
    %895 = vector.load %arg17[%c0_285, %c0_286] : memref<32x128xf32, #tpu.memory_space<vmem>>, vector<32x128xf32>
    %cst_287 = arith.constant dense<0.000000e+00> : vector<2x128xf32>
    %896 = tpu.matmul %872, %895, %cst_287 {dimension_numbers = #tpu.dot_dimension_numbers<[1], [0], [0], [1], [0, 0, 1, 1], [], []>} : vector<2x32xf32>, vector<32x128xf32>, vector<2x128xf32> -> vector<2x128xf32>
    %897 = arith.addf %894, %896 : vector<2x128xf32>
    %898 = arith.negf %897 : vector<2x128xf32>
    %899 = math.exp %898 : vector<2x128xf32>
    %cst_288 = arith.constant 1.000000e+00 : f32
    %900 = vector.broadcast %cst_288 : f32 to vector<2x128xf32>
    %901 = arith.addf %900, %899 : vector<2x128xf32>
    %902 = arith.divf %900, %901 : vector<2x128xf32>
    %903 = vector.extract_strided_slice %902 {offsets = [0, 0], sizes = [2, 32], strides = [1, 1]} : vector<2x128xf32> to vector<2x32xf32>
    %904 = vector.extract_strided_slice %902 {offsets = [0, 32], sizes = [2, 32], strides = [1, 1]} : vector<2x128xf32> to vector<2x32xf32>
    %905 = vector.extract_strided_slice %902 {offsets = [0, 96], sizes = [2, 32], strides = [1, 1]} : vector<2x128xf32> to vector<2x32xf32>
    %906 = vector.extract_strided_slice %897 {offsets = [0, 64], sizes = [2, 32], strides = [1, 1]} : vector<2x128xf32> to vector<2x32xf32>
    %907 = math.tanh %906 : vector<2x32xf32>
    %908 = arith.mulf %904, %870 : vector<2x32xf32>
    %909 = arith.mulf %903, %907 : vector<2x32xf32>
    %910 = arith.addf %908, %909 : vector<2x32xf32>
    %911 = math.tanh %910 : vector<2x32xf32>
    %912 = arith.mulf %905, %911 : vector<2x32xf32>
    %c4_289 = arith.constant 4 : index
    %c32_290 = arith.constant 32 : index
    %913 = vector.load %arg26[%c4_289, %c32_290] : memref<16x64xf32, #tpu.memory_space<vmem>>, vector<2x32xf32>
    tpu.vector_store %arg26[%c4_289, %c32_290], %912 {strides = array<i32>} : memref<16x64xf32, #tpu.memory_space<vmem>>, vector<2x32xf32>,
    %914 = vector.extract_strided_slice %668 {offsets = [12, 0], sizes = [2, 128], strides = [1, 1]} : vector<16x128xf32> to vector<2x128xf32>
    %c0_291 = arith.constant 0 : index
    %c0_292 = arith.constant 0 : index
    %915 = vector.load %arg14[%c0_291, %c0_292] : memref<32x128xf32, #tpu.memory_space<vmem>>, vector<32x128xf32>
    %cst_293 = arith.constant dense<0.000000e+00> : vector<2x128xf32>
    %916 = tpu.matmul %892, %915, %cst_293 {dimension_numbers = #tpu.dot_dimension_numbers<[1], [0], [0], [1], [0, 0, 1, 1], [], []>} : vector<2x32xf32>, vector<32x128xf32>, vector<2x128xf32> -> vector<2x128xf32>
    %917 = arith.addf %914, %916 : vector<2x128xf32>
    %918 = arith.negf %917 : vector<2x128xf32>
    %919 = math.exp %918 : vector<2x128xf32>
    %cst_294 = arith.constant 1.000000e+00 : f32
    %920 = vector.broadcast %cst_294 : f32 to vector<2x128xf32>
    %921 = arith.addf %920, %919 : vector<2x128xf32>
    %922 = arith.divf %920, %921 : vector<2x128xf32>
    %923 = vector.extract_strided_slice %922 {offsets = [0, 0], sizes = [2, 32], strides = [1, 1]} : vector<2x128xf32> to vector<2x32xf32>
    %924 = vector.extract_strided_slice %922 {offsets = [0, 32], sizes = [2, 32], strides = [1, 1]} : vector<2x128xf32> to vector<2x32xf32>
    %925 = vector.extract_strided_slice %922 {offsets = [0, 96], sizes = [2, 32], strides = [1, 1]} : vector<2x128xf32> to vector<2x32xf32>
    %926 = vector.extract_strided_slice %917 {offsets = [0, 64], sizes = [2, 32], strides = [1, 1]} : vector<2x128xf32> to vector<2x32xf32>
    %927 = math.tanh %926 : vector<2x32xf32>
    %928 = arith.mulf %924, %890 : vector<2x32xf32>
    %929 = arith.mulf %923, %927 : vector<2x32xf32>
    %930 = arith.addf %928, %929 : vector<2x32xf32>
    %931 = math.tanh %930 : vector<2x32xf32>
    %932 = arith.mulf %925, %931 : vector<2x32xf32>
    %c12_295 = arith.constant 12 : index
    %c0_296 = arith.constant 0 : index
    %933 = vector.load %arg26[%c12_295, %c0_296] : memref<16x64xf32, #tpu.memory_space<vmem>>, vector<2x32xf32>
    tpu.vector_store %arg26[%c12_295, %c0_296], %932 {strides = array<i32>} : memref<16x64xf32, #tpu.memory_space<vmem>>, vector<2x32xf32>,
    %934 = vector.extract_strided_slice %673 {offsets = [2, 0], sizes = [2, 128], strides = [1, 1]} : vector<16x128xf32> to vector<2x128xf32>
    %c0_297 = arith.constant 0 : index
    %c0_298 = arith.constant 0 : index
    %935 = vector.load %arg17[%c0_297, %c0_298] : memref<32x128xf32, #tpu.memory_space<vmem>>, vector<32x128xf32>
    %cst_299 = arith.constant dense<0.000000e+00> : vector<2x128xf32>
    %936 = tpu.matmul %912, %935, %cst_299 {dimension_numbers = #tpu.dot_dimension_numbers<[1], [0], [0], [1], [0, 0, 1, 1], [], []>} : vector<2x32xf32>, vector<32x128xf32>, vector<2x128xf32> -> vector<2x128xf32>
    %937 = arith.addf %934, %936 : vector<2x128xf32>
    %938 = arith.negf %937 : vector<2x128xf32>
    %939 = math.exp %938 : vector<2x128xf32>
    %cst_300 = arith.constant 1.000000e+00 : f32
    %940 = vector.broadcast %cst_300 : f32 to vector<2x128xf32>
    %941 = arith.addf %940, %939 : vector<2x128xf32>
    %942 = arith.divf %940, %941 : vector<2x128xf32>
    %943 = vector.extract_strided_slice %942 {offsets = [0, 0], sizes = [2, 32], strides = [1, 1]} : vector<2x128xf32> to vector<2x32xf32>
    %944 = vector.extract_strided_slice %942 {offsets = [0, 32], sizes = [2, 32], strides = [1, 1]} : vector<2x128xf32> to vector<2x32xf32>
    %945 = vector.extract_strided_slice %942 {offsets = [0, 96], sizes = [2, 32], strides = [1, 1]} : vector<2x128xf32> to vector<2x32xf32>
    %946 = vector.extract_strided_slice %937 {offsets = [0, 64], sizes = [2, 32], strides = [1, 1]} : vector<2x128xf32> to vector<2x32xf32>
    %947 = math.tanh %946 : vector<2x32xf32>
    %948 = arith.mulf %944, %910 : vector<2x32xf32>
    %949 = arith.mulf %943, %947 : vector<2x32xf32>
    %950 = arith.addf %948, %949 : vector<2x32xf32>
    %951 = math.tanh %950 : vector<2x32xf32>
    %952 = arith.mulf %945, %951 : vector<2x32xf32>
    %c2_301 = arith.constant 2 : index
    %c32_302 = arith.constant 32 : index
    %953 = vector.load %arg26[%c2_301, %c32_302] : memref<16x64xf32, #tpu.memory_space<vmem>>, vector<2x32xf32>
    tpu.vector_store %arg26[%c2_301, %c32_302], %952 {strides = array<i32>} : memref<16x64xf32, #tpu.memory_space<vmem>>, vector<2x32xf32>,
    %954 = vector.extract_strided_slice %668 {offsets = [14, 0], sizes = [2, 128], strides = [1, 1]} : vector<16x128xf32> to vector<2x128xf32>
    %c0_303 = arith.constant 0 : index
    %c0_304 = arith.constant 0 : index
    %955 = vector.load %arg14[%c0_303, %c0_304] : memref<32x128xf32, #tpu.memory_space<vmem>>, vector<32x128xf32>
    %cst_305 = arith.constant dense<0.000000e+00> : vector<2x128xf32>
    %956 = tpu.matmul %932, %955, %cst_305 {dimension_numbers = #tpu.dot_dimension_numbers<[1], [0], [0], [1], [0, 0, 1, 1], [], []>} : vector<2x32xf32>, vector<32x128xf32>, vector<2x128xf32> -> vector<2x128xf32>
    %957 = arith.addf %954, %956 : vector<2x128xf32>
    %958 = arith.negf %957 : vector<2x128xf32>
    %959 = math.exp %958 : vector<2x128xf32>
    %cst_306 = arith.constant 1.000000e+00 : f32
    %960 = vector.broadcast %cst_306 : f32 to vector<2x128xf32>
    %961 = arith.addf %960, %959 : vector<2x128xf32>
    %962 = arith.divf %960, %961 : vector<2x128xf32>
    %963 = vector.extract_strided_slice %962 {offsets = [0, 0], sizes = [2, 32], strides = [1, 1]} : vector<2x128xf32> to vector<2x32xf32>
    %964 = vector.extract_strided_slice %962 {offsets = [0, 32], sizes = [2, 32], strides = [1, 1]} : vector<2x128xf32> to vector<2x32xf32>
    %965 = vector.extract_strided_slice %962 {offsets = [0, 96], sizes = [2, 32], strides = [1, 1]} : vector<2x128xf32> to vector<2x32xf32>
    %966 = vector.extract_strided_slice %957 {offsets = [0, 64], sizes = [2, 32], strides = [1, 1]} : vector<2x128xf32> to vector<2x32xf32>
    %967 = math.tanh %966 : vector<2x32xf32>
    %968 = arith.mulf %964, %930 : vector<2x32xf32>
    %969 = arith.mulf %963, %967 : vector<2x32xf32>
    %970 = arith.addf %968, %969 : vector<2x32xf32>
    %971 = math.tanh %970 : vector<2x32xf32>
    %972 = arith.mulf %965, %971 : vector<2x32xf32>
    %c14_307 = arith.constant 14 : index
    %c0_308 = arith.constant 0 : index
    %973 = vector.load %arg26[%c14_307, %c0_308] : memref<16x64xf32, #tpu.memory_space<vmem>>, vector<2x32xf32>
    tpu.vector_store %arg26[%c14_307, %c0_308], %972 {strides = array<i32>} : memref<16x64xf32, #tpu.memory_space<vmem>>, vector<2x32xf32>,
    %974 = vector.extract_strided_slice %673 {offsets = [0, 0], sizes = [2, 128], strides = [1, 1]} : vector<16x128xf32> to vector<2x128xf32>
    %c0_309 = arith.constant 0 : index
    %c0_310 = arith.constant 0 : index
    %975 = vector.load %arg17[%c0_309, %c0_310] : memref<32x128xf32, #tpu.memory_space<vmem>>, vector<32x128xf32>
    %cst_311 = arith.constant dense<0.000000e+00> : vector<2x128xf32>
    %976 = tpu.matmul %952, %975, %cst_311 {dimension_numbers = #tpu.dot_dimension_numbers<[1], [0], [0], [1], [0, 0, 1, 1], [], []>} : vector<2x32xf32>, vector<32x128xf32>, vector<2x128xf32> -> vector<2x128xf32>
    %977 = arith.addf %974, %976 : vector<2x128xf32>
    %978 = arith.negf %977 : vector<2x128xf32>
    %979 = math.exp %978 : vector<2x128xf32>
    %cst_312 = arith.constant 1.000000e+00 : f32
    %980 = vector.broadcast %cst_312 : f32 to vector<2x128xf32>
    %981 = arith.addf %980, %979 : vector<2x128xf32>
    %982 = arith.divf %980, %981 : vector<2x128xf32>
    %983 = vector.extract_strided_slice %982 {offsets = [0, 0], sizes = [2, 32], strides = [1, 1]} : vector<2x128xf32> to vector<2x32xf32>
    %984 = vector.extract_strided_slice %982 {offsets = [0, 32], sizes = [2, 32], strides = [1, 1]} : vector<2x128xf32> to vector<2x32xf32>
    %985 = vector.extract_strided_slice %982 {offsets = [0, 96], sizes = [2, 32], strides = [1, 1]} : vector<2x128xf32> to vector<2x32xf32>
    %986 = vector.extract_strided_slice %977 {offsets = [0, 64], sizes = [2, 32], strides = [1, 1]} : vector<2x128xf32> to vector<2x32xf32>
    %987 = math.tanh %986 : vector<2x32xf32>
    %988 = arith.mulf %984, %950 : vector<2x32xf32>
    %989 = arith.mulf %983, %987 : vector<2x32xf32>
    %990 = arith.addf %988, %989 : vector<2x32xf32>
    %991 = math.tanh %990 : vector<2x32xf32>
    %992 = arith.mulf %985, %991 : vector<2x32xf32>
    %c0_313 = arith.constant 0 : index
    %c32_314 = arith.constant 32 : index
    %993 = vector.load %arg26[%c0_313, %c32_314] : memref<16x64xf32, #tpu.memory_space<vmem>>, vector<2x32xf32>
    tpu.vector_store %arg26[%c0_313, %c32_314], %992 {strides = array<i32>} : memref<16x64xf32, #tpu.memory_space<vmem>>, vector<2x32xf32>,
    %c0_315 = arith.constant 0 : index
    %c0_316 = arith.constant 0 : index
    %994 = vector.load %arg26[%c0_315, %c0_316] : memref<16x64xf32, #tpu.memory_space<vmem>>, vector<16x64xf32>
    %c0_317 = arith.constant 0 : index
    %c0_318 = arith.constant 0 : index
    %995 = vector.load %arg19[%c0_317, %c0_318] : memref<64x1xf32, #tpu.memory_space<vmem>>, vector<64x1xf32>
    %cst_319 = arith.constant dense<0.000000e+00> : vector<16x1xf32>
    %996 = tpu.matmul %994, %995, %cst_319 {dimension_numbers = #tpu.dot_dimension_numbers<[1], [0], [0], [1], [0, 0, 1, 1], [], []>} : vector<16x64xf32>, vector<64x1xf32>, vector<16x1xf32> -> vector<16x1xf32>
    %c0_320 = arith.constant 0 : index
    %c0_321 = arith.constant 0 : index
    %997 = vector.load %arg20[%c0_320, %c0_321] : memref<1x1xf32, #tpu.memory_space<vmem>>, vector<1x1xf32>
    %998 = vector.broadcast %997 : vector<1x1xf32> to vector<16x1xf32>
    %999 = arith.addf %996, %998 : vector<16x1xf32>
    %1000 = math.tanh %999 : vector<16x1xf32>
    %1001 = vector.extract_strided_slice %1000 {offsets = [0, 0], sizes = [2, 1], strides = [1, 1]} : vector<16x1xf32> to vector<2x1xf32>
    %c0_322 = arith.constant 0 : index
    %c0_323 = arith.constant 0 : index
    %1002 = vector.load %arg27[%c0_322, %c0_323] : memref<2x8xf32, #tpu.memory_space<vmem>>, vector<2x1xf32>
    tpu.vector_store %arg27[%c0_322, %c0_323], %1001 {strides = array<i32>} : memref<2x8xf32, #tpu.memory_space<vmem>>, vector<2x1xf32>,
    %1003 = vector.extract_strided_slice %1000 {offsets = [2, 0], sizes = [2, 1], strides = [1, 1]} : vector<16x1xf32> to vector<2x1xf32>
    %c0_324 = arith.constant 0 : index
    %c1 = arith.constant 1 : index
    %1004 = vector.load %arg27[%c0_324, %c1] : memref<2x8xf32, #tpu.memory_space<vmem>>, vector<2x1xf32>
    tpu.vector_store %arg27[%c0_324, %c1], %1003 {strides = array<i32>} : memref<2x8xf32, #tpu.memory_space<vmem>>, vector<2x1xf32>,
    %1005 = vector.extract_strided_slice %1000 {offsets = [4, 0], sizes = [2, 1], strides = [1, 1]} : vector<16x1xf32> to vector<2x1xf32>
    %c0_325 = arith.constant 0 : index
    %c2_326 = arith.constant 2 : index
    %1006 = vector.load %arg27[%c0_325, %c2_326] : memref<2x8xf32, #tpu.memory_space<vmem>>, vector<2x1xf32>
    tpu.vector_store %arg27[%c0_325, %c2_326], %1005 {strides = array<i32>} : memref<2x8xf32, #tpu.memory_space<vmem>>, vector<2x1xf32>,
    %1007 = vector.extract_strided_slice %1000 {offsets = [6, 0], sizes = [2, 1], strides = [1, 1]} : vector<16x1xf32> to vector<2x1xf32>
    %c0_327 = arith.constant 0 : index
    %c3 = arith.constant 3 : index
    %1008 = vector.load %arg27[%c0_327, %c3] : memref<2x8xf32, #tpu.memory_space<vmem>>, vector<2x1xf32>
    tpu.vector_store %arg27[%c0_327, %c3], %1007 {strides = array<i32>} : memref<2x8xf32, #tpu.memory_space<vmem>>, vector<2x1xf32>,
    %1009 = vector.extract_strided_slice %1000 {offsets = [8, 0], sizes = [2, 1], strides = [1, 1]} : vector<16x1xf32> to vector<2x1xf32>
    %c0_328 = arith.constant 0 : index
    %c4_329 = arith.constant 4 : index
    %1010 = vector.load %arg27[%c0_328, %c4_329] : memref<2x8xf32, #tpu.memory_space<vmem>>, vector<2x1xf32>
    tpu.vector_store %arg27[%c0_328, %c4_329], %1009 {strides = array<i32>} : memref<2x8xf32, #tpu.memory_space<vmem>>, vector<2x1xf32>,
    %1011 = vector.extract_strided_slice %1000 {offsets = [10, 0], sizes = [2, 1], strides = [1, 1]} : vector<16x1xf32> to vector<2x1xf32>
    %c0_330 = arith.constant 0 : index
    %c5 = arith.constant 5 : index
    %1012 = vector.load %arg27[%c0_330, %c5] : memref<2x8xf32, #tpu.memory_space<vmem>>, vector<2x1xf32>
    tpu.vector_store %arg27[%c0_330, %c5], %1011 {strides = array<i32>} : memref<2x8xf32, #tpu.memory_space<vmem>>, vector<2x1xf32>,
    %1013 = vector.extract_strided_slice %1000 {offsets = [12, 0], sizes = [2, 1], strides = [1, 1]} : vector<16x1xf32> to vector<2x1xf32>
    %c0_331 = arith.constant 0 : index
    %c6_332 = arith.constant 6 : index
    %1014 = vector.load %arg27[%c0_331, %c6_332] : memref<2x8xf32, #tpu.memory_space<vmem>>, vector<2x1xf32>
    tpu.vector_store %arg27[%c0_331, %c6_332], %1013 {strides = array<i32>} : memref<2x8xf32, #tpu.memory_space<vmem>>, vector<2x1xf32>,
    %1015 = vector.extract_strided_slice %1000 {offsets = [14, 0], sizes = [2, 1], strides = [1, 1]} : vector<16x1xf32> to vector<2x1xf32>
    %c0_333 = arith.constant 0 : index
    %c7 = arith.constant 7 : index
    %1016 = vector.load %arg27[%c0_333, %c7] : memref<2x8xf32, #tpu.memory_space<vmem>>, vector<2x1xf32>
    tpu.vector_store %arg27[%c0_333, %c7], %1015 {strides = array<i32>} : memref<2x8xf32, #tpu.memory_space<vmem>>, vector<2x1xf32>,
    %c0_334 = arith.constant 0 : index
    %c0_335 = arith.constant 0 : index
    %1017 = vector.load %arg27[%c0_334, %c0_335] : memref<2x8xf32, #tpu.memory_space<vmem>>, vector<2x8xf32>
    %c0_336 = arith.constant 0 : index
    %c0_337 = arith.constant 0 : index
    %1018 = vector.load %arg21[%c0_336, %c0_337] : memref<8x128xf32, #tpu.memory_space<vmem>>, vector<8x128xf32>
    %cst_338 = arith.constant dense<0.000000e+00> : vector<2x128xf32>
    %1019 = tpu.matmul %1017, %1018, %cst_338 {dimension_numbers = #tpu.dot_dimension_numbers<[1], [0], [0], [1], [0, 0, 1, 1], [], []>} : vector<2x8xf32>, vector<8x128xf32>, vector<2x128xf32> -> vector<2x128xf32>
    %c0_339 = arith.constant 0 : index
    %c0_340 = arith.constant 0 : index
    %1020 = vector.load %arg22[%c0_339, %c0_340] : memref<1x128xf32, #tpu.memory_space<vmem>>, vector<1x128xf32>
    %1021 = vector.broadcast %1020 : vector<1x128xf32> to vector<2x128xf32>
    %1022 = arith.addf %1019, %1021 : vector<2x128xf32>
    %1023 = math.tanh %1022 : vector<2x128xf32>
    %c0_341 = arith.constant 0 : index
    %c0_342 = arith.constant 0 : index
    %1024 = vector.load %arg23[%c0_341, %c0_342] : memref<128x1xf32, #tpu.memory_space<vmem>>, vector<128x1xf32>
    %cst_343 = arith.constant dense<0.000000e+00> : vector<2x1xf32>
    %1025 = tpu.matmul %1023, %1024, %cst_343 {dimension_numbers = #tpu.dot_dimension_numbers<[1], [0], [0], [1], [0, 0, 1, 1], [], []>} : vector<2x128xf32>, vector<128x1xf32>, vector<2x1xf32> -> vector<2x1xf32>
    %c0_344 = arith.constant 0 : index
    %c0_345 = arith.constant 0 : index
    %1026 = vector.load %arg24[%c0_344, %c0_345] : memref<1x1xf32, #tpu.memory_space<vmem>>, vector<1x1xf32>
    %1027 = vector.broadcast %1026 : vector<1x1xf32> to vector<2x1xf32>
    %1028 = arith.addf %1025, %1027 : vector<2x1xf32>
    %1029 = math.tanh %1028 : vector<2x1xf32>
    %c0_346 = arith.constant 0 : index
    %c0_347 = arith.constant 0 : index
    %1030 = vector.load %arg25[%c0_346, %c0_347] : memref<2x1xf32, #tpu.memory_space<vmem>>, vector<2x1xf32>
    tpu.vector_store %arg25[%c0_346, %c0_347], %1029 {strides = array<i32>} : memref<2x1xf32, #tpu.memory_space<vmem>>, vector<2x1xf32>,
    return
  }
}

</mosaic_0001>

<llo_original>
// kernel: tpu_custom_call.1
$region0: #{tpu_custom_call.1}
  #allocation0 [shape = 'u32[]', space=smem, size = 0x4, offset = 0x4, fixed_abs, tag = 'smem constant byte address 0x4 - core index']
  #allocation1 [shape = 'u32[72,128]{1,0:T(1,128)}', space=vmem, size = 0x9000, scoped, tag = 'internal scratch']
  #allocation2 [shape = 'f32[16,64]{1,0:T(8,128)}', space=vmem, size = 0x2000, scoped, tag = 'scratch operand']
  #allocation3 [shape = 'f32[2,8]{1,0:T(2,128)}', space=vmem, size = 0x400, scoped, tag = 'scratch operand']
  #allocation4 [shape = 'f32[1,1]{1,0:T(1,128)S(1)}', space=vmem, size = 0x200, scoped, tag = 'scoped memory for tpu_custom_call.1']
  #allocation5 [shape = 'f32[1,1]{1,0:T(1,128)S(1)}', space=vmem, size = 0x200, scoped, tag = 'scoped memory for tpu_custom_call.1']
  %s0 = inlined_call_operand.hbm [shape: f32[16,32], index: 0, kind: input, shape index: {}]
  %s1 = inlined_call_operand.hbm [shape: f32[32,128], index: 1, kind: input, shape index: {}]
  %s2 = inlined_call_operand.hbm [shape: f32[32,128], index: 2, kind: input, shape index: {}]
  %s3 = inlined_call_operand.vmem [shape: f32[1,128], index: 3, kind: input, shape index: {}]
  %s4 = inlined_call_operand.hbm [shape: f32[32,128], index: 4, kind: input, shape index: {}]
  %s5 = inlined_call_operand.hbm [shape: f32[32,128], index: 5, kind: input, shape index: {}]
  %s6 = inlined_call_operand.hbm [shape: f32[1,128], index: 6, kind: input, shape index: {}]
  %s7 = inlined_call_operand.vmem [shape: f32[64,128], index: 7, kind: input, shape index: {}]
  %s8 = inlined_call_operand.hbm [shape: f32[32,128], index: 8, kind: input, shape index: {}]
  %s9 = inlined_call_operand.vmem [shape: f32[1,128], index: 9, kind: input, shape index: {}]
  %s10 = inlined_call_operand.vmem [shape: f32[64,128], index: 10, kind: input, shape index: {}]
  %s11 = inlined_call_operand.hbm [shape: f32[32,128], index: 11, kind: input, shape index: {}]
  %s12 = inlined_call_operand.vmem [shape: f32[1,128], index: 12, kind: input, shape index: {}]
  %s13 = inlined_call_operand.vmem [shape: f32[64,128], index: 13, kind: input, shape index: {}]
  %s14 = inlined_call_operand.hbm [shape: f32[32,128], index: 14, kind: input, shape index: {}]
  %s15 = inlined_call_operand.vmem [shape: f32[1,128], index: 15, kind: input, shape index: {}]
  %s16 = inlined_call_operand.hbm [shape: f32[64,128], index: 16, kind: input, shape index: {}]
  %s17 = inlined_call_operand.hbm [shape: f32[32,128], index: 17, kind: input, shape index: {}]
  %s18 = inlined_call_operand.vmem [shape: f32[1,128], index: 18, kind: input, shape index: {}]
  %s19 = inlined_call_operand.vmem [shape: f32[64,1], index: 19, kind: input, shape index: {}]
  %s20 = inlined_call_operand.<no memory space> [shape: f32[1,1], index: 20, kind: input, shape index: {}]
  %s21 = inlined_call_operand.vmem [shape: f32[8,128], index: 21, kind: input, shape index: {}]
  %s22 = inlined_call_operand.vmem [shape: f32[1,128], index: 22, kind: input, shape index: {}]
  %s23 = inlined_call_operand.vmem [shape: f32[128,1], index: 23, kind: input, shape index: {}]
  %s24 = inlined_call_operand.<no memory space> [shape: f32[1,1], index: 24, kind: input, shape index: {}]
  %s25 = inlined_call_operand.vmem [shape: f32[2,1], index: 25, kind: output, shape index: {}]
  %s26 = sld [smem:[#allocation0]]
  $region154: #{tpu_custom_call.1} parent=0
    _
  %s28 = ssub.s32 1, %s26
  %s29 = scalar_select 0, %s28, %s26
  %v30 = vstv %s20
  %31 = vst [vmem:[#allocation4] sm:$0x1] %v30
  %v32 = vstv %s24
  %33 = vst [vmem:[#allocation5] sm:$0x1] %v32
  $region1: #{tpu_custom_call.1} parent=0
    #allocation6 [shape = 'u8[8192]{0}', space=vmem, size = 0x2000, scoped, tag = 'input window, operand 0, single buffered']
    #allocation7 [shape = 's32[1]{0}', space=sflag, size = 0x4, scoped, tag = 'scoped memory for tpu_custom_call.1']
    #allocation8 [shape = 'u8[16384]{0}', space=vmem, size = 0x4000, scoped, tag = 'input window, operand 1, single buffered']
    #allocation9 [shape = 's32[1]{0}', space=sflag, size = 0x4, scoped, tag = 'scoped memory for tpu_custom_call.1']
    #allocation10 [shape = 'u8[16384]{0}', space=vmem, size = 0x4000, scoped, tag = 'input window, operand 2, single buffered']
    #allocation11 [shape = 'u8[16384]{0}', space=vmem, size = 0x4000, scoped, tag = 'input window, operand 4, single buffered']
    #allocation12 [shape = 's32[1]{0}', space=sflag, size = 0x4, scoped, tag = 'scoped memory for tpu_custom_call.1']
    #allocation13 [shape = 'u8[16384]{0}', space=vmem, size = 0x4000, scoped, tag = 'input window, operand 5, single buffered']
    #allocation14 [shape = 'u8[512]{0}', space=vmem, size = 0x400, scoped, tag = 'input window, operand 6, single buffered']
    #allocation15 [shape = 's32[1]{0}', space=sflag, size = 0x4, scoped, tag = 'scoped memory for tpu_custom_call.1']
    #allocation16 [shape = 'u8[16384]{0}', space=vmem, size = 0x4000, scoped, tag = 'input window, operand 8, single buffered']
    #allocation17 [shape = 'u8[16384]{0}', space=vmem, size = 0x4000, scoped, tag = 'input window, operand 11, single buffered']
    #allocation18 [shape = 's32[1]{0}', space=sflag, size = 0x4, scoped, tag = 'scoped memory for tpu_custom_call.1']
    #allocation19 [shape = 'u8[16384]{0}', space=vmem, size = 0x4000, scoped, tag = 'input window, operand 14, single buffered']
    #allocation20 [shape = 'u8[32768]{0}', space=vmem, size = 0x8000, scoped, tag = 'input window, operand 16, single buffered']
    #allocation21 [shape = 's32[1]{0}', space=sflag, size = 0x4, scoped, tag = 'scoped memory for tpu_custom_call.1']
    #allocation22 [shape = 'u8[16384]{0}', space=vmem, size = 0x4000, scoped, tag = 'input window, operand 17, single buffered']
    %34 = vsyncpa [#allocation7], 0
    %35 = vsyncpa [#allocation9], 0
    %36 = vsyncpa [#allocation12], 0
    %37 = vsyncpa [#allocation15], 0
    %38 = vsyncpa [#allocation18], 0
    %39 = vsyncpa [#allocation21], 0
    // Predicated region
    $region2: #{tpu_custom_call.1} parent=1 // pred_check
      _
    $region3: #{tpu_custom_call.1} parent=1 // pred_check_branch
      %41 = sbr.rel (0) target = $region5
    $region4: #{tpu_custom_call.1} parent=1 // pred_region
      %43 = vsyncadd [#allocation7], 0
      %s44 = sshll.u32 %s0, 4
      %s45 = int_to_ptr.hbm [resolvable:$true] %s44
      %s46 = sshll.u32 [#allocation6], 4
      %s47 = int_to_ptr.vmem [resolvable:$true] %s46
      %52 = dma.hbm_to_vmem [thread:$0]  %s45, 256, %s47, [#allocation7], 128, 128, 8
    $region5: #{tpu_custom_call.1} parent=1 // pred_fallthru
      _
    // Predicated region
    $region6: #{tpu_custom_call.1} parent=1 // pred_check
      _
    $region7: #{tpu_custom_call.1} parent=1 // pred_check_branch
      %54 = sbr.rel (0) target = $region9
    $region8: #{tpu_custom_call.1} parent=1 // pred_region
      %56 = vsyncadd [#allocation9], 0
      %s57 = sshll.u32 %s1, 4
      %s58 = int_to_ptr.hbm [resolvable:$true] %s57
      %s59 = sshll.u32 [#allocation8], 4
      %s60 = int_to_ptr.vmem [resolvable:$true] %s59
      %65 = dma.hbm_to_vmem [thread:$0]  %s58, 512, %s60, [#allocation9], 128, 128, 8
    $region9: #{tpu_custom_call.1} parent=1 // pred_fallthru
      _
    // Predicated region
    $region10: #{tpu_custom_call.1} parent=1 // pred_check
      _
    $region11: #{tpu_custom_call.1} parent=1 // pred_check_branch
      %67 = sbr.rel (0) target = $region13
    $region12: #{tpu_custom_call.1} parent=1 // pred_region
      %69 = vsyncadd [#allocation9], 0
      %s70 = sshll.u32 %s2, 4
      %s71 = int_to_ptr.hbm [resolvable:$true] %s70
      %s72 = sshll.u32 [#allocation10], 4
      %s73 = int_to_ptr.vmem [resolvable:$true] %s72
      %78 = dma.hbm_to_vmem [thread:$0]  %s71, 512, %s73, [#allocation9], 128, 128, 8
    $region13: #{tpu_custom_call.1} parent=1 // pred_fallthru
      _
    // Predicated region
    $region14: #{tpu_custom_call.1} parent=1 // pred_check
      _
    $region15: #{tpu_custom_call.1} parent=1 // pred_check_branch
      %80 = sbr.rel (0) target = $region17
    $region16: #{tpu_custom_call.1} parent=1 // pred_region
      _
    $region17: #{tpu_custom_call.1} parent=1 // pred_fallthru
      _
    // Predicated region
    $region18: #{tpu_custom_call.1} parent=1 // pred_check
      _
    $region19: #{tpu_custom_call.1} parent=1 // pred_check_branch
      %82 = sbr.rel (0) target = $region21
    $region20: #{tpu_custom_call.1} parent=1 // pred_region
      %84 = vsyncadd [#allocation12], 0
      %s85 = sshll.u32 %s4, 4
      %s86 = int_to_ptr.hbm [resolvable:$true] %s85
      %s87 = sshll.u32 [#allocation11], 4
      %s88 = int_to_ptr.vmem [resolvable:$true] %s87
      %93 = dma.hbm_to_vmem [thread:$0]  %s86, 512, %s88, [#allocation12], 128, 128, 8
    $region21: #{tpu_custom_call.1} parent=1 // pred_fallthru
      _
    // Predicated region
    $region22: #{tpu_custom_call.1} parent=1 // pred_check
      _
    $region23: #{tpu_custom_call.1} parent=1 // pred_check_branch
      %95 = sbr.rel (0) target = $region25
    $region24: #{tpu_custom_call.1} parent=1 // pred_region
      %97 = vsyncadd [#allocation12], 0
      %s98 = sshll.u32 %s5, 4
      %s99 = int_to_ptr.hbm [resolvable:$true] %s98
      %s100 = sshll.u32 [#allocation13], 4
      %s101 = int_to_ptr.vmem [resolvable:$true] %s100
      %106 = dma.hbm_to_vmem [thread:$0]  %s99, 512, %s101, [#allocation12], 128, 128, 8
    $region25: #{tpu_custom_call.1} parent=1 // pred_fallthru
      _
    // Predicated region
    $region26: #{tpu_custom_call.1} parent=1 // pred_check
      _
    $region27: #{tpu_custom_call.1} parent=1 // pred_check_branch
      %108 = sbr.rel (0) target = $region29
    $region28: #{tpu_custom_call.1} parent=1 // pred_region
      %110 = vsyncadd [#allocation15], 0
      %s112 = sshll.u32 %s6, 4
      %s113 = int_to_ptr.hbm [resolvable:$true] %s112
      %s114 = sshll.u32 [#allocation14], 4
      %s115 = int_to_ptr.vmem [resolvable:$true] %s114
      %117 = dma.hbm_to_vmem [thread:$0]  %s113, 16, %s115, [#allocation15]
    $region29: #{tpu_custom_call.1} parent=1 // pred_fallthru
      _
    // Predicated region
    $region30: #{tpu_custom_call.1} parent=1 // pred_check
      _
    $region31: #{tpu_custom_call.1} parent=1 // pred_check_branch
      %119 = sbr.rel (0) target = $region33
    $region32: #{tpu_custom_call.1} parent=1 // pred_region
      _
    $region33: #{tpu_custom_call.1} parent=1 // pred_fallthru
      _
    // Predicated region
    $region34: #{tpu_custom_call.1} parent=1 // pred_check
      _
    $region35: #{tpu_custom_call.1} parent=1 // pred_check_branch
      %121 = sbr.rel (0) target = $region37
    $region36: #{tpu_custom_call.1} parent=1 // pred_region
      %123 = vsyncadd [#allocation15], 0
      %s124 = sshll.u32 %s8, 4
      %s125 = int_to_ptr.hbm [resolvable:$true] %s124
      %s126 = sshll.u32 [#allocation16], 4
      %s127 = int_to_ptr.vmem [resolvable:$true] %s126
      %132 = dma.hbm_to_vmem [thread:$0]  %s125, 512, %s127, [#allocation15], 128, 128, 8
    $region37: #{tpu_custom_call.1} parent=1 // pred_fallthru
      _
    // Predicated region
    $region38: #{tpu_custom_call.1} parent=1 // pred_check
      _
    $region39: #{tpu_custom_call.1} parent=1 // pred_check_branch
      %134 = sbr.rel (0) target = $region41
    $region40: #{tpu_custom_call.1} parent=1 // pred_region
      _
    $region41: #{tpu_custom_call.1} parent=1 // pred_fallthru
      _
    // Predicated region
    $region42: #{tpu_custom_call.1} parent=1 // pred_check
      _
    $region43: #{tpu_custom_call.1} parent=1 // pred_check_branch
      %136 = sbr.rel (0) target = $region45
    $region44: #{tpu_custom_call.1} parent=1 // pred_region
      _
    $region45: #{tpu_custom_call.1} parent=1 // pred_fallthru
      _
    // Predicated region
    $region46: #{tpu_custom_call.1} parent=1 // pred_check
      _
    $region47: #{tpu_custom_call.1} parent=1 // pred_check_branch
      %138 = sbr.rel (0) target = $region49
    $region48: #{tpu_custom_call.1} parent=1 // pred_region
      %140 = vsyncadd [#allocation18], 0
      %s141 = sshll.u32 %s11, 4
      %s142 = int_to_ptr.hbm [resolvable:$true] %s141
      %s143 = sshll.u32 [#allocation17], 4
      %s144 = int_to_ptr.vmem [resolvable:$true] %s143
      %149 = dma.hbm_to_vmem [thread:$0]  %s142, 512, %s144, [#allocation18], 128, 128, 8
    $region49: #{tpu_custom_call.1} parent=1 // pred_fallthru
      _
    // Predicated region
    $region50: #{tpu_custom_call.1} parent=1 // pred_check
      _
    $region51: #{tpu_custom_call.1} parent=1 // pred_check_branch
      %151 = sbr.rel (0) target = $region53
    $region52: #{tpu_custom_call.1} parent=1 // pred_region
      _
    $region53: #{tpu_custom_call.1} parent=1 // pred_fallthru
      _
    // Predicated region
    $region54: #{tpu_custom_call.1} parent=1 // pred_check
      _
    $region55: #{tpu_custom_call.1} parent=1 // pred_check_branch
      %153 = sbr.rel (0) target = $region57
    $region56: #{tpu_custom_call.1} parent=1 // pred_region
      _
    $region57: #{tpu_custom_call.1} parent=1 // pred_fallthru
      _
    // Predicated region
    $region58: #{tpu_custom_call.1} parent=1 // pred_check
      _
    $region59: #{tpu_custom_call.1} parent=1 // pred_check_branch
      %155 = sbr.rel (0) target = $region61
    $region60: #{tpu_custom_call.1} parent=1 // pred_region
      %157 = vsyncadd [#allocation18], 0
      %s158 = sshll.u32 %s14, 4
      %s159 = int_to_ptr.hbm [resolvable:$true] %s158
      %s160 = sshll.u32 [#allocation19], 4
      %s161 = int_to_ptr.vmem [resolvable:$true] %s160
      %166 = dma.hbm_to_vmem [thread:$0]  %s159, 512, %s161, [#allocation18], 128, 128, 8
    $region61: #{tpu_custom_call.1} parent=1 // pred_fallthru
      _
    // Predicated region
    $region62: #{tpu_custom_call.1} parent=1 // pred_check
      _
    $region63: #{tpu_custom_call.1} parent=1 // pred_check_branch
      %168 = sbr.rel (0) target = $region65
    $region64: #{tpu_custom_call.1} parent=1 // pred_region
      _
    $region65: #{tpu_custom_call.1} parent=1 // pred_fallthru
      _
    // Predicated region
    $region66: #{tpu_custom_call.1} parent=1 // pred_check
      _
    $region67: #{tpu_custom_call.1} parent=1 // pred_check_branch
      %170 = sbr.rel (0) target = $region69
    $region68: #{tpu_custom_call.1} parent=1 // pred_region
      %172 = vsyncadd [#allocation21], 0
      %s173 = sshll.u32 %s16, 4
      %s174 = int_to_ptr.hbm [resolvable:$true] %s173
      %s175 = sshll.u32 [#allocation20], 4
      %s176 = int_to_ptr.vmem [resolvable:$true] %s175
      %181 = dma.hbm_to_vmem [thread:$0]  %s174, 1024, %s176, [#allocation21], 128, 128, 8
    $region69: #{tpu_custom_call.1} parent=1 // pred_fallthru
      _
    // Predicated region
    $region70: #{tpu_custom_call.1} parent=1 // pred_check
      _
    $region71: #{tpu_custom_call.1} parent=1 // pred_check_branch
      %183 = sbr.rel (0) target = $region73
    $region72: #{tpu_custom_call.1} parent=1 // pred_region
      %185 = vsyncadd [#allocation21], 0
      %s186 = sshll.u32 %s17, 4
      %s187 = int_to_ptr.hbm [resolvable:$true] %s186
      %s188 = sshll.u32 [#allocation22], 4
      %s189 = int_to_ptr.vmem [resolvable:$true] %s188
      %194 = dma.hbm_to_vmem [thread:$0]  %s187, 512, %s189, [#allocation21], 128, 128, 8
    $region73: #{tpu_custom_call.1} parent=1 // pred_fallthru
      _
    // Predicated region
    $region74: #{tpu_custom_call.1} parent=1 // pred_check
      _
    $region75: #{tpu_custom_call.1} parent=1 // pred_check_branch
      %196 = sbr.rel (0) target = $region77
    $region76: #{tpu_custom_call.1} parent=1 // pred_region
      _
    $region77: #{tpu_custom_call.1} parent=1 // pred_fallthru
      _
    // Predicated region
    $region78: #{tpu_custom_call.1} parent=1 // pred_check
      _
    $region79: #{tpu_custom_call.1} parent=1 // pred_check_branch
      %198 = sbr.rel (0) target = $region81
    $region80: #{tpu_custom_call.1} parent=1 // pred_region
      _
    $region81: #{tpu_custom_call.1} parent=1 // pred_fallthru
      _
    // Predicated region
    $region82: #{tpu_custom_call.1} parent=1 // pred_check
      _
    $region83: #{tpu_custom_call.1} parent=1 // pred_check_branch
      %200 = sbr.rel (0) target = $region85
    $region84: #{tpu_custom_call.1} parent=1 // pred_region
      _
    $region85: #{tpu_custom_call.1} parent=1 // pred_fallthru
      _
    // Predicated region
    $region86: #{tpu_custom_call.1} parent=1 // pred_check
      _
    $region87: #{tpu_custom_call.1} parent=1 // pred_check_branch
      %202 = sbr.rel (0) target = $region89
    $region88: #{tpu_custom_call.1} parent=1 // pred_region
      _
    $region89: #{tpu_custom_call.1} parent=1 // pred_fallthru
      _
    // Predicated region
    $region90: #{tpu_custom_call.1} parent=1 // pred_check
      _
    $region91: #{tpu_custom_call.1} parent=1 // pred_check_branch
      %204 = sbr.rel (0) target = $region93
    $region92: #{tpu_custom_call.1} parent=1 // pred_region
      _
    $region93: #{tpu_custom_call.1} parent=1 // pred_fallthru
      _
    // Predicated region
    $region94: #{tpu_custom_call.1} parent=1 // pred_check
      _
    $region95: #{tpu_custom_call.1} parent=1 // pred_check_branch
      %206 = sbr.rel (0) target = $region97
    $region96: #{tpu_custom_call.1} parent=1 // pred_region
      _
    $region97: #{tpu_custom_call.1} parent=1 // pred_fallthru
      _
    // Predicated region
    $region98: #{tpu_custom_call.1} parent=1 // pred_check
      _
    $region99: #{tpu_custom_call.1} parent=1 // pred_check_branch
      %208 = sbr.rel (0) target = $region101
    $region100: #{tpu_custom_call.1} parent=1 // pred_region
      _
    $region101: #{tpu_custom_call.1} parent=1 // pred_fallthru
      _
    // Predicated region
    $region102: #{tpu_custom_call.1} parent=1 // pred_check
      _
    $region103: #{tpu_custom_call.1} parent=1 // pred_check_branch
      %210 = sbr.rel (0) target = $region105
    $region104: #{tpu_custom_call.1} parent=1 // pred_region
      %212 = dma.done [#allocation7], 256
    $region105: #{tpu_custom_call.1} parent=1 // pred_fallthru
      _
    // Predicated region
    $region106: #{tpu_custom_call.1} parent=1 // pred_check
      _
    $region107: #{tpu_custom_call.1} parent=1 // pred_check_branch
      %214 = sbr.rel (0) target = $region109
    $region108: #{tpu_custom_call.1} parent=1 // pred_region
      %216 = dma.done [#allocation9], 512
    $region109: #{tpu_custom_call.1} parent=1 // pred_fallthru
      _
    // Predicated region
    $region110: #{tpu_custom_call.1} parent=1 // pred_check
      _
    $region111: #{tpu_custom_call.1} parent=1 // pred_check_branch
      %218 = sbr.rel (0) target = $region113
    $region112: #{tpu_custom_call.1} parent=1 // pred_region
      %220 = dma.done [#allocation9], 512
    $region113: #{tpu_custom_call.1} parent=1 // pred_fallthru
      _
    // Predicated region
    $region114: #{tpu_custom_call.1} parent=1 // pred_check
      _
    $region115: #{tpu_custom_call.1} parent=1 // pred_check_branch
      %222 = sbr.rel (0) target = $region117
    $region116: #{tpu_custom_call.1} parent=1 // pred_region
      %224 = dma.done [#allocation12], 512
    $region117: #{tpu_custom_call.1} parent=1 // pred_fallthru
      _
    // Predicated region
    $region118: #{tpu_custom_call.1} parent=1 // pred_check
      _
    $region119: #{tpu_custom_call.1} parent=1 // pred_check_branch
      %226 = sbr.rel (0) target = $region121
    $region120: #{tpu_custom_call.1} parent=1 // pred_region
      %228 = dma.done [#allocation12], 512
    $region121: #{tpu_custom_call.1} parent=1 // pred_fallthru
      _
    // Predicated region
    $region122: #{tpu_custom_call.1} parent=1 // pred_check
      _
    $region123: #{tpu_custom_call.1} parent=1 // pred_check_branch
      %230 = sbr.rel (0) target = $region125
    $region124: #{tpu_custom_call.1} parent=1 // pred_region
      %232 = dma.done [#allocation15], 16
    $region125: #{tpu_custom_call.1} parent=1 // pred_fallthru
      _
    // Predicated region
    $region126: #{tpu_custom_call.1} parent=1 // pred_check
      _
    $region127: #{tpu_custom_call.1} parent=1 // pred_check_branch
      %234 = sbr.rel (0) target = $region129
    $region128: #{tpu_custom_call.1} parent=1 // pred_region
      %236 = dma.done [#allocation15], 512
    $region129: #{tpu_custom_call.1} parent=1 // pred_fallthru
      _
    // Predicated region
    $region130: #{tpu_custom_call.1} parent=1 // pred_check
      _
    $region131: #{tpu_custom_call.1} parent=1 // pred_check_branch
      %238 = sbr.rel (0) target = $region133
    $region132: #{tpu_custom_call.1} parent=1 // pred_region
      %240 = dma.done [#allocation18], 512
    $region133: #{tpu_custom_call.1} parent=1 // pred_fallthru
      _
    // Predicated region
    $region134: #{tpu_custom_call.1} parent=1 // pred_check
      _
    $region135: #{tpu_custom_call.1} parent=1 // pred_check_branch
      %242 = sbr.rel (0) target = $region137
    $region136: #{tpu_custom_call.1} parent=1 // pred_region
      %244 = dma.done [#allocation18], 512
    $region137: #{tpu_custom_call.1} parent=1 // pred_fallthru
      _
    // Predicated region
    $region138: #{tpu_custom_call.1} parent=1 // pred_check
      _
    $region139: #{tpu_custom_call.1} parent=1 // pred_check_branch
      %246 = sbr.rel (0) target = $region141
    $region140: #{tpu_custom_call.1} parent=1 // pred_region
      %248 = dma.done [#allocation21], 1024
    $region141: #{tpu_custom_call.1} parent=1 // pred_fallthru
      _
    // Predicated region
    $region142: #{tpu_custom_call.1} parent=1 // pred_check
      _
    $region143: #{tpu_custom_call.1} parent=1 // pred_check_branch
      %250 = sbr.rel (0) target = $region145
    $region144: #{tpu_custom_call.1} parent=1 // pred_region
      %252 = dma.done [#allocation21], 512
    $region145: #{tpu_custom_call.1} parent=1 // pred_fallthru
      _
    %v253 = vld [vmem:[#allocation6] sm:$0xff]
    %v254 = vld [vmem:[#allocation6 + $0x8] sm:$0xff]
    %v255 = vld [vmem:[#allocation8] sm:$0xff]
    %v256 = vld [vmem:[#allocation8 + $0x8] sm:$0xff]
    %v257 = vld [vmem:[#allocation8 + $0x10] sm:$0xff]
    %v258 = vld [vmem:[#allocation8 + $0x18] sm:$0xff]
    %v259 = vld [vmem:[%s3] sm:$0x1]
    %v261 = vperm.slane %v259, 0
    %vm263 = vcmask 261120
    %v265 = vsel %vm263, %v253, 0
    %v268 = vsel %vm263, %v254, 0
    %270 = vmatpush.msra.mxu0 0.0
    %271 = vmatpush.msra.mxu0 0.0
    %272 = vmatpush.msra.mxu0 0.0
    %273 = vmatpush.msra.mxu0 0.0
    %274 = vmatpush.msra.mxu0 0.0
    %275 = vmatpush.msra.mxu0 0.0
    %276 = vmatpush.msra.mxu0 0.0
    %277 = vmatpush.msra.mxu0 0.0
    %278 = vmatpush.msra.mxu0 0.0
    %279 = vmatpush.msra.mxu0 0.0
    %280 = vmatpush.msra.mxu0 0.0
    %281 = vmatpush.msra.mxu0 0.0
    %282 = vmatpush.msra.mxu0 %v258
    %283 = vmatpush.msra.mxu0 %v257
    %284 = vmatpush.msra.mxu0 %v256
    %285 = vmatpush.msra.mxu0 %v255
    %286 = vmatmul.f32.gmra.mxu0 %v265
    %v287 = vpop.f32.mrf.mxu0
    %v288 = vadd.f32 %v261, %v287
    %289 = vmatmul.f32.gmra.mxu0 %v268
    %v290 = vpop.f32.mrf.mxu0
    %v291 = vadd.f32 %v261, %v290
    %292 = vdwg.mxu0
    %v293 = vld [vmem:[#allocation11] sm:$0xff]
    %v294 = vld [vmem:[#allocation11 + $0x8] sm:$0xff]
    %v295 = vld [vmem:[#allocation11 + $0x10] sm:$0xff]
    %v296 = vld [vmem:[#allocation11 + $0x18] sm:$0xff]
    %v297 = vld [vmem:[#allocation14] sm:$0x1]
    %v299 = vperm.slane %v297, 0
    %301 = vmatpush.msra.mxu0 0.0
    %302 = vmatpush.msra.mxu0 0.0
    %303 = vmatpush.msra.mxu0 0.0
    %304 = vmatpush.msra.mxu0 0.0
    %305 = vmatpush.msra.mxu0 0.0
    %306 = vmatpush.msra.mxu0 0.0
    %307 = vmatpush.msra.mxu0 0.0
    %308 = vmatpush.msra.mxu0 0.0
    %309 = vmatpush.msra.mxu0 0.0
    %310 = vmatpush.msra.mxu0 0.0
    %311 = vmatpush.msra.mxu0 0.0
    %312 = vmatpush.msra.mxu0 0.0
    %313 = vmatpush.msra.mxu0 %v296
    %314 = vmatpush.msra.mxu0 %v295
    %315 = vmatpush.msra.mxu0 %v294
    %316 = vmatpush.msra.mxu0 %v293
    %317 = vmatmul.f32.gmra.mxu0 %v265
    %v318 = vpop.f32.mrf.mxu0
    %v319 = vadd.f32 %v299, %v318
    %320 = vmatmul.f32.gmra.mxu0 %v268
    %v321 = vpop.f32.mrf.mxu0
    %v322 = vadd.f32 %v299, %v321
    %323 = vdwg.mxu0
    %v324 = vld [vmem:[#allocation10] sm:$0xff]
    %v325 = vld [vmem:[#allocation10 + $0x8] sm:$0xff]
    %v326 = vld [vmem:[#allocation10 + $0x10] sm:$0xff]
    %v327 = vld [vmem:[#allocation10 + $0x18] sm:$0xff]
    %v329 = vsel %vm263, 0.0, 0
    %331 = vmatpush.msra.mxu0 0.0
    %332 = vmatpush.msra.mxu0 0.0
    %333 = vmatpush.msra.mxu0 0.0
    %334 = vmatpush.msra.mxu0 0.0
    %335 = vmatpush.msra.mxu0 0.0
    %336 = vmatpush.msra.mxu0 0.0
    %337 = vmatpush.msra.mxu0 0.0
    %338 = vmatpush.msra.mxu0 0.0
    %339 = vmatpush.msra.mxu0 0.0
    %340 = vmatpush.msra.mxu0 0.0
    %341 = vmatpush.msra.mxu0 0.0
    %342 = vmatpush.msra.mxu0 0.0
    %343 = vmatpush.msra.mxu0 %v327
    %344 = vmatpush.msra.mxu0 %v326
    %345 = vmatpush.msra.mxu0 %v325
    %346 = vmatpush.msra.mxu0 %v324
    %347 = vmatmul.f32.gmra.mxu0 %v329
    %v348 = vpop.f32.mrf.mxu0
    %v349 = vadd.f32 0.0, %v348
    %350 = vdwg.mxu0
    %v351 = vadd.f32 %v288, %v349
    %v352 = vxor.u32 %v351, 2147483648
    %v353 = vmul.f32 %v352, 1.442695
    %v354 = vpow.pop %v353
    %v355 = vadd.f32 %v354, 1.0
    %v356 = vrcp.pop %v355
    %v357 = vmul.f32 %v355, %v356
    %v358 = vsub.f32 1.0, %v357
    %v359 = vmul.f32 %v356, %v358
    %v360 = vadd.f32 %v356, %v359
    %vm361 = vweird.f32 %v355
    %vm362 = vweird.f32 %v356
    %vm363 = vmor %vm361, %vm362
    %v364 = vsel %vm363, %v356, %v360
    %v365 = vand.u32 2147483647, %v355
    %vm366 = vcmp.eq.f32.partialorder %v365, 8.507059e+37
    %v367 = vand.u32 %v355, 2147483648
    %v368 = vor.u32 1.1754944e-38, %v367
    %v369 = vsel %vm366, %v368, %v364
    %v370 = vmul.f32 1.0, %v369
    %v371 = vtanh.pop %v351
    %v372 = vmul.f32 %v370, 0.0
    %374 = vrot.lane.b32.xlu0 %v371, 64
    %v375 = vpop.permute.xlu0 %374
    %v377 = vmul.f32 %v370, %v375
    %379 = vrot.lane.b32.xlu0 %v377, 32
    %v380 = vpop.permute.xlu0 %379
    %v382 = vadd.f32 %v372, %v380
    %v383 = vtanh.pop %v382
    %385 = vrot.lane.b32.xlu0 %v383, 64
    %v386 = vpop.permute.xlu0 %385
    %v388 = vmul.f32 %v370, %v386
    %390 = vrot.lane.b32.xlu0 %v388, 32
    %v391 = vpop.permute.xlu0 %390
    %vm393 = vcmask 254976
    %394 = vst.msk [vmem:[#allocation2] sm:$0x3] %vm393, %v391
    %v395 = vld [vmem:[#allocation13] sm:$0xff]
    %v396 = vld [vmem:[#allocation13 + $0x8] sm:$0xff]
    %v397 = vld [vmem:[#allocation13 + $0x10] sm:$0xff]
    %v398 = vld [vmem:[#allocation13 + $0x18] sm:$0xff]
    %399 = vmatpush.msra.mxu0 0.0
    %400 = vmatpush.msra.mxu0 0.0
    %401 = vmatpush.msra.mxu0 0.0
    %402 = vmatpush.msra.mxu0 0.0
    %403 = vmatpush.msra.mxu0 0.0
    %404 = vmatpush.msra.mxu0 0.0
    %405 = vmatpush.msra.mxu0 0.0
    %406 = vmatpush.msra.mxu0 0.0
    %407 = vmatpush.msra.mxu0 0.0
    %408 = vmatpush.msra.mxu0 0.0
    %409 = vmatpush.msra.mxu0 0.0
    %410 = vmatpush.msra.mxu0 0.0
    %411 = vmatpush.msra.mxu0 %v398
    %412 = vmatpush.msra.mxu0 %v397
    %413 = vmatpush.msra.mxu0 %v396
    %414 = vmatpush.msra.mxu0 %v395
    %415 = vmatmul.f32.gmra.mxu0 %v329
    %v416 = vpop.f32.mrf.mxu0
    %v417 = vadd.f32 0.0, %v416
    %418 = vdwg.mxu0
    %v420 = vrot.slane %v417, 2
    %v422 = vadd.f32 %v322, %v420
    %v423 = vxor.u32 %v422, 2147483648
    %v424 = vmul.f32 %v423, 1.442695
    %v425 = vpow.pop %v424
    %v426 = vadd.f32 %v425, 1.0
    %v427 = vrcp.pop %v426
    %v428 = vmul.f32 %v426, %v427
    %v429 = vsub.f32 1.0, %v428
    %v430 = vmul.f32 %v427, %v429
    %v431 = vadd.f32 %v427, %v430
    %vm432 = vweird.f32 %v426
    %vm433 = vweird.f32 %v427
    %vm434 = vmor %vm432, %vm433
    %v435 = vsel %vm434, %v427, %v431
    %v436 = vand.u32 2147483647, %v426
    %vm437 = vcmp.eq.f32.partialorder %v436, 8.507059e+37
    %v438 = vand.u32 %v426, 2147483648
    %v439 = vor.u32 1.1754944e-38, %v438
    %v440 = vsel %vm437, %v439, %v435
    %v441 = vmul.f32 1.0, %v440
    %v442 = vtanh.pop %v422
    %v443 = vmul.f32 %v441, 0.0
    %445 = vrot.lane.b32.xlu0 %v442, 64
    %v446 = vpop.permute.xlu0 %445
    %v448 = vmul.f32 %v441, %v446
    %450 = vrot.lane.b32.xlu0 %v448, 32
    %v451 = vpop.permute.xlu0 %450
    %v453 = vadd.f32 %v443, %v451
    %v454 = vtanh.pop %v453
    %456 = vrot.lane.b32.xlu0 %v454, 64
    %v457 = vpop.permute.xlu0 %456
    %v459 = vmul.f32 %v441, %v457
    %461 = vrot.lane.b32.xlu0 %v459, 64
    %v462 = vpop.permute.xlu0 %461
    %vm464 = vcmask 523526
    %465 = vst.msk [vmem:[#allocation2 + $0x8] sm:$0xc0] %vm464, %v462
    %v466 = vld [vmem:[#allocation10] sm:$0xff]
    %v467 = vld [vmem:[#allocation10 + $0x8] sm:$0xff]
    %v468 = vld [vmem:[#allocation10 + $0x10] sm:$0xff]
    %v469 = vld [vmem:[#allocation10 + $0x18] sm:$0xff]
    %v470 = vsel %vm263, %v391, 0
    %472 = vmatpush.msra.mxu0 0.0
    %473 = vmatpush.msra.mxu0 0.0
    %474 = vmatpush.msra.mxu0 0.0
    %475 = vmatpush.msra.mxu0 0.0
    %476 = vmatpush.msra.mxu0 0.0
    %477 = vmatpush.msra.mxu0 0.0
    %478 = vmatpush.msra.mxu0 0.0
    %479 = vmatpush.msra.mxu0 0.0
    %480 = vmatpush.msra.mxu0 0.0
    %481 = vmatpush.msra.mxu0 0.0
    %482 = vmatpush.msra.mxu0 0.0
    %483 = vmatpush.msra.mxu0 0.0
    %484 = vmatpush.msra.mxu0 %v469
    %485 = vmatpush.msra.mxu0 %v468
    %486 = vmatpush.msra.mxu0 %v467
    %487 = vmatpush.msra.mxu0 %v466
    %488 = vmatmul.f32.gmra.mxu0 %v470
    %v489 = vpop.f32.mrf.mxu0
    %v490 = vadd.f32 0.0, %v489
    %491 = vdwg.mxu0
    %v493 = vrot.slane %v490, 6
    %v495 = vadd.f32 %v288, %v493
    %v496 = vxor.u32 %v495, 2147483648
    %v497 = vmul.f32 %v496, 1.442695
    %v498 = vpow.pop %v497
    %v499 = vadd.f32 %v498, 1.0
    %v500 = vrcp.pop %v499
    %v501 = vmul.f32 %v499, %v500
    %v502 = vsub.f32 1.0, %v501
    %v503 = vmul.f32 %v500, %v502
    %v504 = vadd.f32 %v500, %v503
    %vm505 = vweird.f32 %v499
    %vm506 = vweird.f32 %v500
    %vm507 = vmor %vm505, %vm506
    %v508 = vsel %vm507, %v500, %v504
    %v509 = vand.u32 2147483647, %v499
    %vm510 = vcmp.eq.f32.partialorder %v509, 8.507059e+37
    %v511 = vand.u32 %v499, 2147483648
    %v512 = vor.u32 1.1754944e-38, %v511
    %v513 = vsel %vm510, %v512, %v508
    %v514 = vmul.f32 1.0, %v513
    %v515 = vtanh.pop %v495
    %v517 = vrot.slane %v382, 6
    %v519 = vmul.f32 %v514, %v517
    %521 = vrot.lane.b32.xlu0 %v515, 64
    %v522 = vpop.permute.xlu0 %521
    %v524 = vmul.f32 %v514, %v522
    %526 = vrot.lane.b32.xlu0 %v524, 32
    %v527 = vpop.permute.xlu0 %526
    %v529 = vadd.f32 %v519, %v527
    %v530 = vtanh.pop %v529
    %532 = vrot.lane.b32.xlu0 %v530, 64
    %v533 = vpop.permute.xlu0 %532
    %v535 = vmul.f32 %v514, %v533
    %537 = vrot.lane.b32.xlu0 %v535, 32
    %v538 = vpop.permute.xlu0 %537
    %vm540 = vcmask 257026
    %541 = vst.msk [vmem:[#allocation2] sm:$0xc] %vm540, %v538
    %v542 = vld [vmem:[#allocation13] sm:$0xff]
    %v543 = vld [vmem:[#allocation13 + $0x8] sm:$0xff]
    %v544 = vld [vmem:[#allocation13 + $0x10] sm:$0xff]
    %v545 = vld [vmem:[#allocation13 + $0x18] sm:$0xff]
    %v546 = vrot.slane %v459, 6
    %547 = vrot.lane.b32.xlu0 %v546, 32
    %v548 = vpop.permute.xlu0 %547
    %v549 = vsel %vm263, %v548, 0
    %551 = vmatpush.msra.mxu0 0.0
    %552 = vmatpush.msra.mxu0 0.0
    %553 = vmatpush.msra.mxu0 0.0
    %554 = vmatpush.msra.mxu0 0.0
    %555 = vmatpush.msra.mxu0 0.0
    %556 = vmatpush.msra.mxu0 0.0
    %557 = vmatpush.msra.mxu0 0.0
    %558 = vmatpush.msra.mxu0 0.0
    %559 = vmatpush.msra.mxu0 0.0
    %560 = vmatpush.msra.mxu0 0.0
    %561 = vmatpush.msra.mxu0 0.0
    %562 = vmatpush.msra.mxu0 0.0
    %563 = vmatpush.msra.mxu0 %v545
    %564 = vmatpush.msra.mxu0 %v544
    %565 = vmatpush.msra.mxu0 %v543
    %566 = vmatpush.msra.mxu0 %v542
    %567 = vmatmul.f32.gmra.mxu0 %v549
    %v568 = vpop.f32.mrf.mxu0
    %v569 = vadd.f32 0.0, %v568
    %570 = vdwg.mxu0
    %v572 = vrot.slane %v569, 4
    %v574 = vadd.f32 %v322, %v572
    %v575 = vxor.u32 %v574, 2147483648
    %v576 = vmul.f32 %v575, 1.442695
    %v577 = vpow.pop %v576
    %v578 = vadd.f32 %v577, 1.0
    %v579 = vrcp.pop %v578
    %v580 = vmul.f32 %v578, %v579
    %v581 = vsub.f32 1.0, %v580
    %v582 = vmul.f32 %v579, %v581
    %v583 = vadd.f32 %v579, %v582
    %vm584 = vweird.f32 %v578
    %vm585 = vweird.f32 %v579
    %vm586 = vmor %vm584, %vm585
    %v587 = vsel %vm586, %v579, %v583
    %v588 = vand.u32 2147483647, %v578
    %vm589 = vcmp.eq.f32.partialorder %v588, 8.507059e+37
    %v590 = vand.u32 %v578, 2147483648
    %v591 = vor.u32 1.1754944e-38, %v590
    %v592 = vsel %vm589, %v591, %v587
    %v593 = vmul.f32 1.0, %v592
    %v594 = vtanh.pop %v574
    %v596 = vrot.slane %v453, 2
    %v598 = vmul.f32 %v593, %v596
    %600 = vrot.lane.b32.xlu0 %v594, 64
    %v601 = vpop.permute.xlu0 %600
    %v603 = vmul.f32 %v593, %v601
    %605 = vrot.lane.b32.xlu0 %v603, 32
    %v606 = vpop.permute.xlu0 %605
    %v608 = vadd.f32 %v598, %v606
    %v609 = vtanh.pop %v608
    %611 = vrot.lane.b32.xlu0 %v609, 64
    %v612 = vpop.permute.xlu0 %611
    %v614 = vmul.f32 %v593, %v612
    %616 = vrot.lane.b32.xlu0 %v614, 64
    %v617 = vpop.permute.xlu0 %616
    %vm619 = vcmask 521476
    %620 = vst.msk [vmem:[#allocation2 + $0x8] sm:$0x30] %vm619, %v617
    %v621 = vld [vmem:[#allocation10] sm:$0xff]
    %v622 = vld [vmem:[#allocation10 + $0x8] sm:$0xff]
    %v623 = vld [vmem:[#allocation10 + $0x10] sm:$0xff]
    %v624 = vld [vmem:[#allocation10 + $0x18] sm:$0xff]
    %v625 = vrot.slane %v535, 2
    %626 = vrot.lane.b32.xlu0 %v625, 32
    %v627 = vpop.permute.xlu0 %626
    %v628 = vsel %vm263, %v627, 0
    %630 = vmatpush.msra.mxu0 0.0
    %631 = vmatpush.msra.mxu0 0.0
    %632 = vmatpush.msra.mxu0 0.0
    %633 = vmatpush.msra.mxu0 0.0
    %634 = vmatpush.msra.mxu0 0.0
    %635 = vmatpush.msra.mxu0 0.0
    %636 = vmatpush.msra.mxu0 0.0
    %637 = vmatpush.msra.mxu0 0.0
    %638 = vmatpush.msra.mxu0 0.0
    %639 = vmatpush.msra.mxu0 0.0
    %640 = vmatpush.msra.mxu0 0.0
    %641 = vmatpush.msra.mxu0 0.0
    %642 = vmatpush.msra.mxu0 %v624
    %643 = vmatpush.msra.mxu0 %v623
    %644 = vmatpush.msra.mxu0 %v622
    %645 = vmatpush.msra.mxu0 %v621
    %646 = vmatmul.f32.gmra.mxu0 %v628
    %v647 = vpop.f32.mrf.mxu0
    %v648 = vadd.f32 0.0, %v647
    %649 = vdwg.mxu0
    %v651 = vrot.slane %v648, 4
    %v653 = vadd.f32 %v288, %v651
    %v654 = vxor.u32 %v653, 2147483648
    %v655 = vmul.f32 %v654, 1.442695
    %v656 = vpow.pop %v655
    %v657 = vadd.f32 %v656, 1.0
    %v658 = vrcp.pop %v657
    %v659 = vmul.f32 %v657, %v658
    %v660 = vsub.f32 1.0, %v659
    %v661 = vmul.f32 %v658, %v660
    %v662 = vadd.f32 %v658, %v661
    %vm663 = vweird.f32 %v657
    %vm664 = vweird.f32 %v658
    %vm665 = vmor %vm663, %vm664
    %v666 = vsel %vm665, %v658, %v662
    %v667 = vand.u32 2147483647, %v657
    %vm668 = vcmp.eq.f32.partialorder %v667, 8.507059e+37
    %v669 = vand.u32 %v657, 2147483648
    %v670 = vor.u32 1.1754944e-38, %v669
    %v671 = vsel %vm668, %v670, %v666
    %v672 = vmul.f32 1.0, %v671
    %v673 = vtanh.pop %v653
    %v675 = vrot.slane %v529, 6
    %v677 = vmul.f32 %v672, %v675
    %679 = vrot.lane.b32.xlu0 %v673, 64
    %v680 = vpop.permute.xlu0 %679
    %v682 = vmul.f32 %v672, %v680
    %684 = vrot.lane.b32.xlu0 %v682, 32
    %v685 = vpop.permute.xlu0 %684
    %v687 = vadd.f32 %v677, %v685
    %v688 = vtanh.pop %v687
    %690 = vrot.lane.b32.xlu0 %v688, 64
    %v691 = vpop.permute.xlu0 %690
    %v693 = vmul.f32 %v672, %v691
    %695 = vrot.lane.b32.xlu0 %v693, 32
    %v696 = vpop.permute.xlu0 %695
    %vm698 = vcmask 259076
    %699 = vst.msk [vmem:[#allocation2] sm:$0x30] %vm698, %v696
    %v700 = vld [vmem:[#allocation13] sm:$0xff]
    %v701 = vld [vmem:[#allocation13 + $0x8] sm:$0xff]
    %v702 = vld [vmem:[#allocation13 + $0x10] sm:$0xff]
    %v703 = vld [vmem:[#allocation13 + $0x18] sm:$0xff]
    %v704 = vrot.slane %v614, 4
    %705 = vrot.lane.b32.xlu0 %v704, 32
    %v706 = vpop.permute.xlu0 %705
    %v707 = vsel %vm263, %v706, 0
    %709 = vmatpush.msra.mxu0 0.0
    %710 = vmatpush.msra.mxu0 0.0
    %711 = vmatpush.msra.mxu0 0.0
    %712 = vmatpush.msra.mxu0 0.0
    %713 = vmatpush.msra.mxu0 0.0
    %714 = vmatpush.msra.mxu0 0.0
    %715 = vmatpush.msra.mxu0 0.0
    %716 = vmatpush.msra.mxu0 0.0
    %717 = vmatpush.msra.mxu0 0.0
    %718 = vmatpush.msra.mxu0 0.0
    %719 = vmatpush.msra.mxu0 0.0
    %720 = vmatpush.msra.mxu0 0.0
    %721 = vmatpush.msra.mxu0 %v703
    %722 = vmatpush.msra.mxu0 %v702
    %723 = vmatpush.msra.mxu0 %v701
    %724 = vmatpush.msra.mxu0 %v700
    %725 = vmatmul.f32.gmra.mxu0 %v707
    %v726 = vpop.f32.mrf.mxu0
    %v727 = vadd.f32 0.0, %v726
    %728 = vdwg.mxu0
    %v730 = vrot.slane %v727, 6
    %v732 = vadd.f32 %v322, %v730
    %v733 = vxor.u32 %v732, 2147483648
    %v734 = vmul.f32 %v733, 1.442695
    %v735 = vpow.pop %v734
    %v736 = vadd.f32 %v735, 1.0
    %v737 = vrcp.pop %v736
    %v738 = vmul.f32 %v736, %v737
    %v739 = vsub.f32 1.0, %v738
    %v740 = vmul.f32 %v737, %v739
    %v741 = vadd.f32 %v737, %v740
    %vm742 = vweird.f32 %v736
    %vm743 = vweird.f32 %v737
    %vm744 = vmor %vm742, %vm743
    %v745 = vsel %vm744, %v737, %v741
    %v746 = vand.u32 2147483647, %v736
    %vm747 = vcmp.eq.f32.partialorder %v746, 8.507059e+37
    %v748 = vand.u32 %v736, 2147483648
    %v749 = vor.u32 1.1754944e-38, %v748
    %v750 = vsel %vm747, %v749, %v745
    %v751 = vmul.f32 1.0, %v750
    %v752 = vtanh.pop %v732
    %v754 = vrot.slane %v608, 2
    %v756 = vmul.f32 %v751, %v754
    %758 = vrot.lane.b32.xlu0 %v752, 64
    %v759 = vpop.permute.xlu0 %758
    %v761 = vmul.f32 %v751, %v759
    %763 = vrot.lane.b32.xlu0 %v761, 32
    %v764 = vpop.permute.xlu0 %763
    %v766 = vadd.f32 %v756, %v764
    %v767 = vtanh.pop %v766
    %769 = vrot.lane.b32.xlu0 %v767, 64
    %v770 = vpop.permute.xlu0 %769
    %v772 = vmul.f32 %v751, %v770
    %774 = vrot.lane.b32.xlu0 %v772, 64
    %v775 = vpop.permute.xlu0 %774
    %vm777 = vcmask 519426
    %778 = vst.msk [vmem:[#allocation2 + $0x8] sm:$0xc] %vm777, %v775
    %v779 = vld [vmem:[#allocation10] sm:$0xff]
    %v780 = vld [vmem:[#allocation10 + $0x8] sm:$0xff]
    %v781 = vld [vmem:[#allocation10 + $0x10] sm:$0xff]
    %v782 = vld [vmem:[#allocation10 + $0x18] sm:$0xff]
    %v783 = vrot.slane %v693, 4
    %784 = vrot.lane.b32.xlu0 %v783, 32
    %v785 = vpop.permute.xlu0 %784
    %v786 = vsel %vm263, %v785, 0
    %788 = vmatpush.msra.mxu0 0.0
    %789 = vmatpush.msra.mxu0 0.0
    %790 = vmatpush.msra.mxu0 0.0
    %791 = vmatpush.msra.mxu0 0.0
    %792 = vmatpush.msra.mxu0 0.0
    %793 = vmatpush.msra.mxu0 0.0
    %794 = vmatpush.msra.mxu0 0.0
    %795 = vmatpush.msra.mxu0 0.0
    %796 = vmatpush.msra.mxu0 0.0
    %797 = vmatpush.msra.mxu0 0.0
    %798 = vmatpush.msra.mxu0 0.0
    %799 = vmatpush.msra.mxu0 0.0
    %800 = vmatpush.msra.mxu0 %v782
    %801 = vmatpush.msra.mxu0 %v781
    %802 = vmatpush.msra.mxu0 %v780
    %803 = vmatpush.msra.mxu0 %v779
    %804 = vmatmul.f32.gmra.mxu0 %v786
    %v805 = vpop.f32.mrf.mxu0
    %v806 = vadd.f32 0.0, %v805
    %807 = vdwg.mxu0
    %v809 = vrot.slane %v806, 2
    %v811 = vadd.f32 %v288, %v809
    %v812 = vxor.u32 %v811, 2147483648
    %v813 = vmul.f32 %v812, 1.442695
    %v814 = vpow.pop %v813
    %v815 = vadd.f32 %v814, 1.0
    %v816 = vrcp.pop %v815
    %v817 = vmul.f32 %v815, %v816
    %v818 = vsub.f32 1.0, %v817
    %v819 = vmul.f32 %v816, %v818
    %v820 = vadd.f32 %v816, %v819
    %vm821 = vweird.f32 %v815
    %vm822 = vweird.f32 %v816
    %vm823 = vmor %vm821, %vm822
    %v824 = vsel %vm823, %v816, %v820
    %v825 = vand.u32 2147483647, %v815
    %vm826 = vcmp.eq.f32.partialorder %v825, 8.507059e+37
    %v827 = vand.u32 %v815, 2147483648
    %v828 = vor.u32 1.1754944e-38, %v827
    %v829 = vsel %vm826, %v828, %v824
    %v830 = vmul.f32 1.0, %v829
    %v831 = vtanh.pop %v811
    %v833 = vrot.slane %v687, 6
    %v835 = vmul.f32 %v830, %v833
    %837 = vrot.lane.b32.xlu0 %v831, 64
    %v838 = vpop.permute.xlu0 %837
    %v840 = vmul.f32 %v830, %v838
    %842 = vrot.lane.b32.xlu0 %v840, 32
    %v843 = vpop.permute.xlu0 %842
    %v845 = vadd.f32 %v835, %v843
    %v846 = vtanh.pop %v845
    %848 = vrot.lane.b32.xlu0 %v846, 64
    %v849 = vpop.permute.xlu0 %848
    %v851 = vmul.f32 %v830, %v849
    %853 = vrot.lane.b32.xlu0 %v851, 32
    %v854 = vpop.permute.xlu0 %853
    %vm856 = vcmask 261126
    %857 = vst.msk [vmem:[#allocation2] sm:$0xc0] %vm856, %v854
    %v858 = vld [vmem:[#allocation13] sm:$0xff]
    %v859 = vld [vmem:[#allocation13 + $0x8] sm:$0xff]
    %v860 = vld [vmem:[#allocation13 + $0x10] sm:$0xff]
    %v861 = vld [vmem:[#allocation13 + $0x18] sm:$0xff]
    %v862 = vrot.slane %v772, 2
    %863 = vrot.lane.b32.xlu0 %v862, 32
    %v864 = vpop.permute.xlu0 %863
    %v865 = vsel %vm263, %v864, 0
    %867 = vmatpush.msra.mxu0 0.0
    %868 = vmatpush.msra.mxu0 0.0
    %869 = vmatpush.msra.mxu0 0.0
    %870 = vmatpush.msra.mxu0 0.0
    %871 = vmatpush.msra.mxu0 0.0
    %872 = vmatpush.msra.mxu0 0.0
    %873 = vmatpush.msra.mxu0 0.0
    %874 = vmatpush.msra.mxu0 0.0
    %875 = vmatpush.msra.mxu0 0.0
    %876 = vmatpush.msra.mxu0 0.0
    %877 = vmatpush.msra.mxu0 0.0
    %878 = vmatpush.msra.mxu0 0.0
    %879 = vmatpush.msra.mxu0 %v861
    %880 = vmatpush.msra.mxu0 %v860
    %881 = vmatpush.msra.mxu0 %v859
    %882 = vmatpush.msra.mxu0 %v858
    %883 = vmatmul.f32.gmra.mxu0 %v865
    %v884 = vpop.f32.mrf.mxu0
    %v885 = vadd.f32 0.0, %v884
    %886 = vdwg.mxu0
    %v887 = vadd.f32 %v322, %v885
    %v888 = vxor.u32 %v887, 2147483648
    %v889 = vmul.f32 %v888, 1.442695
    %v890 = vpow.pop %v889
    %v891 = vadd.f32 %v890, 1.0
    %v892 = vrcp.pop %v891
    %v893 = vmul.f32 %v891, %v892
    %v894 = vsub.f32 1.0, %v893
    %v895 = vmul.f32 %v892, %v894
    %v896 = vadd.f32 %v892, %v895
    %vm897 = vweird.f32 %v891
    %vm898 = vweird.f32 %v892
    %vm899 = vmor %vm897, %vm898
    %v900 = vsel %vm899, %v892, %v896
    %v901 = vand.u32 2147483647, %v891
    %vm902 = vcmp.eq.f32.partialorder %v901, 8.507059e+37
    %v903 = vand.u32 %v891, 2147483648
    %v904 = vor.u32 1.1754944e-38, %v903
    %v905 = vsel %vm902, %v904, %v900
    %v906 = vmul.f32 1.0, %v905
    %v907 = vtanh.pop %v887
    %v909 = vrot.slane %v766, 2
    %v911 = vmul.f32 %v906, %v909
    %913 = vrot.lane.b32.xlu0 %v907, 64
    %v914 = vpop.permute.xlu0 %913
    %v916 = vmul.f32 %v906, %v914
    %918 = vrot.lane.b32.xlu0 %v916, 32
    %v919 = vpop.permute.xlu0 %918
    %v921 = vadd.f32 %v911, %v919
    %v922 = vtanh.pop %v921
    %924 = vrot.lane.b32.xlu0 %v922, 64
    %v925 = vpop.permute.xlu0 %924
    %v927 = vmul.f32 %v906, %v925
    %929 = vrot.lane.b32.xlu0 %v927, 64
    %v930 = vpop.permute.xlu0 %929
    %vm932 = vcmask 517376
    %933 = vst.msk [vmem:[#allocation2 + $0x8] sm:$0x3] %vm932, %v930
    %v934 = vld [vmem:[#allocation10] sm:$0xff]
    %v935 = vld [vmem:[#allocation10 + $0x8] sm:$0xff]
    %v936 = vld [vmem:[#allocation10 + $0x10] sm:$0xff]
    %v937 = vld [vmem:[#allocation10 + $0x18] sm:$0xff]
    %v938 = vrot.slane %v851, 6
    %939 = vrot.lane.b32.xlu0 %v938, 32
    %v940 = vpop.permute.xlu0 %939
    %v941 = vsel %vm263, %v940, 0
    %943 = vmatpush.msra.mxu0 0.0
    %944 = vmatpush.msra.mxu0 0.0
    %945 = vmatpush.msra.mxu0 0.0
    %946 = vmatpush.msra.mxu0 0.0
    %947 = vmatpush.msra.mxu0 0.0
    %948 = vmatpush.msra.mxu0 0.0
    %949 = vmatpush.msra.mxu0 0.0
    %950 = vmatpush.msra.mxu0 0.0
    %951 = vmatpush.msra.mxu0 0.0
    %952 = vmatpush.msra.mxu0 0.0
    %953 = vmatpush.msra.mxu0 0.0
    %954 = vmatpush.msra.mxu0 0.0
    %955 = vmatpush.msra.mxu0 %v937
    %956 = vmatpush.msra.mxu0 %v936
    %957 = vmatpush.msra.mxu0 %v935
    %958 = vmatpush.msra.mxu0 %v934
    %959 = vmatmul.f32.gmra.mxu0 %v941
    %v960 = vpop.f32.mrf.mxu0
    %v961 = vadd.f32 0.0, %v960
    %962 = vdwg.mxu0
    %v963 = vadd.f32 %v291, %v961
    %v964 = vxor.u32 %v963, 2147483648
    %v965 = vmul.f32 %v964, 1.442695
    %v966 = vpow.pop %v965
    %v967 = vadd.f32 %v966, 1.0
    %v968 = vrcp.pop %v967
    %v969 = vmul.f32 %v967, %v968
    %v970 = vsub.f32 1.0, %v969
    %v971 = vmul.f32 %v968, %v970
    %v972 = vadd.f32 %v968, %v971
    %vm973 = vweird.f32 %v967
    %vm974 = vweird.f32 %v968
    %vm975 = vmor %vm973, %vm974
    %v976 = vsel %vm975, %v968, %v972
    %v977 = vand.u32 2147483647, %v967
    %vm978 = vcmp.eq.f32.partialorder %v977, 8.507059e+37
    %v979 = vand.u32 %v967, 2147483648
    %v980 = vor.u32 1.1754944e-38, %v979
    %v981 = vsel %vm978, %v980, %v976
    %v982 = vmul.f32 1.0, %v981
    %v983 = vtanh.pop %v963
    %v985 = vrot.slane %v845, 6
    %v987 = vmul.f32 %v982, %v985
    %989 = vrot.lane.b32.xlu0 %v983, 64
    %v990 = vpop.permute.xlu0 %989
    %v992 = vmul.f32 %v982, %v990
    %994 = vrot.lane.b32.xlu0 %v992, 32
    %v995 = vpop.permute.xlu0 %994
    %v997 = vadd.f32 %v987, %v995
    %v998 = vtanh.pop %v997
    %1000 = vrot.lane.b32.xlu0 %v998, 64
    %v1001 = vpop.permute.xlu0 %1000
    %v1003 = vmul.f32 %v982, %v1001
    %1005 = vrot.lane.b32.xlu0 %v1003, 32
    %v1006 = vpop.permute.xlu0 %1005
    %1008 = vst.msk [vmem:[#allocation2 + $0x8] sm:$0x3] %vm393, %v1006
    %v1009 = vld [vmem:[#allocation13] sm:$0xff]
    %v1010 = vld [vmem:[#allocation13 + $0x8] sm:$0xff]
    %v1011 = vld [vmem:[#allocation13 + $0x10] sm:$0xff]
    %v1012 = vld [vmem:[#allocation13 + $0x18] sm:$0xff]
    %1013 = vrot.lane.b32.xlu0 %v927, 32
    %v1014 = vpop.permute.xlu0 %1013
    %v1015 = vsel %vm263, %v1014, 0
    %1017 = vmatpush.msra.mxu0 0.0
    %1018 = vmatpush.msra.mxu0 0.0
    %1019 = vmatpush.msra.mxu0 0.0
    %1020 = vmatpush.msra.mxu0 0.0
    %1021 = vmatpush.msra.mxu0 0.0
    %1022 = vmatpush.msra.mxu0 0.0
    %1023 = vmatpush.msra.mxu0 0.0
    %1024 = vmatpush.msra.mxu0 0.0
    %1025 = vmatpush.msra.mxu0 0.0
    %1026 = vmatpush.msra.mxu0 0.0
    %1027 = vmatpush.msra.mxu0 0.0
    %1028 = vmatpush.msra.mxu0 0.0
    %1029 = vmatpush.msra.mxu0 %v1012
    %1030 = vmatpush.msra.mxu0 %v1011
    %1031 = vmatpush.msra.mxu0 %v1010
    %1032 = vmatpush.msra.mxu0 %v1009
    %1033 = vmatmul.f32.gmra.mxu0 %v1015
    %v1034 = vpop.f32.mrf.mxu0
    %v1035 = vadd.f32 0.0, %v1034
    %1036 = vdwg.mxu0
    %v1038 = vrot.slane %v1035, 2
    %v1040 = vadd.f32 %v319, %v1038
    %v1041 = vxor.u32 %v1040, 2147483648
    %v1042 = vmul.f32 %v1041, 1.442695
    %v1043 = vpow.pop %v1042
    %v1044 = vadd.f32 %v1043, 1.0
    %v1045 = vrcp.pop %v1044
    %v1046 = vmul.f32 %v1044, %v1045
    %v1047 = vsub.f32 1.0, %v1046
    %v1048 = vmul.f32 %v1045, %v1047
    %v1049 = vadd.f32 %v1045, %v1048
    %vm1050 = vweird.f32 %v1044
    %vm1051 = vweird.f32 %v1045
    %vm1052 = vmor %vm1050, %vm1051
    %v1053 = vsel %vm1052, %v1045, %v1049
    %v1054 = vand.u32 2147483647, %v1044
    %vm1055 = vcmp.eq.f32.partialorder %v1054, 8.507059e+37
    %v1056 = vand.u32 %v1044, 2147483648
    %v1057 = vor.u32 1.1754944e-38, %v1056
    %v1058 = vsel %vm1055, %v1057, %v1053
    %v1059 = vmul.f32 1.0, %v1058
    %v1060 = vtanh.pop %v1040
    %v1062 = vrot.slane %v921, 2
    %v1064 = vmul.f32 %v1059, %v1062
    %1066 = vrot.lane.b32.xlu0 %v1060, 64
    %v1067 = vpop.permute.xlu0 %1066
    %v1069 = vmul.f32 %v1059, %v1067
    %1071 = vrot.lane.b32.xlu0 %v1069, 32
    %v1072 = vpop.permute.xlu0 %1071
    %v1074 = vadd.f32 %v1064, %v1072
    %v1075 = vtanh.pop %v1074
    %1077 = vrot.lane.b32.xlu0 %v1075, 64
    %v1078 = vpop.permute.xlu0 %1077
    %v1080 = vmul.f32 %v1059, %v1078
    %1082 = vrot.lane.b32.xlu0 %v1080, 64
    %v1083 = vpop.permute.xlu0 %1082
    %1085 = vst.msk [vmem:[#allocation2] sm:$0xc0] %vm464, %v1083
    %v1086 = vld [vmem:[#allocation10] sm:$0xff]
    %v1087 = vld [vmem:[#allocation10 + $0x8] sm:$0xff]
    %v1088 = vld [vmem:[#allocation10 + $0x10] sm:$0xff]
    %v1089 = vld [vmem:[#allocation10 + $0x18] sm:$0xff]
    %v1090 = vsel %vm263, %v1006, 0
    %1092 = vmatpush.msra.mxu0 0.0
    %1093 = vmatpush.msra.mxu0 0.0
    %1094 = vmatpush.msra.mxu0 0.0
    %1095 = vmatpush.msra.mxu0 0.0
    %1096 = vmatpush.msra.mxu0 0.0
    %1097 = vmatpush.msra.mxu0 0.0
    %1098 = vmatpush.msra.mxu0 0.0
    %1099 = vmatpush.msra.mxu0 0.0
    %1100 = vmatpush.msra.mxu0 0.0
    %1101 = vmatpush.msra.mxu0 0.0
    %1102 = vmatpush.msra.mxu0 0.0
    %1103 = vmatpush.msra.mxu0 0.0
    %1104 = vmatpush.msra.mxu0 %v1089
    %1105 = vmatpush.msra.mxu0 %v1088
    %1106 = vmatpush.msra.mxu0 %v1087
    %1107 = vmatpush.msra.mxu0 %v1086
    %1108 = vmatmul.f32.gmra.mxu0 %v1090
    %v1109 = vpop.f32.mrf.mxu0
    %v1110 = vadd.f32 0.0, %v1109
    %1111 = vdwg.mxu0
    %v1113 = vrot.slane %v1110, 6
    %v1115 = vadd.f32 %v291, %v1113
    %v1116 = vxor.u32 %v1115, 2147483648
    %v1117 = vmul.f32 %v1116, 1.442695
    %v1118 = vpow.pop %v1117
    %v1119 = vadd.f32 %v1118, 1.0
    %v1120 = vrcp.pop %v1119
    %v1121 = vmul.f32 %v1119, %v1120
    %v1122 = vsub.f32 1.0, %v1121
    %v1123 = vmul.f32 %v1120, %v1122
    %v1124 = vadd.f32 %v1120, %v1123
    %vm1125 = vweird.f32 %v1119
    %vm1126 = vweird.f32 %v1120
    %vm1127 = vmor %vm1125, %vm1126
    %v1128 = vsel %vm1127, %v1120, %v1124
    %v1129 = vand.u32 2147483647, %v1119
    %vm1130 = vcmp.eq.f32.partialorder %v1129, 8.507059e+37
    %v1131 = vand.u32 %v1119, 2147483648
    %v1132 = vor.u32 1.1754944e-38, %v1131
    %v1133 = vsel %vm1130, %v1132, %v1128
    %v1134 = vmul.f32 1.0, %v1133
    %v1135 = vtanh.pop %v1115
    %v1137 = vrot.slane %v997, 6
    %v1139 = vmul.f32 %v1134, %v1137
    %1141 = vrot.lane.b32.xlu0 %v1135, 64
    %v1142 = vpop.permute.xlu0 %1141
    %v1144 = vmul.f32 %v1134, %v1142
    %1146 = vrot.lane.b32.xlu0 %v1144, 32
    %v1147 = vpop.permute.xlu0 %1146
    %v1149 = vadd.f32 %v1139, %v1147
    %v1150 = vtanh.pop %v1149
    %1152 = vrot.lane.b32.xlu0 %v1150, 64
    %v1153 = vpop.permute.xlu0 %1152
    %v1155 = vmul.f32 %v1134, %v1153
    %1157 = vrot.lane.b32.xlu0 %v1155, 32
    %v1158 = vpop.permute.xlu0 %1157
    %1160 = vst.msk [vmem:[#allocation2 + $0x8] sm:$0xc] %vm540, %v1158
    %v1161 = vld [vmem:[#allocation13] sm:$0xff]
    %v1162 = vld [vmem:[#allocation13 + $0x8] sm:$0xff]
    %v1163 = vld [vmem:[#allocation13 + $0x10] sm:$0xff]
    %v1164 = vld [vmem:[#allocation13 + $0x18] sm:$0xff]
    %v1165 = vrot.slane %v1080, 6
    %1166 = vrot.lane.b32.xlu0 %v1165, 32
    %v1167 = vpop.permute.xlu0 %1166
    %v1168 = vsel %vm263, %v1167, 0
    %1170 = vmatpush.msra.mxu0 0.0
    %1171 = vmatpush.msra.mxu0 0.0
    %1172 = vmatpush.msra.mxu0 0.0
    %1173 = vmatpush.msra.mxu0 0.0
    %1174 = vmatpush.msra.mxu0 0.0
    %1175 = vmatpush.msra.mxu0 0.0
    %1176 = vmatpush.msra.mxu0 0.0
    %1177 = vmatpush.msra.mxu0 0.0
    %1178 = vmatpush.msra.mxu0 0.0
    %1179 = vmatpush.msra.mxu0 0.0
    %1180 = vmatpush.msra.mxu0 0.0
    %1181 = vmatpush.msra.mxu0 0.0
    %1182 = vmatpush.msra.mxu0 %v1164
    %1183 = vmatpush.msra.mxu0 %v1163
    %1184 = vmatpush.msra.mxu0 %v1162
    %1185 = vmatpush.msra.mxu0 %v1161
    %1186 = vmatmul.f32.gmra.mxu0 %v1168
    %v1187 = vpop.f32.mrf.mxu0
    %v1188 = vadd.f32 0.0, %v1187
    %1189 = vdwg.mxu0
    %v1191 = vrot.slane %v1188, 4
    %v1193 = vadd.f32 %v319, %v1191
    %v1194 = vxor.u32 %v1193, 2147483648
    %v1195 = vmul.f32 %v1194, 1.442695
    %v1196 = vpow.pop %v1195
    %v1197 = vadd.f32 %v1196, 1.0
    %v1198 = vrcp.pop %v1197
    %v1199 = vmul.f32 %v1197, %v1198
    %v1200 = vsub.f32 1.0, %v1199
    %v1201 = vmul.f32 %v1198, %v1200
    %v1202 = vadd.f32 %v1198, %v1201
    %vm1203 = vweird.f32 %v1197
    %vm1204 = vweird.f32 %v1198
    %vm1205 = vmor %vm1203, %vm1204
    %v1206 = vsel %vm1205, %v1198, %v1202
    %v1207 = vand.u32 2147483647, %v1197
    %vm1208 = vcmp.eq.f32.partialorder %v1207, 8.507059e+37
    %v1209 = vand.u32 %v1197, 2147483648
    %v1210 = vor.u32 1.1754944e-38, %v1209
    %v1211 = vsel %vm1208, %v1210, %v1206
    %v1212 = vmul.f32 1.0, %v1211
    %v1213 = vtanh.pop %v1193
    %v1215 = vrot.slane %v1074, 2
    %v1217 = vmul.f32 %v1212, %v1215
    %1219 = vrot.lane.b32.xlu0 %v1213, 64
    %v1220 = vpop.permute.xlu0 %1219
    %v1222 = vmul.f32 %v1212, %v1220
    %1224 = vrot.lane.b32.xlu0 %v1222, 32
    %v1225 = vpop.permute.xlu0 %1224
    %v1227 = vadd.f32 %v1217, %v1225
    %v1228 = vtanh.pop %v1227
    %1230 = vrot.lane.b32.xlu0 %v1228, 64
    %v1231 = vpop.permute.xlu0 %1230
    %v1233 = vmul.f32 %v1212, %v1231
    %1235 = vrot.lane.b32.xlu0 %v1233, 64
    %v1236 = vpop.permute.xlu0 %1235
    %1238 = vst.msk [vmem:[#allocation2] sm:$0x30] %vm619, %v1236
    %v1239 = vld [vmem:[#allocation10] sm:$0xff]
    %v1240 = vld [vmem:[#allocation10 + $0x8] sm:$0xff]
    %v1241 = vld [vmem:[#allocation10 + $0x10] sm:$0xff]
    %v1242 = vld [vmem:[#allocation10 + $0x18] sm:$0xff]
    %v1243 = vrot.slane %v1155, 2
    %1244 = vrot.lane.b32.xlu0 %v1243, 32
    %v1245 = vpop.permute.xlu0 %1244
    %v1246 = vsel %vm263, %v1245, 0
    %1248 = vmatpush.msra.mxu0 0.0
    %1249 = vmatpush.msra.mxu0 0.0
    %1250 = vmatpush.msra.mxu0 0.0
    %1251 = vmatpush.msra.mxu0 0.0
    %1252 = vmatpush.msra.mxu0 0.0
    %1253 = vmatpush.msra.mxu0 0.0
    %1254 = vmatpush.msra.mxu0 0.0
    %1255 = vmatpush.msra.mxu0 0.0
    %1256 = vmatpush.msra.mxu0 0.0
    %1257 = vmatpush.msra.mxu0 0.0
    %1258 = vmatpush.msra.mxu0 0.0
    %1259 = vmatpush.msra.mxu0 0.0
    %1260 = vmatpush.msra.mxu0 %v1242
    %1261 = vmatpush.msra.mxu0 %v1241
    %1262 = vmatpush.msra.mxu0 %v1240
    %1263 = vmatpush.msra.mxu0 %v1239
    %1264 = vmatmul.f32.gmra.mxu0 %v1246
    %v1265 = vpop.f32.mrf.mxu0
    %v1266 = vadd.f32 0.0, %v1265
    %1267 = vdwg.mxu0
    %v1269 = vrot.slane %v1266, 4
    %v1271 = vadd.f32 %v291, %v1269
    %v1272 = vxor.u32 %v1271, 2147483648
    %v1273 = vmul.f32 %v1272, 1.442695
    %v1274 = vpow.pop %v1273
    %v1275 = vadd.f32 %v1274, 1.0
    %v1276 = vrcp.pop %v1275
    %v1277 = vmul.f32 %v1275, %v1276
    %v1278 = vsub.f32 1.0, %v1277
    %v1279 = vmul.f32 %v1276, %v1278
    %v1280 = vadd.f32 %v1276, %v1279
    %vm1281 = vweird.f32 %v1275
    %vm1282 = vweird.f32 %v1276
    %vm1283 = vmor %vm1281, %vm1282
    %v1284 = vsel %vm1283, %v1276, %v1280
    %v1285 = vand.u32 2147483647, %v1275
    %vm1286 = vcmp.eq.f32.partialorder %v1285, 8.507059e+37
    %v1287 = vand.u32 %v1275, 2147483648
    %v1288 = vor.u32 1.1754944e-38, %v1287
    %v1289 = vsel %vm1286, %v1288, %v1284
    %v1290 = vmul.f32 1.0, %v1289
    %v1291 = vtanh.pop %v1271
    %v1293 = vrot.slane %v1149, 6
    %v1295 = vmul.f32 %v1290, %v1293
    %1297 = vrot.lane.b32.xlu0 %v1291, 64
    %v1298 = vpop.permute.xlu0 %1297
    %v1300 = vmul.f32 %v1290, %v1298
    %1302 = vrot.lane.b32.xlu0 %v1300, 32
    %v1303 = vpop.permute.xlu0 %1302
    %v1305 = vadd.f32 %v1295, %v1303
    %v1306 = vtanh.pop %v1305
    %1308 = vrot.lane.b32.xlu0 %v1306, 64
    %v1309 = vpop.permute.xlu0 %1308
    %v1311 = vmul.f32 %v1290, %v1309
    %1313 = vrot.lane.b32.xlu0 %v1311, 32
    %v1314 = vpop.permute.xlu0 %1313
    %1316 = vst.msk [vmem:[#allocation2 + $0x8] sm:$0x30] %vm698, %v1314
    %v1317 = vld [vmem:[#allocation13] sm:$0xff]
    %v1318 = vld [vmem:[#allocation13 + $0x8] sm:$0xff]
    %v1319 = vld [vmem:[#allocation13 + $0x10] sm:$0xff]
    %v1320 = vld [vmem:[#allocation13 + $0x18] sm:$0xff]
    %v1321 = vrot.slane %v1233, 4
    %1322 = vrot.lane.b32.xlu0 %v1321, 32
    %v1323 = vpop.permute.xlu0 %1322
    %v1324 = vsel %vm263, %v1323, 0
    %1326 = vmatpush.msra.mxu0 0.0
    %1327 = vmatpush.msra.mxu0 0.0
    %1328 = vmatpush.msra.mxu0 0.0
    %1329 = vmatpush.msra.mxu0 0.0
    %1330 = vmatpush.msra.mxu0 0.0
    %1331 = vmatpush.msra.mxu0 0.0
    %1332 = vmatpush.msra.mxu0 0.0
    %1333 = vmatpush.msra.mxu0 0.0
    %1334 = vmatpush.msra.mxu0 0.0
    %1335 = vmatpush.msra.mxu0 0.0
    %1336 = vmatpush.msra.mxu0 0.0
    %1337 = vmatpush.msra.mxu0 0.0
    %1338 = vmatpush.msra.mxu0 %v1320
    %1339 = vmatpush.msra.mxu0 %v1319
    %1340 = vmatpush.msra.mxu0 %v1318
    %1341 = vmatpush.msra.mxu0 %v1317
    %1342 = vmatmul.f32.gmra.mxu0 %v1324
    %v1343 = vpop.f32.mrf.mxu0
    %v1344 = vadd.f32 0.0, %v1343
    %1345 = vdwg.mxu0
    %v1347 = vrot.slane %v1344, 6
    %v1349 = vadd.f32 %v319, %v1347
    %v1350 = vxor.u32 %v1349, 2147483648
    %v1351 = vmul.f32 %v1350, 1.442695
    %v1352 = vpow.pop %v1351
    %v1353 = vadd.f32 %v1352, 1.0
    %v1354 = vrcp.pop %v1353
    %v1355 = vmul.f32 %v1353, %v1354
    %v1356 = vsub.f32 1.0, %v1355
    %v1357 = vmul.f32 %v1354, %v1356
    %v1358 = vadd.f32 %v1354, %v1357
    %vm1359 = vweird.f32 %v1353
    %vm1360 = vweird.f32 %v1354
    %vm1361 = vmor %vm1359, %vm1360
    %v1362 = vsel %vm1361, %v1354, %v1358
    %v1363 = vand.u32 2147483647, %v1353
    %vm1364 = vcmp.eq.f32.partialorder %v1363, 8.507059e+37
    %v1365 = vand.u32 %v1353, 2147483648
    %v1366 = vor.u32 1.1754944e-38, %v1365
    %v1367 = vsel %vm1364, %v1366, %v1362
    %v1368 = vmul.f32 1.0, %v1367
    %v1369 = vtanh.pop %v1349
    %v1371 = vrot.slane %v1227, 2
    %v1373 = vmul.f32 %v1368, %v1371
    %1375 = vrot.lane.b32.xlu0 %v1369, 64
    %v1376 = vpop.permute.xlu0 %1375
    %v1378 = vmul.f32 %v1368, %v1376
    %1380 = vrot.lane.b32.xlu0 %v1378, 32
    %v1381 = vpop.permute.xlu0 %1380
    %v1383 = vadd.f32 %v1373, %v1381
    %v1384 = vtanh.pop %v1383
    %1386 = vrot.lane.b32.xlu0 %v1384, 64
    %v1387 = vpop.permute.xlu0 %1386
    %v1389 = vmul.f32 %v1368, %v1387
    %1391 = vrot.lane.b32.xlu0 %v1389, 64
    %v1392 = vpop.permute.xlu0 %1391
    %1394 = vst.msk [vmem:[#allocation2] sm:$0xc] %vm777, %v1392
    %v1395 = vld [vmem:[#allocation10] sm:$0xff]
    %v1396 = vld [vmem:[#allocation10 + $0x8] sm:$0xff]
    %v1397 = vld [vmem:[#allocation10 + $0x10] sm:$0xff]
    %v1398 = vld [vmem:[#allocation10 + $0x18] sm:$0xff]
    %v1399 = vrot.slane %v1311, 4
    %1400 = vrot.lane.b32.xlu0 %v1399, 32
    %v1401 = vpop.permute.xlu0 %1400
    %v1402 = vsel %vm263, %v1401, 0
    %1404 = vmatpush.msra.mxu0 0.0
    %1405 = vmatpush.msra.mxu0 0.0
    %1406 = vmatpush.msra.mxu0 0.0
    %1407 = vmatpush.msra.mxu0 0.0
    %1408 = vmatpush.msra.mxu0 0.0
    %1409 = vmatpush.msra.mxu0 0.0
    %1410 = vmatpush.msra.mxu0 0.0
    %1411 = vmatpush.msra.mxu0 0.0
    %1412 = vmatpush.msra.mxu0 0.0
    %1413 = vmatpush.msra.mxu0 0.0
    %1414 = vmatpush.msra.mxu0 0.0
    %1415 = vmatpush.msra.mxu0 0.0
    %1416 = vmatpush.msra.mxu0 %v1398
    %1417 = vmatpush.msra.mxu0 %v1397
    %1418 = vmatpush.msra.mxu0 %v1396
    %1419 = vmatpush.msra.mxu0 %v1395
    %1420 = vmatmul.f32.gmra.mxu0 %v1402
    %v1421 = vpop.f32.mrf.mxu0
    %v1422 = vadd.f32 0.0, %v1421
    %1423 = vdwg.mxu0
    %v1425 = vrot.slane %v1422, 2
    %v1427 = vadd.f32 %v291, %v1425
    %v1428 = vxor.u32 %v1427, 2147483648
    %v1429 = vmul.f32 %v1428, 1.442695
    %v1430 = vpow.pop %v1429
    %v1431 = vadd.f32 %v1430, 1.0
    %v1432 = vrcp.pop %v1431
    %v1433 = vmul.f32 %v1431, %v1432
    %v1434 = vsub.f32 1.0, %v1433
    %v1435 = vmul.f32 %v1432, %v1434
    %v1436 = vadd.f32 %v1432, %v1435
    %vm1437 = vweird.f32 %v1431
    %vm1438 = vweird.f32 %v1432
    %vm1439 = vmor %vm1437, %vm1438
    %v1440 = vsel %vm1439, %v1432, %v1436
    %v1441 = vand.u32 2147483647, %v1431
    %vm1442 = vcmp.eq.f32.partialorder %v1441, 8.507059e+37
    %v1443 = vand.u32 %v1431, 2147483648
    %v1444 = vor.u32 1.1754944e-38, %v1443
    %v1445 = vsel %vm1442, %v1444, %v1440
    %v1446 = vmul.f32 1.0, %v1445
    %v1447 = vtanh.pop %v1427
    %v1449 = vrot.slane %v1305, 6
    %v1451 = vmul.f32 %v1446, %v1449
    %1453 = vrot.lane.b32.xlu0 %v1447, 64
    %v1454 = vpop.permute.xlu0 %1453
    %v1456 = vmul.f32 %v1446, %v1454
    %1458 = vrot.lane.b32.xlu0 %v1456, 32
    %v1459 = vpop.permute.xlu0 %1458
    %v1461 = vadd.f32 %v1451, %v1459
    %v1462 = vtanh.pop %v1461
    %1464 = vrot.lane.b32.xlu0 %v1462, 64
    %v1465 = vpop.permute.xlu0 %1464
    %v1467 = vmul.f32 %v1446, %v1465
    %1469 = vrot.lane.b32.xlu0 %v1467, 32
    %v1470 = vpop.permute.xlu0 %1469
    %1472 = vst.msk [vmem:[#allocation2 + $0x8] sm:$0xc0] %vm856, %v1470
    %v1473 = vld [vmem:[#allocation13] sm:$0xff]
    %v1474 = vld [vmem:[#allocation13 + $0x8] sm:$0xff]
    %v1475 = vld [vmem:[#allocation13 + $0x10] sm:$0xff]
    %v1476 = vld [vmem:[#allocation13 + $0x18] sm:$0xff]
    %v1477 = vrot.slane %v1389, 2
    %1478 = vrot.lane.b32.xlu0 %v1477, 32
    %v1479 = vpop.permute.xlu0 %1478
    %v1480 = vsel %vm263, %v1479, 0
    %1482 = vmatpush.msra.mxu0 0.0
    %1483 = vmatpush.msra.mxu0 0.0
    %1484 = vmatpush.msra.mxu0 0.0
    %1485 = vmatpush.msra.mxu0 0.0
    %1486 = vmatpush.msra.mxu0 0.0
    %1487 = vmatpush.msra.mxu0 0.0
    %1488 = vmatpush.msra.mxu0 0.0
    %1489 = vmatpush.msra.mxu0 0.0
    %1490 = vmatpush.msra.mxu0 0.0
    %1491 = vmatpush.msra.mxu0 0.0
    %1492 = vmatpush.msra.mxu0 0.0
    %1493 = vmatpush.msra.mxu0 0.0
    %1494 = vmatpush.msra.mxu0 %v1476
    %1495 = vmatpush.msra.mxu0 %v1475
    %1496 = vmatpush.msra.mxu0 %v1474
    %1497 = vmatpush.msra.mxu0 %v1473
    %1498 = vmatmul.f32.gmra.mxu0 %v1480
    %v1499 = vpop.f32.mrf.mxu0
    %v1500 = vadd.f32 0.0, %v1499
    %1501 = vdwg.mxu0
    %v1502 = vadd.f32 %v319, %v1500
    %v1503 = vxor.u32 %v1502, 2147483648
    %v1504 = vmul.f32 %v1503, 1.442695
    %v1505 = vpow.pop %v1504
    %v1506 = vadd.f32 %v1505, 1.0
    %v1507 = vrcp.pop %v1506
    %v1508 = vmul.f32 %v1506, %v1507
    %v1509 = vsub.f32 1.0, %v1508
    %v1510 = vmul.f32 %v1507, %v1509
    %v1511 = vadd.f32 %v1507, %v1510
    %vm1512 = vweird.f32 %v1506
    %vm1513 = vweird.f32 %v1507
    %vm1514 = vmor %vm1512, %vm1513
    %v1515 = vsel %vm1514, %v1507, %v1511
    %v1516 = vand.u32 2147483647, %v1506
    %vm1517 = vcmp.eq.f32.partialorder %v1516, 8.507059e+37
    %v1518 = vand.u32 %v1506, 2147483648
    %v1519 = vor.u32 1.1754944e-38, %v1518
    %v1520 = vsel %vm1517, %v1519, %v1515
    %v1521 = vmul.f32 1.0, %v1520
    %v1522 = vtanh.pop %v1502
    %v1524 = vrot.slane %v1383, 2
    %v1526 = vmul.f32 %v1521, %v1524
    %1528 = vrot.lane.b32.xlu0 %v1522, 64
    %v1529 = vpop.permute.xlu0 %1528
    %v1531 = vmul.f32 %v1521, %v1529
    %1533 = vrot.lane.b32.xlu0 %v1531, 32
    %v1534 = vpop.permute.xlu0 %1533
    %v1536 = vadd.f32 %v1526, %v1534
    %v1537 = vtanh.pop %v1536
    %1539 = vrot.lane.b32.xlu0 %v1537, 64
    %v1540 = vpop.permute.xlu0 %1539
    %v1542 = vmul.f32 %v1521, %v1540
    %1544 = vrot.lane.b32.xlu0 %v1542, 64
    %v1545 = vpop.permute.xlu0 %1544
    %1547 = vst.msk [vmem:[#allocation2] sm:$0x3] %vm932, %v1545
    %v1548 = vld [vmem:[#allocation2] sm:$0xff]
    %v1549 = vld [vmem:[#allocation2 + $0x8] sm:$0xff]
    %v1550 = vld [vmem:[%s7] sm:$0xff]
    %v1551 = vld [vmem:[%s7 + $0x8] sm:$0xff]
    %v1552 = vld [vmem:[%s7 + $0x10] sm:$0xff]
    %v1553 = vld [vmem:[%s7 + $0x18] sm:$0xff]
    %v1554 = vld [vmem:[%s7 + $0x20] sm:$0xff]
    %v1555 = vld [vmem:[%s7 + $0x28] sm:$0xff]
    %v1556 = vld [vmem:[%s7 + $0x30] sm:$0xff]
    %v1557 = vld [vmem:[%s7 + $0x38] sm:$0xff]
    %v1558 = vld [vmem:[%s9] sm:$0x1]
    %v1560 = vperm.slane %v1558, 0
    %vm1562 = vcmask 523264
    %v1564 = vsel %vm1562, %v1548, 0
    %v1567 = vsel %vm1562, %v1549, 0
    %1569 = vmatpush.msra.mxu0 0.0
    %1570 = vmatpush.msra.mxu0 0.0
    %1571 = vmatpush.msra.mxu0 0.0
    %1572 = vmatpush.msra.mxu0 0.0
    %1573 = vmatpush.msra.mxu0 0.0
    %1574 = vmatpush.msra.mxu0 0.0
    %1575 = vmatpush.msra.mxu0 0.0
    %1576 = vmatpush.msra.mxu0 0.0
    %1577 = vmatpush.msra.mxu0 %v1557
    %1578 = vmatpush.msra.mxu0 %v1556
    %1579 = vmatpush.msra.mxu0 %v1555
    %1580 = vmatpush.msra.mxu0 %v1554
    %1581 = vmatpush.msra.mxu0 %v1553
    %1582 = vmatpush.msra.mxu0 %v1552
    %1583 = vmatpush.msra.mxu0 %v1551
    %1584 = vmatpush.msra.mxu0 %v1550
    %1585 = vmatmul.f32.gmra.mxu0 %v1564
    %v1586 = vpop.f32.mrf.mxu0
    %v1587 = vadd.f32 %v1560, %v1586
    %1588 = vmatmul.f32.gmra.mxu0 %v1567
    %v1589 = vpop.f32.mrf.mxu0
    %v1590 = vadd.f32 %v1560, %v1589
    %1591 = vdwg.mxu0
    %v1592 = vld [vmem:[%s10] sm:$0xff]
    %v1593 = vld [vmem:[%s10 + $0x8] sm:$0xff]
    %v1594 = vld [vmem:[%s10 + $0x10] sm:$0xff]
    %v1595 = vld [vmem:[%s10 + $0x18] sm:$0xff]
    %v1596 = vld [vmem:[%s10 + $0x20] sm:$0xff]
    %v1597 = vld [vmem:[%s10 + $0x28] sm:$0xff]
    %v1598 = vld [vmem:[%s10 + $0x30] sm:$0xff]
    %v1599 = vld [vmem:[%s10 + $0x38] sm:$0xff]
    %v1600 = vld [vmem:[%s12] sm:$0x1]
    %v1602 = vperm.slane %v1600, 0
    %1604 = vmatpush.msra.mxu0 0.0
    %1605 = vmatpush.msra.mxu0 0.0
    %1606 = vmatpush.msra.mxu0 0.0
    %1607 = vmatpush.msra.mxu0 0.0
    %1608 = vmatpush.msra.mxu0 0.0
    %1609 = vmatpush.msra.mxu0 0.0
    %1610 = vmatpush.msra.mxu0 0.0
    %1611 = vmatpush.msra.mxu0 0.0
    %1612 = vmatpush.msra.mxu0 %v1599
    %1613 = vmatpush.msra.mxu0 %v1598
    %1614 = vmatpush.msra.mxu0 %v1597
    %1615 = vmatpush.msra.mxu0 %v1596
    %1616 = vmatpush.msra.mxu0 %v1595
    %1617 = vmatpush.msra.mxu0 %v1594
    %1618 = vmatpush.msra.mxu0 %v1593
    %1619 = vmatpush.msra.mxu0 %v1592
    %1620 = vmatmul.f32.gmra.mxu0 %v1564
    %v1621 = vpop.f32.mrf.mxu0
    %v1622 = vadd.f32 %v1602, %v1621
    %1623 = vmatmul.f32.gmra.mxu0 %v1567
    %v1624 = vpop.f32.mrf.mxu0
    %v1625 = vadd.f32 %v1602, %v1624
    %1626 = vdwg.mxu0
    %v1627 = vld [vmem:[#allocation16] sm:$0xff]
    %v1628 = vld [vmem:[#allocation16 + $0x8] sm:$0xff]
    %v1629 = vld [vmem:[#allocation16 + $0x10] sm:$0xff]
    %v1630 = vld [vmem:[#allocation16 + $0x18] sm:$0xff]
    %1631 = vmatpush.msra.mxu0 0.0
    %1632 = vmatpush.msra.mxu0 0.0
    %1633 = vmatpush.msra.mxu0 0.0
    %1634 = vmatpush.msra.mxu0 0.0
    %1635 = vmatpush.msra.mxu0 0.0
    %1636 = vmatpush.msra.mxu0 0.0
    %1637 = vmatpush.msra.mxu0 0.0
    %1638 = vmatpush.msra.mxu0 0.0
    %1639 = vmatpush.msra.mxu0 0.0
    %1640 = vmatpush.msra.mxu0 0.0
    %1641 = vmatpush.msra.mxu0 0.0
    %1642 = vmatpush.msra.mxu0 0.0
    %1643 = vmatpush.msra.mxu0 %v1630
    %1644 = vmatpush.msra.mxu0 %v1629
    %1645 = vmatpush.msra.mxu0 %v1628
    %1646 = vmatpush.msra.mxu0 %v1627
    %1647 = vmatmul.f32.gmra.mxu0 %v329
    %v1648 = vpop.f32.mrf.mxu0
    %v1649 = vadd.f32 0.0, %v1648
    %1650 = vdwg.mxu0
    %v1651 = vadd.f32 %v1587, %v1649
    %v1652 = vxor.u32 %v1651, 2147483648
    %v1653 = vmul.f32 %v1652, 1.442695
    %v1654 = vpow.pop %v1653
    %v1655 = vadd.f32 %v1654, 1.0
    %v1656 = vrcp.pop %v1655
    %v1657 = vmul.f32 %v1655, %v1656
    %v1658 = vsub.f32 1.0, %v1657
    %v1659 = vmul.f32 %v1656, %v1658
    %v1660 = vadd.f32 %v1656, %v1659
    %vm1661 = vweird.f32 %v1655
    %vm1662 = vweird.f32 %v1656
    %vm1663 = vmor %vm1661, %vm1662
    %v1664 = vsel %vm1663, %v1656, %v1660
    %v1665 = vand.u32 2147483647, %v1655
    %vm1666 = vcmp.eq.f32.partialorder %v1665, 8.507059e+37
    %v1667 = vand.u32 %v1655, 2147483648
    %v1668 = vor.u32 1.1754944e-38, %v1667
    %v1669 = vsel %vm1666, %v1668, %v1664
    %v1670 = vmul.f32 1.0, %v1669
    %v1671 = vtanh.pop %v1651
    %v1672 = vmul.f32 %v1670, 0.0
    %1674 = vrot.lane.b32.xlu0 %v1671, 64
    %v1675 = vpop.permute.xlu0 %1674
    %v1677 = vmul.f32 %v1670, %v1675
    %1679 = vrot.lane.b32.xlu0 %v1677, 32
    %v1680 = vpop.permute.xlu0 %1679
    %v1682 = vadd.f32 %v1672, %v1680
    %v1683 = vtanh.pop %v1682
    %1685 = vrot.lane.b32.xlu0 %v1683, 64
    %v1686 = vpop.permute.xlu0 %1685
    %v1688 = vmul.f32 %v1670, %v1686
    %1690 = vrot.lane.b32.xlu0 %v1688, 32
    %v1691 = vpop.permute.xlu0 %1690
    %1693 = vst.msk [vmem:[#allocation2] sm:$0x3] %vm393, %v1691
    %v1694 = vld [vmem:[#allocation17] sm:$0xff]
    %v1695 = vld [vmem:[#allocation17 + $0x8] sm:$0xff]
    %v1696 = vld [vmem:[#allocation17 + $0x10] sm:$0xff]
    %v1697 = vld [vmem:[#allocation17 + $0x18] sm:$0xff]
    %1698 = vmatpush.msra.mxu0 0.0
    %1699 = vmatpush.msra.mxu0 0.0
    %1700 = vmatpush.msra.mxu0 0.0
    %1701 = vmatpush.msra.mxu0 0.0
    %1702 = vmatpush.msra.mxu0 0.0
    %1703 = vmatpush.msra.mxu0 0.0
    %1704 = vmatpush.msra.mxu0 0.0
    %1705 = vmatpush.msra.mxu0 0.0
    %1706 = vmatpush.msra.mxu0 0.0
    %1707 = vmatpush.msra.mxu0 0.0
    %1708 = vmatpush.msra.mxu0 0.0
    %1709 = vmatpush.msra.mxu0 0.0
    %1710 = vmatpush.msra.mxu0 %v1697
    %1711 = vmatpush.msra.mxu0 %v1696
    %1712 = vmatpush.msra.mxu0 %v1695
    %1713 = vmatpush.msra.mxu0 %v1694
    %1714 = vmatmul.f32.gmra.mxu0 %v329
    %v1715 = vpop.f32.mrf.mxu0
    %v1716 = vadd.f32 0.0, %v1715
    %1717 = vdwg.mxu0
    %v1719 = vrot.slane %v1716, 2
    %v1721 = vadd.f32 %v1625, %v1719
    %v1722 = vxor.u32 %v1721, 2147483648
    %v1723 = vmul.f32 %v1722, 1.442695
    %v1724 = vpow.pop %v1723
    %v1725 = vadd.f32 %v1724, 1.0
    %v1726 = vrcp.pop %v1725
    %v1727 = vmul.f32 %v1725, %v1726
    %v1728 = vsub.f32 1.0, %v1727
    %v1729 = vmul.f32 %v1726, %v1728
    %v1730 = vadd.f32 %v1726, %v1729
    %vm1731 = vweird.f32 %v1725
    %vm1732 = vweird.f32 %v1726
    %vm1733 = vmor %vm1731, %vm1732
    %v1734 = vsel %vm1733, %v1726, %v1730
    %v1735 = vand.u32 2147483647, %v1725
    %vm1736 = vcmp.eq.f32.partialorder %v1735, 8.507059e+37
    %v1737 = vand.u32 %v1725, 2147483648
    %v1738 = vor.u32 1.1754944e-38, %v1737
    %v1739 = vsel %vm1736, %v1738, %v1734
    %v1740 = vmul.f32 1.0, %v1739
    %v1741 = vtanh.pop %v1721
    %v1742 = vmul.f32 %v1740, 0.0
    %1744 = vrot.lane.b32.xlu0 %v1741, 64
    %v1745 = vpop.permute.xlu0 %1744
    %v1747 = vmul.f32 %v1740, %v1745
    %1749 = vrot.lane.b32.xlu0 %v1747, 32
    %v1750 = vpop.permute.xlu0 %1749
    %v1752 = vadd.f32 %v1742, %v1750
    %v1753 = vtanh.pop %v1752
    %1755 = vrot.lane.b32.xlu0 %v1753, 64
    %v1756 = vpop.permute.xlu0 %1755
    %v1758 = vmul.f32 %v1740, %v1756
    %1760 = vrot.lane.b32.xlu0 %v1758, 64
    %v1761 = vpop.permute.xlu0 %1760
    %1763 = vst.msk [vmem:[#allocation2 + $0x8] sm:$0xc0] %vm464, %v1761
    %v1764 = vld [vmem:[#allocation16] sm:$0xff]
    %v1765 = vld [vmem:[#allocation16 + $0x8] sm:$0xff]
    %v1766 = vld [vmem:[#allocation16 + $0x10] sm:$0xff]
    %v1767 = vld [vmem:[#allocation16 + $0x18] sm:$0xff]
    %v1768 = vsel %vm263, %v1691, 0
    %1770 = vmatpush.msra.mxu0 0.0
    %1771 = vmatpush.msra.mxu0 0.0
    %1772 = vmatpush.msra.mxu0 0.0
    %1773 = vmatpush.msra.mxu0 0.0
    %1774 = vmatpush.msra.mxu0 0.0
    %1775 = vmatpush.msra.mxu0 0.0
    %1776 = vmatpush.msra.mxu0 0.0
    %1777 = vmatpush.msra.mxu0 0.0
    %1778 = vmatpush.msra.mxu0 0.0
    %1779 = vmatpush.msra.mxu0 0.0
    %1780 = vmatpush.msra.mxu0 0.0
    %1781 = vmatpush.msra.mxu0 0.0
    %1782 = vmatpush.msra.mxu0 %v1767
    %1783 = vmatpush.msra.mxu0 %v1766
    %1784 = vmatpush.msra.mxu0 %v1765
    %1785 = vmatpush.msra.mxu0 %v1764
    %1786 = vmatmul.f32.gmra.mxu0 %v1768
    %v1787 = vpop.f32.mrf.mxu0
    %v1788 = vadd.f32 0.0, %v1787
    %1789 = vdwg.mxu0
    %v1791 = vrot.slane %v1788, 6
    %v1793 = vadd.f32 %v1587, %v1791
    %v1794 = vxor.u32 %v1793, 2147483648
    %v1795 = vmul.f32 %v1794, 1.442695
    %v1796 = vpow.pop %v1795
    %v1797 = vadd.f32 %v1796, 1.0
    %v1798 = vrcp.pop %v1797
    %v1799 = vmul.f32 %v1797, %v1798
    %v1800 = vsub.f32 1.0, %v1799
    %v1801 = vmul.f32 %v1798, %v1800
    %v1802 = vadd.f32 %v1798, %v1801
    %vm1803 = vweird.f32 %v1797
    %vm1804 = vweird.f32 %v1798
    %vm1805 = vmor %vm1803, %vm1804
    %v1806 = vsel %vm1805, %v1798, %v1802
    %v1807 = vand.u32 2147483647, %v1797
    %vm1808 = vcmp.eq.f32.partialorder %v1807, 8.507059e+37
    %v1809 = vand.u32 %v1797, 2147483648
    %v1810 = vor.u32 1.1754944e-38, %v1809
    %v1811 = vsel %vm1808, %v1810, %v1806
    %v1812 = vmul.f32 1.0, %v1811
    %v1813 = vtanh.pop %v1793
    %v1815 = vrot.slane %v1682, 6
    %v1817 = vmul.f32 %v1812, %v1815
    %1819 = vrot.lane.b32.xlu0 %v1813, 64
    %v1820 = vpop.permute.xlu0 %1819
    %v1822 = vmul.f32 %v1812, %v1820
    %1824 = vrot.lane.b32.xlu0 %v1822, 32
    %v1825 = vpop.permute.xlu0 %1824
    %v1827 = vadd.f32 %v1817, %v1825
    %v1828 = vtanh.pop %v1827
    %1830 = vrot.lane.b32.xlu0 %v1828, 64
    %v1831 = vpop.permute.xlu0 %1830
    %v1833 = vmul.f32 %v1812, %v1831
    %1835 = vrot.lane.b32.xlu0 %v1833, 32
    %v1836 = vpop.permute.xlu0 %1835
    %1838 = vst.msk [vmem:[#allocation2] sm:$0xc] %vm540, %v1836
    %v1839 = vld [vmem:[#allocation17] sm:$0xff]
    %v1840 = vld [vmem:[#allocation17 + $0x8] sm:$0xff]
    %v1841 = vld [vmem:[#allocation17 + $0x10] sm:$0xff]
    %v1842 = vld [vmem:[#allocation17 + $0x18] sm:$0xff]
    %v1843 = vrot.slane %v1758, 6
    %1844 = vrot.lane.b32.xlu0 %v1843, 32
    %v1845 = vpop.permute.xlu0 %1844
    %v1846 = vsel %vm263, %v1845, 0
    %1848 = vmatpush.msra.mxu0 0.0
    %1849 = vmatpush.msra.mxu0 0.0
    %1850 = vmatpush.msra.mxu0 0.0
    %1851 = vmatpush.msra.mxu0 0.0
    %1852 = vmatpush.msra.mxu0 0.0
    %1853 = vmatpush.msra.mxu0 0.0
    %1854 = vmatpush.msra.mxu0 0.0
    %1855 = vmatpush.msra.mxu0 0.0
    %1856 = vmatpush.msra.mxu0 0.0
    %1857 = vmatpush.msra.mxu0 0.0
    %1858 = vmatpush.msra.mxu0 0.0
    %1859 = vmatpush.msra.mxu0 0.0
    %1860 = vmatpush.msra.mxu0 %v1842
    %1861 = vmatpush.msra.mxu0 %v1841
    %1862 = vmatpush.msra.mxu0 %v1840
    %1863 = vmatpush.msra.mxu0 %v1839
    %1864 = vmatmul.f32.gmra.mxu0 %v1846
    %v1865 = vpop.f32.mrf.mxu0
    %v1866 = vadd.f32 0.0, %v1865
    %1867 = vdwg.mxu0
    %v1869 = vrot.slane %v1866, 4
    %v1871 = vadd.f32 %v1625, %v1869
    %v1872 = vxor.u32 %v1871, 2147483648
    %v1873 = vmul.f32 %v1872, 1.442695
    %v1874 = vpow.pop %v1873
    %v1875 = vadd.f32 %v1874, 1.0
    %v1876 = vrcp.pop %v1875
    %v1877 = vmul.f32 %v1875, %v1876
    %v1878 = vsub.f32 1.0, %v1877
    %v1879 = vmul.f32 %v1876, %v1878
    %v1880 = vadd.f32 %v1876, %v1879
    %vm1881 = vweird.f32 %v1875
    %vm1882 = vweird.f32 %v1876
    %vm1883 = vmor %vm1881, %vm1882
    %v1884 = vsel %vm1883, %v1876, %v1880
    %v1885 = vand.u32 2147483647, %v1875
    %vm1886 = vcmp.eq.f32.partialorder %v1885, 8.507059e+37
    %v1887 = vand.u32 %v1875, 2147483648
    %v1888 = vor.u32 1.1754944e-38, %v1887
    %v1889 = vsel %vm1886, %v1888, %v1884
    %v1890 = vmul.f32 1.0, %v1889
    %v1891 = vtanh.pop %v1871
    %v1893 = vrot.slane %v1752, 2
    %v1895 = vmul.f32 %v1890, %v1893
    %1897 = vrot.lane.b32.xlu0 %v1891, 64
    %v1898 = vpop.permute.xlu0 %1897
    %v1900 = vmul.f32 %v1890, %v1898
    %1902 = vrot.lane.b32.xlu0 %v1900, 32
    %v1903 = vpop.permute.xlu0 %1902
    %v1905 = vadd.f32 %v1895, %v1903
    %v1906 = vtanh.pop %v1905
    %1908 = vrot.lane.b32.xlu0 %v1906, 64
    %v1909 = vpop.permute.xlu0 %1908
    %v1911 = vmul.f32 %v1890, %v1909
    %1913 = vrot.lane.b32.xlu0 %v1911, 64
    %v1914 = vpop.permute.xlu0 %1913
    %1916 = vst.msk [vmem:[#allocation2 + $0x8] sm:$0x30] %vm619, %v1914
    %v1917 = vld [vmem:[#allocation16] sm:$0xff]
    %v1918 = vld [vmem:[#allocation16 + $0x8] sm:$0xff]
    %v1919 = vld [vmem:[#allocation16 + $0x10] sm:$0xff]
    %v1920 = vld [vmem:[#allocation16 + $0x18] sm:$0xff]
    %v1921 = vrot.slane %v1833, 2
    %1922 = vrot.lane.b32.xlu0 %v1921, 32
    %v1923 = vpop.permute.xlu0 %1922
    %v1924 = vsel %vm263, %v1923, 0
    %1926 = vmatpush.msra.mxu0 0.0
    %1927 = vmatpush.msra.mxu0 0.0
    %1928 = vmatpush.msra.mxu0 0.0
    %1929 = vmatpush.msra.mxu0 0.0
    %1930 = vmatpush.msra.mxu0 0.0
    %1931 = vmatpush.msra.mxu0 0.0
    %1932 = vmatpush.msra.mxu0 0.0
    %1933 = vmatpush.msra.mxu0 0.0
    %1934 = vmatpush.msra.mxu0 0.0
    %1935 = vmatpush.msra.mxu0 0.0
    %1936 = vmatpush.msra.mxu0 0.0
    %1937 = vmatpush.msra.mxu0 0.0
    %1938 = vmatpush.msra.mxu0 %v1920
    %1939 = vmatpush.msra.mxu0 %v1919
    %1940 = vmatpush.msra.mxu0 %v1918
    %1941 = vmatpush.msra.mxu0 %v1917
    %1942 = vmatmul.f32.gmra.mxu0 %v1924
    %v1943 = vpop.f32.mrf.mxu0
    %v1944 = vadd.f32 0.0, %v1943
    %1945 = vdwg.mxu0
    %v1947 = vrot.slane %v1944, 4
    %v1949 = vadd.f32 %v1587, %v1947
    %v1950 = vxor.u32 %v1949, 2147483648
    %v1951 = vmul.f32 %v1950, 1.442695
    %v1952 = vpow.pop %v1951
    %v1953 = vadd.f32 %v1952, 1.0
    %v1954 = vrcp.pop %v1953
    %v1955 = vmul.f32 %v1953, %v1954
    %v1956 = vsub.f32 1.0, %v1955
    %v1957 = vmul.f32 %v1954, %v1956
    %v1958 = vadd.f32 %v1954, %v1957
    %vm1959 = vweird.f32 %v1953
    %vm1960 = vweird.f32 %v1954
    %vm1961 = vmor %vm1959, %vm1960
    %v1962 = vsel %vm1961, %v1954, %v1958
    %v1963 = vand.u32 2147483647, %v1953
    %vm1964 = vcmp.eq.f32.partialorder %v1963, 8.507059e+37
    %v1965 = vand.u32 %v1953, 2147483648
    %v1966 = vor.u32 1.1754944e-38, %v1965
    %v1967 = vsel %vm1964, %v1966, %v1962
    %v1968 = vmul.f32 1.0, %v1967
    %v1969 = vtanh.pop %v1949
    %v1971 = vrot.slane %v1827, 6
    %v1973 = vmul.f32 %v1968, %v1971
    %1975 = vrot.lane.b32.xlu0 %v1969, 64
    %v1976 = vpop.permute.xlu0 %1975
    %v1978 = vmul.f32 %v1968, %v1976
    %1980 = vrot.lane.b32.xlu0 %v1978, 32
    %v1981 = vpop.permute.xlu0 %1980
    %v1983 = vadd.f32 %v1973, %v1981
    %v1984 = vtanh.pop %v1983
    %1986 = vrot.lane.b32.xlu0 %v1984, 64
    %v1987 = vpop.permute.xlu0 %1986
    %v1989 = vmul.f32 %v1968, %v1987
    %1991 = vrot.lane.b32.xlu0 %v1989, 32
    %v1992 = vpop.permute.xlu0 %1991
    %1994 = vst.msk [vmem:[#allocation2] sm:$0x30] %vm698, %v1992
    %v1995 = vld [vmem:[#allocation17] sm:$0xff]
    %v1996 = vld [vmem:[#allocation17 + $0x8] sm:$0xff]
    %v1997 = vld [vmem:[#allocation17 + $0x10] sm:$0xff]
    %v1998 = vld [vmem:[#allocation17 + $0x18] sm:$0xff]
    %v1999 = vrot.slane %v1911, 4
    %2000 = vrot.lane.b32.xlu0 %v1999, 32
    %v2001 = vpop.permute.xlu0 %2000
    %v2002 = vsel %vm263, %v2001, 0
    %2004 = vmatpush.msra.mxu0 0.0
    %2005 = vmatpush.msra.mxu0 0.0
    %2006 = vmatpush.msra.mxu0 0.0
    %2007 = vmatpush.msra.mxu0 0.0
    %2008 = vmatpush.msra.mxu0 0.0
    %2009 = vmatpush.msra.mxu0 0.0
    %2010 = vmatpush.msra.mxu0 0.0
    %2011 = vmatpush.msra.mxu0 0.0
    %2012 = vmatpush.msra.mxu0 0.0
    %2013 = vmatpush.msra.mxu0 0.0
    %2014 = vmatpush.msra.mxu0 0.0
    %2015 = vmatpush.msra.mxu0 0.0
    %2016 = vmatpush.msra.mxu0 %v1998
    %2017 = vmatpush.msra.mxu0 %v1997
    %2018 = vmatpush.msra.mxu0 %v1996
    %2019 = vmatpush.msra.mxu0 %v1995
    %2020 = vmatmul.f32.gmra.mxu0 %v2002
    %v2021 = vpop.f32.mrf.mxu0
    %v2022 = vadd.f32 0.0, %v2021
    %2023 = vdwg.mxu0
    %v2025 = vrot.slane %v2022, 6
    %v2027 = vadd.f32 %v1625, %v2025
    %v2028 = vxor.u32 %v2027, 2147483648
    %v2029 = vmul.f32 %v2028, 1.442695
    %v2030 = vpow.pop %v2029
    %v2031 = vadd.f32 %v2030, 1.0
    %v2032 = vrcp.pop %v2031
    %v2033 = vmul.f32 %v2031, %v2032
    %v2034 = vsub.f32 1.0, %v2033
    %v2035 = vmul.f32 %v2032, %v2034
    %v2036 = vadd.f32 %v2032, %v2035
    %vm2037 = vweird.f32 %v2031
    %vm2038 = vweird.f32 %v2032
    %vm2039 = vmor %vm2037, %vm2038
    %v2040 = vsel %vm2039, %v2032, %v2036
    %v2041 = vand.u32 2147483647, %v2031
    %vm2042 = vcmp.eq.f32.partialorder %v2041, 8.507059e+37
    %v2043 = vand.u32 %v2031, 2147483648
    %v2044 = vor.u32 1.1754944e-38, %v2043
    %v2045 = vsel %vm2042, %v2044, %v2040
    %v2046 = vmul.f32 1.0, %v2045
    %v2047 = vtanh.pop %v2027
    %v2049 = vrot.slane %v1905, 2
    %v2051 = vmul.f32 %v2046, %v2049
    %2053 = vrot.lane.b32.xlu0 %v2047, 64
    %v2054 = vpop.permute.xlu0 %2053
    %v2056 = vmul.f32 %v2046, %v2054
    %2058 = vrot.lane.b32.xlu0 %v2056, 32
    %v2059 = vpop.permute.xlu0 %2058
    %v2061 = vadd.f32 %v2051, %v2059
    %v2062 = vtanh.pop %v2061
    %2064 = vrot.lane.b32.xlu0 %v2062, 64
    %v2065 = vpop.permute.xlu0 %2064
    %v2067 = vmul.f32 %v2046, %v2065
    %2069 = vrot.lane.b32.xlu0 %v2067, 64
    %v2070 = vpop.permute.xlu0 %2069
    %2072 = vst.msk [vmem:[#allocation2 + $0x8] sm:$0xc] %vm777, %v2070
    %v2073 = vld [vmem:[#allocation16] sm:$0xff]
    %v2074 = vld [vmem:[#allocation16 + $0x8] sm:$0xff]
    %v2075 = vld [vmem:[#allocation16 + $0x10] sm:$0xff]
    %v2076 = vld [vmem:[#allocation16 + $0x18] sm:$0xff]
    %v2077 = vrot.slane %v1989, 4
    %2078 = vrot.lane.b32.xlu0 %v2077, 32
    %v2079 = vpop.permute.xlu0 %2078
    %v2080 = vsel %vm263, %v2079, 0
    %2082 = vmatpush.msra.mxu0 0.0
    %2083 = vmatpush.msra.mxu0 0.0
    %2084 = vmatpush.msra.mxu0 0.0
    %2085 = vmatpush.msra.mxu0 0.0
    %2086 = vmatpush.msra.mxu0 0.0
    %2087 = vmatpush.msra.mxu0 0.0
    %2088 = vmatpush.msra.mxu0 0.0
    %2089 = vmatpush.msra.mxu0 0.0
    %2090 = vmatpush.msra.mxu0 0.0
    %2091 = vmatpush.msra.mxu0 0.0
    %2092 = vmatpush.msra.mxu0 0.0
    %2093 = vmatpush.msra.mxu0 0.0
    %2094 = vmatpush.msra.mxu0 %v2076
    %2095 = vmatpush.msra.mxu0 %v2075
    %2096 = vmatpush.msra.mxu0 %v2074
    %2097 = vmatpush.msra.mxu0 %v2073
    %2098 = vmatmul.f32.gmra.mxu0 %v2080
    %v2099 = vpop.f32.mrf.mxu0
    %v2100 = vadd.f32 0.0, %v2099
    %2101 = vdwg.mxu0
    %v2103 = vrot.slane %v2100, 2
    %v2105 = vadd.f32 %v1587, %v2103
    %v2106 = vxor.u32 %v2105, 2147483648
    %v2107 = vmul.f32 %v2106, 1.442695
    %v2108 = vpow.pop %v2107
    %v2109 = vadd.f32 %v2108, 1.0
    %v2110 = vrcp.pop %v2109
    %v2111 = vmul.f32 %v2109, %v2110
    %v2112 = vsub.f32 1.0, %v2111
    %v2113 = vmul.f32 %v2110, %v2112
    %v2114 = vadd.f32 %v2110, %v2113
    %vm2115 = vweird.f32 %v2109
    %vm2116 = vweird.f32 %v2110
    %vm2117 = vmor %vm2115, %vm2116
    %v2118 = vsel %vm2117, %v2110, %v2114
    %v2119 = vand.u32 2147483647, %v2109
    %vm2120 = vcmp.eq.f32.partialorder %v2119, 8.507059e+37
    %v2121 = vand.u32 %v2109, 2147483648
    %v2122 = vor.u32 1.1754944e-38, %v2121
    %v2123 = vsel %vm2120, %v2122, %v2118
    %v2124 = vmul.f32 1.0, %v2123
    %v2125 = vtanh.pop %v2105
    %v2127 = vrot.slane %v1983, 6
    %v2129 = vmul.f32 %v2124, %v2127
    %2131 = vrot.lane.b32.xlu0 %v2125, 64
    %v2132 = vpop.permute.xlu0 %2131
    %v2134 = vmul.f32 %v2124, %v2132
    %2136 = vrot.lane.b32.xlu0 %v2134, 32
    %v2137 = vpop.permute.xlu0 %2136
    %v2139 = vadd.f32 %v2129, %v2137
    %v2140 = vtanh.pop %v2139
    %2142 = vrot.lane.b32.xlu0 %v2140, 64
    %v2143 = vpop.permute.xlu0 %2142
    %v2145 = vmul.f32 %v2124, %v2143
    %2147 = vrot.lane.b32.xlu0 %v2145, 32
    %v2148 = vpop.permute.xlu0 %2147
    %2150 = vst.msk [vmem:[#allocation2] sm:$0xc0] %vm856, %v2148
    %v2151 = vld [vmem:[#allocation17] sm:$0xff]
    %v2152 = vld [vmem:[#allocation17 + $0x8] sm:$0xff]
    %v2153 = vld [vmem:[#allocation17 + $0x10] sm:$0xff]
    %v2154 = vld [vmem:[#allocation17 + $0x18] sm:$0xff]
    %v2155 = vrot.slane %v2067, 2
    %2156 = vrot.lane.b32.xlu0 %v2155, 32
    %v2157 = vpop.permute.xlu0 %2156
    %v2158 = vsel %vm263, %v2157, 0
    %2160 = vmatpush.msra.mxu0 0.0
    %2161 = vmatpush.msra.mxu0 0.0
    %2162 = vmatpush.msra.mxu0 0.0
    %2163 = vmatpush.msra.mxu0 0.0
    %2164 = vmatpush.msra.mxu0 0.0
    %2165 = vmatpush.msra.mxu0 0.0
    %2166 = vmatpush.msra.mxu0 0.0
    %2167 = vmatpush.msra.mxu0 0.0
    %2168 = vmatpush.msra.mxu0 0.0
    %2169 = vmatpush.msra.mxu0 0.0
    %2170 = vmatpush.msra.mxu0 0.0
    %2171 = vmatpush.msra.mxu0 0.0
    %2172 = vmatpush.msra.mxu0 %v2154
    %2173 = vmatpush.msra.mxu0 %v2153
    %2174 = vmatpush.msra.mxu0 %v2152
    %2175 = vmatpush.msra.mxu0 %v2151
    %2176 = vmatmul.f32.gmra.mxu0 %v2158
    %v2177 = vpop.f32.mrf.mxu0
    %v2178 = vadd.f32 0.0, %v2177
    %2179 = vdwg.mxu0
    %v2180 = vadd.f32 %v1625, %v2178
    %v2181 = vxor.u32 %v2180, 2147483648
    %v2182 = vmul.f32 %v2181, 1.442695
    %v2183 = vpow.pop %v2182
    %v2184 = vadd.f32 %v2183, 1.0
    %v2185 = vrcp.pop %v2184
    %v2186 = vmul.f32 %v2184, %v2185
    %v2187 = vsub.f32 1.0, %v2186
    %v2188 = vmul.f32 %v2185, %v2187
    %v2189 = vadd.f32 %v2185, %v2188
    %vm2190 = vweird.f32 %v2184
    %vm2191 = vweird.f32 %v2185
    %vm2192 = vmor %vm2190, %vm2191
    %v2193 = vsel %vm2192, %v2185, %v2189
    %v2194 = vand.u32 2147483647, %v2184
    %vm2195 = vcmp.eq.f32.partialorder %v2194, 8.507059e+37
    %v2196 = vand.u32 %v2184, 2147483648
    %v2197 = vor.u32 1.1754944e-38, %v2196
    %v2198 = vsel %vm2195, %v2197, %v2193
    %v2199 = vmul.f32 1.0, %v2198
    %v2200 = vtanh.pop %v2180
    %v2202 = vrot.slane %v2061, 2
    %v2204 = vmul.f32 %v2199, %v2202
    %2206 = vrot.lane.b32.xlu0 %v2200, 64
    %v2207 = vpop.permute.xlu0 %2206
    %v2209 = vmul.f32 %v2199, %v2207
    %2211 = vrot.lane.b32.xlu0 %v2209, 32
    %v2212 = vpop.permute.xlu0 %2211
    %v2214 = vadd.f32 %v2204, %v2212
    %v2215 = vtanh.pop %v2214
    %2217 = vrot.lane.b32.xlu0 %v2215, 64
    %v2218 = vpop.permute.xlu0 %2217
    %v2220 = vmul.f32 %v2199, %v2218
    %2222 = vrot.lane.b32.xlu0 %v2220, 64
    %v2223 = vpop.permute.xlu0 %2222
    %2225 = vst.msk [vmem:[#allocation2 + $0x8] sm:$0x3] %vm932, %v2223
    %v2226 = vld [vmem:[#allocation16] sm:$0xff]
    %v2227 = vld [vmem:[#allocation16 + $0x8] sm:$0xff]
    %v2228 = vld [vmem:[#allocation16 + $0x10] sm:$0xff]
    %v2229 = vld [vmem:[#allocation16 + $0x18] sm:$0xff]
    %v2230 = vrot.slane %v2145, 6
    %2231 = vrot.lane.b32.xlu0 %v2230, 32
    %v2232 = vpop.permute.xlu0 %2231
    %v2233 = vsel %vm263, %v2232, 0
    %2235 = vmatpush.msra.mxu0 0.0
    %2236 = vmatpush.msra.mxu0 0.0
    %2237 = vmatpush.msra.mxu0 0.0
    %2238 = vmatpush.msra.mxu0 0.0
    %2239 = vmatpush.msra.mxu0 0.0
    %2240 = vmatpush.msra.mxu0 0.0
    %2241 = vmatpush.msra.mxu0 0.0
    %2242 = vmatpush.msra.mxu0 0.0
    %2243 = vmatpush.msra.mxu0 0.0
    %2244 = vmatpush.msra.mxu0 0.0
    %2245 = vmatpush.msra.mxu0 0.0
    %2246 = vmatpush.msra.mxu0 0.0
    %2247 = vmatpush.msra.mxu0 %v2229
    %2248 = vmatpush.msra.mxu0 %v2228
    %2249 = vmatpush.msra.mxu0 %v2227
    %2250 = vmatpush.msra.mxu0 %v2226
    %2251 = vmatmul.f32.gmra.mxu0 %v2233
    %v2252 = vpop.f32.mrf.mxu0
    %v2253 = vadd.f32 0.0, %v2252
    %2254 = vdwg.mxu0
    %v2255 = vadd.f32 %v1590, %v2253
    %v2256 = vxor.u32 %v2255, 2147483648
    %v2257 = vmul.f32 %v2256, 1.442695
    %v2258 = vpow.pop %v2257
    %v2259 = vadd.f32 %v2258, 1.0
    %v2260 = vrcp.pop %v2259
    %v2261 = vmul.f32 %v2259, %v2260
    %v2262 = vsub.f32 1.0, %v2261
    %v2263 = vmul.f32 %v2260, %v2262
    %v2264 = vadd.f32 %v2260, %v2263
    %vm2265 = vweird.f32 %v2259
    %vm2266 = vweird.f32 %v2260
    %vm2267 = vmor %vm2265, %vm2266
    %v2268 = vsel %vm2267, %v2260, %v2264
    %v2269 = vand.u32 2147483647, %v2259
    %vm2270 = vcmp.eq.f32.partialorder %v2269, 8.507059e+37
    %v2271 = vand.u32 %v2259, 2147483648
    %v2272 = vor.u32 1.1754944e-38, %v2271
    %v2273 = vsel %vm2270, %v2272, %v2268
    %v2274 = vmul.f32 1.0, %v2273
    %v2275 = vtanh.pop %v2255
    %v2277 = vrot.slane %v2139, 6
    %v2279 = vmul.f32 %v2274, %v2277
    %2281 = vrot.lane.b32.xlu0 %v2275, 64
    %v2282 = vpop.permute.xlu0 %2281
    %v2284 = vmul.f32 %v2274, %v2282
    %2286 = vrot.lane.b32.xlu0 %v2284, 32
    %v2287 = vpop.permute.xlu0 %2286
    %v2289 = vadd.f32 %v2279, %v2287
    %v2290 = vtanh.pop %v2289
    %2292 = vrot.lane.b32.xlu0 %v2290, 64
    %v2293 = vpop.permute.xlu0 %2292
    %v2295 = vmul.f32 %v2274, %v2293
    %2297 = vrot.lane.b32.xlu0 %v2295, 32
    %v2298 = vpop.permute.xlu0 %2297
    %2300 = vst.msk [vmem:[#allocation2 + $0x8] sm:$0x3] %vm393, %v2298
    %v2301 = vld [vmem:[#allocation17] sm:$0xff]
    %v2302 = vld [vmem:[#allocation17 + $0x8] sm:$0xff]
    %v2303 = vld [vmem:[#allocation17 + $0x10] sm:$0xff]
    %v2304 = vld [vmem:[#allocation17 + $0x18] sm:$0xff]
    %2305 = vrot.lane.b32.xlu0 %v2220, 32
    %v2306 = vpop.permute.xlu0 %2305
    %v2307 = vsel %vm263, %v2306, 0
    %2309 = vmatpush.msra.mxu0 0.0
    %2310 = vmatpush.msra.mxu0 0.0
    %2311 = vmatpush.msra.mxu0 0.0
    %2312 = vmatpush.msra.mxu0 0.0
    %2313 = vmatpush.msra.mxu0 0.0
    %2314 = vmatpush.msra.mxu0 0.0
    %2315 = vmatpush.msra.mxu0 0.0
    %2316 = vmatpush.msra.mxu0 0.0
    %2317 = vmatpush.msra.mxu0 0.0
    %2318 = vmatpush.msra.mxu0 0.0
    %2319 = vmatpush.msra.mxu0 0.0
    %2320 = vmatpush.msra.mxu0 0.0
    %2321 = vmatpush.msra.mxu0 %v2304
    %2322 = vmatpush.msra.mxu0 %v2303
    %2323 = vmatpush.msra.mxu0 %v2302
    %2324 = vmatpush.msra.mxu0 %v2301
    %2325 = vmatmul.f32.gmra.mxu0 %v2307
    %v2326 = vpop.f32.mrf.mxu0
    %v2327 = vadd.f32 0.0, %v2326
    %2328 = vdwg.mxu0
    %v2330 = vrot.slane %v2327, 2
    %v2332 = vadd.f32 %v1622, %v2330
    %v2333 = vxor.u32 %v2332, 2147483648
    %v2334 = vmul.f32 %v2333, 1.442695
    %v2335 = vpow.pop %v2334
    %v2336 = vadd.f32 %v2335, 1.0
    %v2337 = vrcp.pop %v2336
    %v2338 = vmul.f32 %v2336, %v2337
    %v2339 = vsub.f32 1.0, %v2338
    %v2340 = vmul.f32 %v2337, %v2339
    %v2341 = vadd.f32 %v2337, %v2340
    %vm2342 = vweird.f32 %v2336
    %vm2343 = vweird.f32 %v2337
    %vm2344 = vmor %vm2342, %vm2343
    %v2345 = vsel %vm2344, %v2337, %v2341
    %v2346 = vand.u32 2147483647, %v2336
    %vm2347 = vcmp.eq.f32.partialorder %v2346, 8.507059e+37
    %v2348 = vand.u32 %v2336, 2147483648
    %v2349 = vor.u32 1.1754944e-38, %v2348
    %v2350 = vsel %vm2347, %v2349, %v2345
    %v2351 = vmul.f32 1.0, %v2350
    %v2352 = vtanh.pop %v2332
    %v2354 = vrot.slane %v2214, 2
    %v2356 = vmul.f32 %v2351, %v2354
    %2358 = vrot.lane.b32.xlu0 %v2352, 64
    %v2359 = vpop.permute.xlu0 %2358
    %v2361 = vmul.f32 %v2351, %v2359
    %2363 = vrot.lane.b32.xlu0 %v2361, 32
    %v2364 = vpop.permute.xlu0 %2363
    %v2366 = vadd.f32 %v2356, %v2364
    %v2367 = vtanh.pop %v2366
    %2369 = vrot.lane.b32.xlu0 %v2367, 64
    %v2370 = vpop.permute.xlu0 %2369
    %v2372 = vmul.f32 %v2351, %v2370
    %2374 = vrot.lane.b32.xlu0 %v2372, 64
    %v2375 = vpop.permute.xlu0 %2374
    %2377 = vst.msk [vmem:[#allocation2] sm:$0xc0] %vm464, %v2375
    %v2378 = vld [vmem:[#allocation16] sm:$0xff]
    %v2379 = vld [vmem:[#allocation16 + $0x8] sm:$0xff]
    %v2380 = vld [vmem:[#allocation16 + $0x10] sm:$0xff]
    %v2381 = vld [vmem:[#allocation16 + $0x18] sm:$0xff]
    %v2382 = vsel %vm263, %v2298, 0
    %2384 = vmatpush.msra.mxu0 0.0
    %2385 = vmatpush.msra.mxu0 0.0
    %2386 = vmatpush.msra.mxu0 0.0
    %2387 = vmatpush.msra.mxu0 0.0
    %2388 = vmatpush.msra.mxu0 0.0
    %2389 = vmatpush.msra.mxu0 0.0
    %2390 = vmatpush.msra.mxu0 0.0
    %2391 = vmatpush.msra.mxu0 0.0
    %2392 = vmatpush.msra.mxu0 0.0
    %2393 = vmatpush.msra.mxu0 0.0
    %2394 = vmatpush.msra.mxu0 0.0
    %2395 = vmatpush.msra.mxu0 0.0
    %2396 = vmatpush.msra.mxu0 %v2381
    %2397 = vmatpush.msra.mxu0 %v2380
    %2398 = vmatpush.msra.mxu0 %v2379
    %2399 = vmatpush.msra.mxu0 %v2378
    %2400 = vmatmul.f32.gmra.mxu0 %v2382
    %v2401 = vpop.f32.mrf.mxu0
    %v2402 = vadd.f32 0.0, %v2401
    %2403 = vdwg.mxu0
    %v2405 = vrot.slane %v2402, 6
    %v2407 = vadd.f32 %v1590, %v2405
    %v2408 = vxor.u32 %v2407, 2147483648
    %v2409 = vmul.f32 %v2408, 1.442695
    %v2410 = vpow.pop %v2409
    %v2411 = vadd.f32 %v2410, 1.0
    %v2412 = vrcp.pop %v2411
    %v2413 = vmul.f32 %v2411, %v2412
    %v2414 = vsub.f32 1.0, %v2413
    %v2415 = vmul.f32 %v2412, %v2414
    %v2416 = vadd.f32 %v2412, %v2415
    %vm2417 = vweird.f32 %v2411
    %vm2418 = vweird.f32 %v2412
    %vm2419 = vmor %vm2417, %vm2418
    %v2420 = vsel %vm2419, %v2412, %v2416
    %v2421 = vand.u32 2147483647, %v2411
    %vm2422 = vcmp.eq.f32.partialorder %v2421, 8.507059e+37
    %v2423 = vand.u32 %v2411, 2147483648
    %v2424 = vor.u32 1.1754944e-38, %v2423
    %v2425 = vsel %vm2422, %v2424, %v2420
    %v2426 = vmul.f32 1.0, %v2425
    %v2427 = vtanh.pop %v2407
    %v2429 = vrot.slane %v2289, 6
    %v2431 = vmul.f32 %v2426, %v2429
    %2433 = vrot.lane.b32.xlu0 %v2427, 64
    %v2434 = vpop.permute.xlu0 %2433
    %v2436 = vmul.f32 %v2426, %v2434
    %2438 = vrot.lane.b32.xlu0 %v2436, 32
    %v2439 = vpop.permute.xlu0 %2438
    %v2441 = vadd.f32 %v2431, %v2439
    %v2442 = vtanh.pop %v2441
    %2444 = vrot.lane.b32.xlu0 %v2442, 64
    %v2445 = vpop.permute.xlu0 %2444
    %v2447 = vmul.f32 %v2426, %v2445
    %2449 = vrot.lane.b32.xlu0 %v2447, 32
    %v2450 = vpop.permute.xlu0 %2449
    %2452 = vst.msk [vmem:[#allocation2 + $0x8] sm:$0xc] %vm540, %v2450
    %v2453 = vld [vmem:[#allocation17] sm:$0xff]
    %v2454 = vld [vmem:[#allocation17 + $0x8] sm:$0xff]
    %v2455 = vld [vmem:[#allocation17 + $0x10] sm:$0xff]
    %v2456 = vld [vmem:[#allocation17 + $0x18] sm:$0xff]
    %v2457 = vrot.slane %v2372, 6
    %2458 = vrot.lane.b32.xlu0 %v2457, 32
    %v2459 = vpop.permute.xlu0 %2458
    %v2460 = vsel %vm263, %v2459, 0
    %2462 = vmatpush.msra.mxu0 0.0
    %2463 = vmatpush.msra.mxu0 0.0
    %2464 = vmatpush.msra.mxu0 0.0
    %2465 = vmatpush.msra.mxu0 0.0
    %2466 = vmatpush.msra.mxu0 0.0
    %2467 = vmatpush.msra.mxu0 0.0
    %2468 = vmatpush.msra.mxu0 0.0
    %2469 = vmatpush.msra.mxu0 0.0
    %2470 = vmatpush.msra.mxu0 0.0
    %2471 = vmatpush.msra.mxu0 0.0
    %2472 = vmatpush.msra.mxu0 0.0
    %2473 = vmatpush.msra.mxu0 0.0
    %2474 = vmatpush.msra.mxu0 %v2456
    %2475 = vmatpush.msra.mxu0 %v2455
    %2476 = vmatpush.msra.mxu0 %v2454
    %2477 = vmatpush.msra.mxu0 %v2453
    %2478 = vmatmul.f32.gmra.mxu0 %v2460
    %v2479 = vpop.f32.mrf.mxu0
    %v2480 = vadd.f32 0.0, %v2479
    %2481 = vdwg.mxu0
    %v2483 = vrot.slane %v2480, 4
    %v2485 = vadd.f32 %v1622, %v2483
    %v2486 = vxor.u32 %v2485, 2147483648
    %v2487 = vmul.f32 %v2486, 1.442695
    %v2488 = vpow.pop %v2487
    %v2489 = vadd.f32 %v2488, 1.0
    %v2490 = vrcp.pop %v2489
    %v2491 = vmul.f32 %v2489, %v2490
    %v2492 = vsub.f32 1.0, %v2491
    %v2493 = vmul.f32 %v2490, %v2492
    %v2494 = vadd.f32 %v2490, %v2493
    %vm2495 = vweird.f32 %v2489
    %vm2496 = vweird.f32 %v2490
    %vm2497 = vmor %vm2495, %vm2496
    %v2498 = vsel %vm2497, %v2490, %v2494
    %v2499 = vand.u32 2147483647, %v2489
    %vm2500 = vcmp.eq.f32.partialorder %v2499, 8.507059e+37
    %v2501 = vand.u32 %v2489, 2147483648
    %v2502 = vor.u32 1.1754944e-38, %v2501
    %v2503 = vsel %vm2500, %v2502, %v2498
    %v2504 = vmul.f32 1.0, %v2503
    %v2505 = vtanh.pop %v2485
    %v2507 = vrot.slane %v2366, 2
    %v2509 = vmul.f32 %v2504, %v2507
    %2511 = vrot.lane.b32.xlu0 %v2505, 64
    %v2512 = vpop.permute.xlu0 %2511
    %v2514 = vmul.f32 %v2504, %v2512
    %2516 = vrot.lane.b32.xlu0 %v2514, 32
    %v2517 = vpop.permute.xlu0 %2516
    %v2519 = vadd.f32 %v2509, %v2517
    %v2520 = vtanh.pop %v2519
    %2522 = vrot.lane.b32.xlu0 %v2520, 64
    %v2523 = vpop.permute.xlu0 %2522
    %v2525 = vmul.f32 %v2504, %v2523
    %2527 = vrot.lane.b32.xlu0 %v2525, 64
    %v2528 = vpop.permute.xlu0 %2527
    %2530 = vst.msk [vmem:[#allocation2] sm:$0x30] %vm619, %v2528
    %v2531 = vld [vmem:[#allocation16] sm:$0xff]
    %v2532 = vld [vmem:[#allocation16 + $0x8] sm:$0xff]
    %v2533 = vld [vmem:[#allocation16 + $0x10] sm:$0xff]
    %v2534 = vld [vmem:[#allocation16 + $0x18] sm:$0xff]
    %v2535 = vrot.slane %v2447, 2
    %2536 = vrot.lane.b32.xlu0 %v2535, 32
    %v2537 = vpop.permute.xlu0 %2536
    %v2538 = vsel %vm263, %v2537, 0
    %2540 = vmatpush.msra.mxu0 0.0
    %2541 = vmatpush.msra.mxu0 0.0
    %2542 = vmatpush.msra.mxu0 0.0
    %2543 = vmatpush.msra.mxu0 0.0
    %2544 = vmatpush.msra.mxu0 0.0
    %2545 = vmatpush.msra.mxu0 0.0
    %2546 = vmatpush.msra.mxu0 0.0
    %2547 = vmatpush.msra.mxu0 0.0
    %2548 = vmatpush.msra.mxu0 0.0
    %2549 = vmatpush.msra.mxu0 0.0
    %2550 = vmatpush.msra.mxu0 0.0
    %2551 = vmatpush.msra.mxu0 0.0
    %2552 = vmatpush.msra.mxu0 %v2534
    %2553 = vmatpush.msra.mxu0 %v2533
    %2554 = vmatpush.msra.mxu0 %v2532
    %2555 = vmatpush.msra.mxu0 %v2531
    %2556 = vmatmul.f32.gmra.mxu0 %v2538
    %v2557 = vpop.f32.mrf.mxu0
    %v2558 = vadd.f32 0.0, %v2557
    %2559 = vdwg.mxu0
    %v2561 = vrot.slane %v2558, 4
    %v2563 = vadd.f32 %v1590, %v2561
    %v2564 = vxor.u32 %v2563, 2147483648
    %v2565 = vmul.f32 %v2564, 1.442695
    %v2566 = vpow.pop %v2565
    %v2567 = vadd.f32 %v2566, 1.0
    %v2568 = vrcp.pop %v2567
    %v2569 = vmul.f32 %v2567, %v2568
    %v2570 = vsub.f32 1.0, %v2569
    %v2571 = vmul.f32 %v2568, %v2570
    %v2572 = vadd.f32 %v2568, %v2571
    %vm2573 = vweird.f32 %v2567
    %vm2574 = vweird.f32 %v2568
    %vm2575 = vmor %vm2573, %vm2574
    %v2576 = vsel %vm2575, %v2568, %v2572
    %v2577 = vand.u32 2147483647, %v2567
    %vm2578 = vcmp.eq.f32.partialorder %v2577, 8.507059e+37
    %v2579 = vand.u32 %v2567, 2147483648
    %v2580 = vor.u32 1.1754944e-38, %v2579
    %v2581 = vsel %vm2578, %v2580, %v2576
    %v2582 = vmul.f32 1.0, %v2581
    %v2583 = vtanh.pop %v2563
    %v2585 = vrot.slane %v2441, 6
    %v2587 = vmul.f32 %v2582, %v2585
    %2589 = vrot.lane.b32.xlu0 %v2583, 64
    %v2590 = vpop.permute.xlu0 %2589
    %v2592 = vmul.f32 %v2582, %v2590
    %2594 = vrot.lane.b32.xlu0 %v2592, 32
    %v2595 = vpop.permute.xlu0 %2594
    %v2597 = vadd.f32 %v2587, %v2595
    %v2598 = vtanh.pop %v2597
    %2600 = vrot.lane.b32.xlu0 %v2598, 64
    %v2601 = vpop.permute.xlu0 %2600
    %v2603 = vmul.f32 %v2582, %v2601
    %2605 = vrot.lane.b32.xlu0 %v2603, 32
    %v2606 = vpop.permute.xlu0 %2605
    %2608 = vst.msk [vmem:[#allocation2 + $0x8] sm:$0x30] %vm698, %v2606
    %v2609 = vld [vmem:[#allocation17] sm:$0xff]
    %v2610 = vld [vmem:[#allocation17 + $0x8] sm:$0xff]
    %v2611 = vld [vmem:[#allocation17 + $0x10] sm:$0xff]
    %v2612 = vld [vmem:[#allocation17 + $0x18] sm:$0xff]
    %v2613 = vrot.slane %v2525, 4
    %2614 = vrot.lane.b32.xlu0 %v2613, 32
    %v2615 = vpop.permute.xlu0 %2614
    %v2616 = vsel %vm263, %v2615, 0
    %2618 = vmatpush.msra.mxu0 0.0
    %2619 = vmatpush.msra.mxu0 0.0
    %2620 = vmatpush.msra.mxu0 0.0
    %2621 = vmatpush.msra.mxu0 0.0
    %2622 = vmatpush.msra.mxu0 0.0
    %2623 = vmatpush.msra.mxu0 0.0
    %2624 = vmatpush.msra.mxu0 0.0
    %2625 = vmatpush.msra.mxu0 0.0
    %2626 = vmatpush.msra.mxu0 0.0
    %2627 = vmatpush.msra.mxu0 0.0
    %2628 = vmatpush.msra.mxu0 0.0
    %2629 = vmatpush.msra.mxu0 0.0
    %2630 = vmatpush.msra.mxu0 %v2612
    %2631 = vmatpush.msra.mxu0 %v2611
    %2632 = vmatpush.msra.mxu0 %v2610
    %2633 = vmatpush.msra.mxu0 %v2609
    %2634 = vmatmul.f32.gmra.mxu0 %v2616
    %v2635 = vpop.f32.mrf.mxu0
    %v2636 = vadd.f32 0.0, %v2635
    %2637 = vdwg.mxu0
    %v2639 = vrot.slane %v2636, 6
    %v2641 = vadd.f32 %v1622, %v2639
    %v2642 = vxor.u32 %v2641, 2147483648
    %v2643 = vmul.f32 %v2642, 1.442695
    %v2644 = vpow.pop %v2643
    %v2645 = vadd.f32 %v2644, 1.0
    %v2646 = vrcp.pop %v2645
    %v2647 = vmul.f32 %v2645, %v2646
    %v2648 = vsub.f32 1.0, %v2647
    %v2649 = vmul.f32 %v2646, %v2648
    %v2650 = vadd.f32 %v2646, %v2649
    %vm2651 = vweird.f32 %v2645
    %vm2652 = vweird.f32 %v2646
    %vm2653 = vmor %vm2651, %vm2652
    %v2654 = vsel %vm2653, %v2646, %v2650
    %v2655 = vand.u32 2147483647, %v2645
    %vm2656 = vcmp.eq.f32.partialorder %v2655, 8.507059e+37
    %v2657 = vand.u32 %v2645, 2147483648
    %v2658 = vor.u32 1.1754944e-38, %v2657
    %v2659 = vsel %vm2656, %v2658, %v2654
    %v2660 = vmul.f32 1.0, %v2659
    %v2661 = vtanh.pop %v2641
    %v2663 = vrot.slane %v2519, 2
    %v2665 = vmul.f32 %v2660, %v2663
    %2667 = vrot.lane.b32.xlu0 %v2661, 64
    %v2668 = vpop.permute.xlu0 %2667
    %v2670 = vmul.f32 %v2660, %v2668
    %2672 = vrot.lane.b32.xlu0 %v2670, 32
    %v2673 = vpop.permute.xlu0 %2672
    %v2675 = vadd.f32 %v2665, %v2673
    %v2676 = vtanh.pop %v2675
    %2678 = vrot.lane.b32.xlu0 %v2676, 64
    %v2679 = vpop.permute.xlu0 %2678
    %v2681 = vmul.f32 %v2660, %v2679
    %2683 = vrot.lane.b32.xlu0 %v2681, 64
    %v2684 = vpop.permute.xlu0 %2683
    %2686 = vst.msk [vmem:[#allocation2] sm:$0xc] %vm777, %v2684
    %v2687 = vld [vmem:[#allocation16] sm:$0xff]
    %v2688 = vld [vmem:[#allocation16 + $0x8] sm:$0xff]
    %v2689 = vld [vmem:[#allocation16 + $0x10] sm:$0xff]
    %v2690 = vld [vmem:[#allocation16 + $0x18] sm:$0xff]
    %v2691 = vrot.slane %v2603, 4
    %2692 = vrot.lane.b32.xlu0 %v2691, 32
    %v2693 = vpop.permute.xlu0 %2692
    %v2694 = vsel %vm263, %v2693, 0
    %2696 = vmatpush.msra.mxu0 0.0
    %2697 = vmatpush.msra.mxu0 0.0
    %2698 = vmatpush.msra.mxu0 0.0
    %2699 = vmatpush.msra.mxu0 0.0
    %2700 = vmatpush.msra.mxu0 0.0
    %2701 = vmatpush.msra.mxu0 0.0
    %2702 = vmatpush.msra.mxu0 0.0
    %2703 = vmatpush.msra.mxu0 0.0
    %2704 = vmatpush.msra.mxu0 0.0
    %2705 = vmatpush.msra.mxu0 0.0
    %2706 = vmatpush.msra.mxu0 0.0
    %2707 = vmatpush.msra.mxu0 0.0
    %2708 = vmatpush.msra.mxu0 %v2690
    %2709 = vmatpush.msra.mxu0 %v2689
    %2710 = vmatpush.msra.mxu0 %v2688
    %2711 = vmatpush.msra.mxu0 %v2687
    %2712 = vmatmul.f32.gmra.mxu0 %v2694
    %v2713 = vpop.f32.mrf.mxu0
    %v2714 = vadd.f32 0.0, %v2713
    %2715 = vdwg.mxu0
    %v2717 = vrot.slane %v2714, 2
    %v2719 = vadd.f32 %v1590, %v2717
    %v2720 = vxor.u32 %v2719, 2147483648
    %v2721 = vmul.f32 %v2720, 1.442695
    %v2722 = vpow.pop %v2721
    %v2723 = vadd.f32 %v2722, 1.0
    %v2724 = vrcp.pop %v2723
    %v2725 = vmul.f32 %v2723, %v2724
    %v2726 = vsub.f32 1.0, %v2725
    %v2727 = vmul.f32 %v2724, %v2726
    %v2728 = vadd.f32 %v2724, %v2727
    %vm2729 = vweird.f32 %v2723
    %vm2730 = vweird.f32 %v2724
    %vm2731 = vmor %vm2729, %vm2730
    %v2732 = vsel %vm2731, %v2724, %v2728
    %v2733 = vand.u32 2147483647, %v2723
    %vm2734 = vcmp.eq.f32.partialorder %v2733, 8.507059e+37
    %v2735 = vand.u32 %v2723, 2147483648
    %v2736 = vor.u32 1.1754944e-38, %v2735
    %v2737 = vsel %vm2734, %v2736, %v2732
    %v2738 = vmul.f32 1.0, %v2737
    %v2739 = vtanh.pop %v2719
    %v2741 = vrot.slane %v2597, 6
    %v2743 = vmul.f32 %v2738, %v2741
    %2745 = vrot.lane.b32.xlu0 %v2739, 64
    %v2746 = vpop.permute.xlu0 %2745
    %v2748 = vmul.f32 %v2738, %v2746
    %2750 = vrot.lane.b32.xlu0 %v2748, 32
    %v2751 = vpop.permute.xlu0 %2750
    %v2753 = vadd.f32 %v2743, %v2751
    %v2754 = vtanh.pop %v2753
    %2756 = vrot.lane.b32.xlu0 %v2754, 64
    %v2757 = vpop.permute.xlu0 %2756
    %v2759 = vmul.f32 %v2738, %v2757
    %2761 = vrot.lane.b32.xlu0 %v2759, 32
    %v2762 = vpop.permute.xlu0 %2761
    %2764 = vst.msk [vmem:[#allocation2 + $0x8] sm:$0xc0] %vm856, %v2762
    %v2765 = vld [vmem:[#allocation17] sm:$0xff]
    %v2766 = vld [vmem:[#allocation17 + $0x8] sm:$0xff]
    %v2767 = vld [vmem:[#allocation17 + $0x10] sm:$0xff]
    %v2768 = vld [vmem:[#allocation17 + $0x18] sm:$0xff]
    %v2769 = vrot.slane %v2681, 2
    %2770 = vrot.lane.b32.xlu0 %v2769, 32
    %v2771 = vpop.permute.xlu0 %2770
    %v2772 = vsel %vm263, %v2771, 0
    %2774 = vmatpush.msra.mxu0 0.0
    %2775 = vmatpush.msra.mxu0 0.0
    %2776 = vmatpush.msra.mxu0 0.0
    %2777 = vmatpush.msra.mxu0 0.0
    %2778 = vmatpush.msra.mxu0 0.0
    %2779 = vmatpush.msra.mxu0 0.0
    %2780 = vmatpush.msra.mxu0 0.0
    %2781 = vmatpush.msra.mxu0 0.0
    %2782 = vmatpush.msra.mxu0 0.0
    %2783 = vmatpush.msra.mxu0 0.0
    %2784 = vmatpush.msra.mxu0 0.0
    %2785 = vmatpush.msra.mxu0 0.0
    %2786 = vmatpush.msra.mxu0 %v2768
    %2787 = vmatpush.msra.mxu0 %v2767
    %2788 = vmatpush.msra.mxu0 %v2766
    %2789 = vmatpush.msra.mxu0 %v2765
    %2790 = vmatmul.f32.gmra.mxu0 %v2772
    %v2791 = vpop.f32.mrf.mxu0
    %v2792 = vadd.f32 0.0, %v2791
    %2793 = vdwg.mxu0
    %v2794 = vadd.f32 %v1622, %v2792
    %v2795 = vxor.u32 %v2794, 2147483648
    %v2796 = vmul.f32 %v2795, 1.442695
    %v2797 = vpow.pop %v2796
    %v2798 = vadd.f32 %v2797, 1.0
    %v2799 = vrcp.pop %v2798
    %v2800 = vmul.f32 %v2798, %v2799
    %v2801 = vsub.f32 1.0, %v2800
    %v2802 = vmul.f32 %v2799, %v2801
    %v2803 = vadd.f32 %v2799, %v2802
    %vm2804 = vweird.f32 %v2798
    %vm2805 = vweird.f32 %v2799
    %vm2806 = vmor %vm2804, %vm2805
    %v2807 = vsel %vm2806, %v2799, %v2803
    %v2808 = vand.u32 2147483647, %v2798
    %vm2809 = vcmp.eq.f32.partialorder %v2808, 8.507059e+37
    %v2810 = vand.u32 %v2798, 2147483648
    %v2811 = vor.u32 1.1754944e-38, %v2810
    %v2812 = vsel %vm2809, %v2811, %v2807
    %v2813 = vmul.f32 1.0, %v2812
    %v2814 = vtanh.pop %v2794
    %v2816 = vrot.slane %v2675, 2
    %v2818 = vmul.f32 %v2813, %v2816
    %2820 = vrot.lane.b32.xlu0 %v2814, 64
    %v2821 = vpop.permute.xlu0 %2820
    %v2823 = vmul.f32 %v2813, %v2821
    %2825 = vrot.lane.b32.xlu0 %v2823, 32
    %v2826 = vpop.permute.xlu0 %2825
    %v2828 = vadd.f32 %v2818, %v2826
    %v2829 = vtanh.pop %v2828
    %2831 = vrot.lane.b32.xlu0 %v2829, 64
    %v2832 = vpop.permute.xlu0 %2831
    %v2834 = vmul.f32 %v2813, %v2832
    %2836 = vrot.lane.b32.xlu0 %v2834, 64
    %v2837 = vpop.permute.xlu0 %2836
    %2839 = vst.msk [vmem:[#allocation2] sm:$0x3] %vm932, %v2837
    %v2840 = vld [vmem:[#allocation2] sm:$0xff]
    %v2841 = vld [vmem:[#allocation2 + $0x8] sm:$0xff]
    %v2842 = vld [vmem:[%s13] sm:$0xff]
    %v2843 = vld [vmem:[%s13 + $0x8] sm:$0xff]
    %v2844 = vld [vmem:[%s13 + $0x10] sm:$0xff]
    %v2845 = vld [vmem:[%s13 + $0x18] sm:$0xff]
    %v2846 = vld [vmem:[%s13 + $0x20] sm:$0xff]
    %v2847 = vld [vmem:[%s13 + $0x28] sm:$0xff]
    %v2848 = vld [vmem:[%s13 + $0x30] sm:$0xff]
    %v2849 = vld [vmem:[%s13 + $0x38] sm:$0xff]
    %v2850 = vld [vmem:[%s15] sm:$0x1]
    %v2852 = vperm.slane %v2850, 0
    %v2855 = vsel %vm1562, %v2840, 0
    %v2858 = vsel %vm1562, %v2841, 0
    %2860 = vmatpush.msra.mxu0 0.0
    %2861 = vmatpush.msra.mxu0 0.0
    %2862 = vmatpush.msra.mxu0 0.0
    %2863 = vmatpush.msra.mxu0 0.0
    %2864 = vmatpush.msra.mxu0 0.0
    %2865 = vmatpush.msra.mxu0 0.0
    %2866 = vmatpush.msra.mxu0 0.0
    %2867 = vmatpush.msra.mxu0 0.0
    %2868 = vmatpush.msra.mxu0 %v2849
    %2869 = vmatpush.msra.mxu0 %v2848
    %2870 = vmatpush.msra.mxu0 %v2847
    %2871 = vmatpush.msra.mxu0 %v2846
    %2872 = vmatpush.msra.mxu0 %v2845
    %2873 = vmatpush.msra.mxu0 %v2844
    %2874 = vmatpush.msra.mxu0 %v2843
    %2875 = vmatpush.msra.mxu0 %v2842
    %2876 = vmatmul.f32.gmra.mxu0 %v2855
    %v2877 = vpop.f32.mrf.mxu0
    %v2878 = vadd.f32 %v2852, %v2877
    %2879 = vmatmul.f32.gmra.mxu0 %v2858
    %v2880 = vpop.f32.mrf.mxu0
    %v2881 = vadd.f32 %v2852, %v2880
    %2882 = vdwg.mxu0
    %v2883 = vld [vmem:[#allocation20] sm:$0xff]
    %v2884 = vld [vmem:[#allocation20 + $0x8] sm:$0xff]
    %v2885 = vld [vmem:[#allocation20 + $0x10] sm:$0xff]
    %v2886 = vld [vmem:[#allocation20 + $0x18] sm:$0xff]
    %v2887 = vld [vmem:[#allocation20 + $0x20] sm:$0xff]
    %v2888 = vld [vmem:[#allocation20 + $0x28] sm:$0xff]
    %v2889 = vld [vmem:[#allocation20 + $0x30] sm:$0xff]
    %v2890 = vld [vmem:[#allocation20 + $0x38] sm:$0xff]
    %v2891 = vld [vmem:[%s18] sm:$0x1]
    %v2893 = vperm.slane %v2891, 0
    %2895 = vmatpush.msra.mxu0 0.0
    %2896 = vmatpush.msra.mxu0 0.0
    %2897 = vmatpush.msra.mxu0 0.0
    %2898 = vmatpush.msra.mxu0 0.0
    %2899 = vmatpush.msra.mxu0 0.0
    %2900 = vmatpush.msra.mxu0 0.0
    %2901 = vmatpush.msra.mxu0 0.0
    %2902 = vmatpush.msra.mxu0 0.0
    %2903 = vmatpush.msra.mxu0 %v2890
    %2904 = vmatpush.msra.mxu0 %v2889
    %2905 = vmatpush.msra.mxu0 %v2888
    %2906 = vmatpush.msra.mxu0 %v2887
    %2907 = vmatpush.msra.mxu0 %v2886
    %2908 = vmatpush.msra.mxu0 %v2885
    %2909 = vmatpush.msra.mxu0 %v2884
    %2910 = vmatpush.msra.mxu0 %v2883
    %2911 = vmatmul.f32.gmra.mxu0 %v2855
    %v2912 = vpop.f32.mrf.mxu0
    %v2913 = vadd.f32 %v2893, %v2912
    %2914 = vmatmul.f32.gmra.mxu0 %v2858
    %v2915 = vpop.f32.mrf.mxu0
    %v2916 = vadd.f32 %v2893, %v2915
    %2917 = vdwg.mxu0
    %v2918 = vld [vmem:[#allocation19] sm:$0xff]
    %v2919 = vld [vmem:[#allocation19 + $0x8] sm:$0xff]
    %v2920 = vld [vmem:[#allocation19 + $0x10] sm:$0xff]
    %v2921 = vld [vmem:[#allocation19 + $0x18] sm:$0xff]
    %2922 = vmatpush.msra.mxu0 0.0
    %2923 = vmatpush.msra.mxu0 0.0
    %2924 = vmatpush.msra.mxu0 0.0
    %2925 = vmatpush.msra.mxu0 0.0
    %2926 = vmatpush.msra.mxu0 0.0
    %2927 = vmatpush.msra.mxu0 0.0
    %2928 = vmatpush.msra.mxu0 0.0
    %2929 = vmatpush.msra.mxu0 0.0
    %2930 = vmatpush.msra.mxu0 0.0
    %2931 = vmatpush.msra.mxu0 0.0
    %2932 = vmatpush.msra.mxu0 0.0
    %2933 = vmatpush.msra.mxu0 0.0
    %2934 = vmatpush.msra.mxu0 %v2921
    %2935 = vmatpush.msra.mxu0 %v2920
    %2936 = vmatpush.msra.mxu0 %v2919
    %2937 = vmatpush.msra.mxu0 %v2918
    %2938 = vmatmul.f32.gmra.mxu0 %v329
    %v2939 = vpop.f32.mrf.mxu0
    %v2940 = vadd.f32 0.0, %v2939
    %2941 = vdwg.mxu0
    %v2942 = vadd.f32 %v2878, %v2940
    %v2943 = vxor.u32 %v2942, 2147483648
    %v2944 = vmul.f32 %v2943, 1.442695
    %v2945 = vpow.pop %v2944
    %v2946 = vadd.f32 %v2945, 1.0
    %v2947 = vrcp.pop %v2946
    %v2948 = vmul.f32 %v2946, %v2947
    %v2949 = vsub.f32 1.0, %v2948
    %v2950 = vmul.f32 %v2947, %v2949
    %v2951 = vadd.f32 %v2947, %v2950
    %vm2952 = vweird.f32 %v2946
    %vm2953 = vweird.f32 %v2947
    %vm2954 = vmor %vm2952, %vm2953
    %v2955 = vsel %vm2954, %v2947, %v2951
    %v2956 = vand.u32 2147483647, %v2946
    %vm2957 = vcmp.eq.f32.partialorder %v2956, 8.507059e+37
    %v2958 = vand.u32 %v2946, 2147483648
    %v2959 = vor.u32 1.1754944e-38, %v2958
    %v2960 = vsel %vm2957, %v2959, %v2955
    %v2961 = vmul.f32 1.0, %v2960
    %v2962 = vtanh.pop %v2942
    %v2963 = vmul.f32 %v2961, 0.0
    %2965 = vrot.lane.b32.xlu0 %v2962, 64
    %v2966 = vpop.permute.xlu0 %2965
    %v2968 = vmul.f32 %v2961, %v2966
    %2970 = vrot.lane.b32.xlu0 %v2968, 32
    %v2971 = vpop.permute.xlu0 %2970
    %v2973 = vadd.f32 %v2963, %v2971
    %v2974 = vtanh.pop %v2973
    %2976 = vrot.lane.b32.xlu0 %v2974, 64
    %v2977 = vpop.permute.xlu0 %2976
    %v2979 = vmul.f32 %v2961, %v2977
    %2981 = vrot.lane.b32.xlu0 %v2979, 32
    %v2982 = vpop.permute.xlu0 %2981
    %2984 = vst.msk [vmem:[#allocation2] sm:$0x3] %vm393, %v2982
    %v2985 = vld [vmem:[#allocation22] sm:$0xff]
    %v2986 = vld [vmem:[#allocation22 + $0x8] sm:$0xff]
    %v2987 = vld [vmem:[#allocation22 + $0x10] sm:$0xff]
    %v2988 = vld [vmem:[#allocation22 + $0x18] sm:$0xff]
    %2989 = vmatpush.msra.mxu0 0.0
    %2990 = vmatpush.msra.mxu0 0.0
    %2991 = vmatpush.msra.mxu0 0.0
    %2992 = vmatpush.msra.mxu0 0.0
    %2993 = vmatpush.msra.mxu0 0.0
    %2994 = vmatpush.msra.mxu0 0.0
    %2995 = vmatpush.msra.mxu0 0.0
    %2996 = vmatpush.msra.mxu0 0.0
    %2997 = vmatpush.msra.mxu0 0.0
    %2998 = vmatpush.msra.mxu0 0.0
    %2999 = vmatpush.msra.mxu0 0.0
    %3000 = vmatpush.msra.mxu0 0.0
    %3001 = vmatpush.msra.mxu0 %v2988
    %3002 = vmatpush.msra.mxu0 %v2987
    %3003 = vmatpush.msra.mxu0 %v2986
    %3004 = vmatpush.msra.mxu0 %v2985
    %3005 = vmatmul.f32.gmra.mxu0 %v329
    %v3006 = vpop.f32.mrf.mxu0
    %v3007 = vadd.f32 0.0, %v3006
    %3008 = vdwg.mxu0
    %v3010 = vrot.slane %v3007, 2
    %v3012 = vadd.f32 %v2916, %v3010
    %v3013 = vxor.u32 %v3012, 2147483648
    %v3014 = vmul.f32 %v3013, 1.442695
    %v3015 = vpow.pop %v3014
    %v3016 = vadd.f32 %v3015, 1.0
    %v3017 = vrcp.pop %v3016
    %v3018 = vmul.f32 %v3016, %v3017
    %v3019 = vsub.f32 1.0, %v3018
    %v3020 = vmul.f32 %v3017, %v3019
    %v3021 = vadd.f32 %v3017, %v3020
    %vm3022 = vweird.f32 %v3016
    %vm3023 = vweird.f32 %v3017
    %vm3024 = vmor %vm3022, %vm3023
    %v3025 = vsel %vm3024, %v3017, %v3021
    %v3026 = vand.u32 2147483647, %v3016
    %vm3027 = vcmp.eq.f32.partialorder %v3026, 8.507059e+37
    %v3028 = vand.u32 %v3016, 2147483648
    %v3029 = vor.u32 1.1754944e-38, %v3028
    %v3030 = vsel %vm3027, %v3029, %v3025
    %v3031 = vmul.f32 1.0, %v3030
    %v3032 = vtanh.pop %v3012
    %v3033 = vmul.f32 %v3031, 0.0
    %3035 = vrot.lane.b32.xlu0 %v3032, 64
    %v3036 = vpop.permute.xlu0 %3035
    %v3038 = vmul.f32 %v3031, %v3036
    %3040 = vrot.lane.b32.xlu0 %v3038, 32
    %v3041 = vpop.permute.xlu0 %3040
    %v3043 = vadd.f32 %v3033, %v3041
    %v3044 = vtanh.pop %v3043
    %3046 = vrot.lane.b32.xlu0 %v3044, 64
    %v3047 = vpop.permute.xlu0 %3046
    %v3049 = vmul.f32 %v3031, %v3047
    %3051 = vrot.lane.b32.xlu0 %v3049, 64
    %v3052 = vpop.permute.xlu0 %3051
    %3054 = vst.msk [vmem:[#allocation2 + $0x8] sm:$0xc0] %vm464, %v3052
    %v3055 = vld [vmem:[#allocation19] sm:$0xff]
    %v3056 = vld [vmem:[#allocation19 + $0x8] sm:$0xff]
    %v3057 = vld [vmem:[#allocation19 + $0x10] sm:$0xff]
    %v3058 = vld [vmem:[#allocation19 + $0x18] sm:$0xff]
    %v3059 = vsel %vm263, %v2982, 0
    %3061 = vmatpush.msra.mxu0 0.0
    %3062 = vmatpush.msra.mxu0 0.0
    %3063 = vmatpush.msra.mxu0 0.0
    %3064 = vmatpush.msra.mxu0 0.0
    %3065 = vmatpush.msra.mxu0 0.0
    %3066 = vmatpush.msra.mxu0 0.0
    %3067 = vmatpush.msra.mxu0 0.0
    %3068 = vmatpush.msra.mxu0 0.0
    %3069 = vmatpush.msra.mxu0 0.0
    %3070 = vmatpush.msra.mxu0 0.0
    %3071 = vmatpush.msra.mxu0 0.0
    %3072 = vmatpush.msra.mxu0 0.0
    %3073 = vmatpush.msra.mxu0 %v3058
    %3074 = vmatpush.msra.mxu0 %v3057
    %3075 = vmatpush.msra.mxu0 %v3056
    %3076 = vmatpush.msra.mxu0 %v3055
    %3077 = vmatmul.f32.gmra.mxu0 %v3059
    %v3078 = vpop.f32.mrf.mxu0
    %v3079 = vadd.f32 0.0, %v3078
    %3080 = vdwg.mxu0
    %v3082 = vrot.slane %v3079, 6
    %v3084 = vadd.f32 %v2878, %v3082
    %v3085 = vxor.u32 %v3084, 2147483648
    %v3086 = vmul.f32 %v3085, 1.442695
    %v3087 = vpow.pop %v3086
    %v3088 = vadd.f32 %v3087, 1.0
    %v3089 = vrcp.pop %v3088
    %v3090 = vmul.f32 %v3088, %v3089
    %v3091 = vsub.f32 1.0, %v3090
    %v3092 = vmul.f32 %v3089, %v3091
    %v3093 = vadd.f32 %v3089, %v3092
    %vm3094 = vweird.f32 %v3088
    %vm3095 = vweird.f32 %v3089
    %vm3096 = vmor %vm3094, %vm3095
    %v3097 = vsel %vm3096, %v3089, %v3093
    %v3098 = vand.u32 2147483647, %v3088
    %vm3099 = vcmp.eq.f32.partialorder %v3098, 8.507059e+37
    %v3100 = vand.u32 %v3088, 2147483648
    %v3101 = vor.u32 1.1754944e-38, %v3100
    %v3102 = vsel %vm3099, %v3101, %v3097
    %v3103 = vmul.f32 1.0, %v3102
    %v3104 = vtanh.pop %v3084
    %v3106 = vrot.slane %v2973, 6
    %v3108 = vmul.f32 %v3103, %v3106
    %3110 = vrot.lane.b32.xlu0 %v3104, 64
    %v3111 = vpop.permute.xlu0 %3110
    %v3113 = vmul.f32 %v3103, %v3111
    %3115 = vrot.lane.b32.xlu0 %v3113, 32
    %v3116 = vpop.permute.xlu0 %3115
    %v3118 = vadd.f32 %v3108, %v3116
    %v3119 = vtanh.pop %v3118
    %3121 = vrot.lane.b32.xlu0 %v3119, 64
    %v3122 = vpop.permute.xlu0 %3121
    %v3124 = vmul.f32 %v3103, %v3122
    %3126 = vrot.lane.b32.xlu0 %v3124, 32
    %v3127 = vpop.permute.xlu0 %3126
    %3129 = vst.msk [vmem:[#allocation2] sm:$0xc] %vm540, %v3127
    %v3130 = vld [vmem:[#allocation22] sm:$0xff]
    %v3131 = vld [vmem:[#allocation22 + $0x8] sm:$0xff]
    %v3132 = vld [vmem:[#allocation22 + $0x10] sm:$0xff]
    %v3133 = vld [vmem:[#allocation22 + $0x18] sm:$0xff]
    %v3134 = vrot.slane %v3049, 6
    %3135 = vrot.lane.b32.xlu0 %v3134, 32
    %v3136 = vpop.permute.xlu0 %3135
    %v3137 = vsel %vm263, %v3136, 0
    %3139 = vmatpush.msra.mxu0 0.0
    %3140 = vmatpush.msra.mxu0 0.0
    %3141 = vmatpush.msra.mxu0 0.0
    %3142 = vmatpush.msra.mxu0 0.0
    %3143 = vmatpush.msra.mxu0 0.0
    %3144 = vmatpush.msra.mxu0 0.0
    %3145 = vmatpush.msra.mxu0 0.0
    %3146 = vmatpush.msra.mxu0 0.0
    %3147 = vmatpush.msra.mxu0 0.0
    %3148 = vmatpush.msra.mxu0 0.0
    %3149 = vmatpush.msra.mxu0 0.0
    %3150 = vmatpush.msra.mxu0 0.0
    %3151 = vmatpush.msra.mxu0 %v3133
    %3152 = vmatpush.msra.mxu0 %v3132
    %3153 = vmatpush.msra.mxu0 %v3131
    %3154 = vmatpush.msra.mxu0 %v3130
    %3155 = vmatmul.f32.gmra.mxu0 %v3137
    %v3156 = vpop.f32.mrf.mxu0
    %v3157 = vadd.f32 0.0, %v3156
    %3158 = vdwg.mxu0
    %v3160 = vrot.slane %v3157, 4
    %v3162 = vadd.f32 %v2916, %v3160
    %v3163 = vxor.u32 %v3162, 2147483648
    %v3164 = vmul.f32 %v3163, 1.442695
    %v3165 = vpow.pop %v3164
    %v3166 = vadd.f32 %v3165, 1.0
    %v3167 = vrcp.pop %v3166
    %v3168 = vmul.f32 %v3166, %v3167
    %v3169 = vsub.f32 1.0, %v3168
    %v3170 = vmul.f32 %v3167, %v3169
    %v3171 = vadd.f32 %v3167, %v3170
    %vm3172 = vweird.f32 %v3166
    %vm3173 = vweird.f32 %v3167
    %vm3174 = vmor %vm3172, %vm3173
    %v3175 = vsel %vm3174, %v3167, %v3171
    %v3176 = vand.u32 2147483647, %v3166
    %vm3177 = vcmp.eq.f32.partialorder %v3176, 8.507059e+37
    %v3178 = vand.u32 %v3166, 2147483648
    %v3179 = vor.u32 1.1754944e-38, %v3178
    %v3180 = vsel %vm3177, %v3179, %v3175
    %v3181 = vmul.f32 1.0, %v3180
    %v3182 = vtanh.pop %v3162
    %v3184 = vrot.slane %v3043, 2
    %v3186 = vmul.f32 %v3181, %v3184
    %3188 = vrot.lane.b32.xlu0 %v3182, 64
    %v3189 = vpop.permute.xlu0 %3188
    %v3191 = vmul.f32 %v3181, %v3189
    %3193 = vrot.lane.b32.xlu0 %v3191, 32
    %v3194 = vpop.permute.xlu0 %3193
    %v3196 = vadd.f32 %v3186, %v3194
    %v3197 = vtanh.pop %v3196
    %3199 = vrot.lane.b32.xlu0 %v3197, 64
    %v3200 = vpop.permute.xlu0 %3199
    %v3202 = vmul.f32 %v3181, %v3200
    %3204 = vrot.lane.b32.xlu0 %v3202, 64
    %v3205 = vpop.permute.xlu0 %3204
    %3207 = vst.msk [vmem:[#allocation2 + $0x8] sm:$0x30] %vm619, %v3205
    %v3208 = vld [vmem:[#allocation19] sm:$0xff]
    %v3209 = vld [vmem:[#allocation19 + $0x8] sm:$0xff]
    %v3210 = vld [vmem:[#allocation19 + $0x10] sm:$0xff]
    %v3211 = vld [vmem:[#allocation19 + $0x18] sm:$0xff]
    %v3212 = vrot.slane %v3124, 2
    %3213 = vrot.lane.b32.xlu0 %v3212, 32
    %v3214 = vpop.permute.xlu0 %3213
    %v3215 = vsel %vm263, %v3214, 0
    %3217 = vmatpush.msra.mxu0 0.0
    %3218 = vmatpush.msra.mxu0 0.0
    %3219 = vmatpush.msra.mxu0 0.0
    %3220 = vmatpush.msra.mxu0 0.0
    %3221 = vmatpush.msra.mxu0 0.0
    %3222 = vmatpush.msra.mxu0 0.0
    %3223 = vmatpush.msra.mxu0 0.0
    %3224 = vmatpush.msra.mxu0 0.0
    %3225 = vmatpush.msra.mxu0 0.0
    %3226 = vmatpush.msra.mxu0 0.0
    %3227 = vmatpush.msra.mxu0 0.0
    %3228 = vmatpush.msra.mxu0 0.0
    %3229 = vmatpush.msra.mxu0 %v3211
    %3230 = vmatpush.msra.mxu0 %v3210
    %3231 = vmatpush.msra.mxu0 %v3209
    %3232 = vmatpush.msra.mxu0 %v3208
    %3233 = vmatmul.f32.gmra.mxu0 %v3215
    %v3234 = vpop.f32.mrf.mxu0
    %v3235 = vadd.f32 0.0, %v3234
    %3236 = vdwg.mxu0
    %v3238 = vrot.slane %v3235, 4
    %v3240 = vadd.f32 %v2878, %v3238
    %v3241 = vxor.u32 %v3240, 2147483648
    %v3242 = vmul.f32 %v3241, 1.442695
    %v3243 = vpow.pop %v3242
    %v3244 = vadd.f32 %v3243, 1.0
    %v3245 = vrcp.pop %v3244
    %v3246 = vmul.f32 %v3244, %v3245
    %v3247 = vsub.f32 1.0, %v3246
    %v3248 = vmul.f32 %v3245, %v3247
    %v3249 = vadd.f32 %v3245, %v3248
    %vm3250 = vweird.f32 %v3244
    %vm3251 = vweird.f32 %v3245
    %vm3252 = vmor %vm3250, %vm3251
    %v3253 = vsel %vm3252, %v3245, %v3249
    %v3254 = vand.u32 2147483647, %v3244
    %vm3255 = vcmp.eq.f32.partialorder %v3254, 8.507059e+37
    %v3256 = vand.u32 %v3244, 2147483648
    %v3257 = vor.u32 1.1754944e-38, %v3256
    %v3258 = vsel %vm3255, %v3257, %v3253
    %v3259 = vmul.f32 1.0, %v3258
    %v3260 = vtanh.pop %v3240
    %v3262 = vrot.slane %v3118, 6
    %v3264 = vmul.f32 %v3259, %v3262
    %3266 = vrot.lane.b32.xlu0 %v3260, 64
    %v3267 = vpop.permute.xlu0 %3266
    %v3269 = vmul.f32 %v3259, %v3267
    %3271 = vrot.lane.b32.xlu0 %v3269, 32
    %v3272 = vpop.permute.xlu0 %3271
    %v3274 = vadd.f32 %v3264, %v3272
    %v3275 = vtanh.pop %v3274
    %3277 = vrot.lane.b32.xlu0 %v3275, 64
    %v3278 = vpop.permute.xlu0 %3277
    %v3280 = vmul.f32 %v3259, %v3278
    %3282 = vrot.lane.b32.xlu0 %v3280, 32
    %v3283 = vpop.permute.xlu0 %3282
    %3285 = vst.msk [vmem:[#allocation2] sm:$0x30] %vm698, %v3283
    %v3286 = vld [vmem:[#allocation22] sm:$0xff]
    %v3287 = vld [vmem:[#allocation22 + $0x8] sm:$0xff]
    %v3288 = vld [vmem:[#allocation22 + $0x10] sm:$0xff]
    %v3289 = vld [vmem:[#allocation22 + $0x18] sm:$0xff]
    %v3290 = vrot.slane %v3202, 4
    %3291 = vrot.lane.b32.xlu0 %v3290, 32
    %v3292 = vpop.permute.xlu0 %3291
    %v3293 = vsel %vm263, %v3292, 0
    %3295 = vmatpush.msra.mxu0 0.0
    %3296 = vmatpush.msra.mxu0 0.0
    %3297 = vmatpush.msra.mxu0 0.0
    %3298 = vmatpush.msra.mxu0 0.0
    %3299 = vmatpush.msra.mxu0 0.0
    %3300 = vmatpush.msra.mxu0 0.0
    %3301 = vmatpush.msra.mxu0 0.0
    %3302 = vmatpush.msra.mxu0 0.0
    %3303 = vmatpush.msra.mxu0 0.0
    %3304 = vmatpush.msra.mxu0 0.0
    %3305 = vmatpush.msra.mxu0 0.0
    %3306 = vmatpush.msra.mxu0 0.0
    %3307 = vmatpush.msra.mxu0 %v3289
    %3308 = vmatpush.msra.mxu0 %v3288
    %3309 = vmatpush.msra.mxu0 %v3287
    %3310 = vmatpush.msra.mxu0 %v3286
    %3311 = vmatmul.f32.gmra.mxu0 %v3293
    %v3312 = vpop.f32.mrf.mxu0
    %v3313 = vadd.f32 0.0, %v3312
    %3314 = vdwg.mxu0
    %v3316 = vrot.slane %v3313, 6
    %v3318 = vadd.f32 %v2916, %v3316
    %v3319 = vxor.u32 %v3318, 2147483648
    %v3320 = vmul.f32 %v3319, 1.442695
    %v3321 = vpow.pop %v3320
    %v3322 = vadd.f32 %v3321, 1.0
    %v3323 = vrcp.pop %v3322
    %v3324 = vmul.f32 %v3322, %v3323
    %v3325 = vsub.f32 1.0, %v3324
    %v3326 = vmul.f32 %v3323, %v3325
    %v3327 = vadd.f32 %v3323, %v3326
    %vm3328 = vweird.f32 %v3322
    %vm3329 = vweird.f32 %v3323
    %vm3330 = vmor %vm3328, %vm3329
    %v3331 = vsel %vm3330, %v3323, %v3327
    %v3332 = vand.u32 2147483647, %v3322
    %vm3333 = vcmp.eq.f32.partialorder %v3332, 8.507059e+37
    %v3334 = vand.u32 %v3322, 2147483648
    %v3335 = vor.u32 1.1754944e-38, %v3334
    %v3336 = vsel %vm3333, %v3335, %v3331
    %v3337 = vmul.f32 1.0, %v3336
    %v3338 = vtanh.pop %v3318
    %v3340 = vrot.slane %v3196, 2
    %v3342 = vmul.f32 %v3337, %v3340
    %3344 = vrot.lane.b32.xlu0 %v3338, 64
    %v3345 = vpop.permute.xlu0 %3344
    %v3347 = vmul.f32 %v3337, %v3345
    %3349 = vrot.lane.b32.xlu0 %v3347, 32
    %v3350 = vpop.permute.xlu0 %3349
    %v3352 = vadd.f32 %v3342, %v3350
    %v3353 = vtanh.pop %v3352
    %3355 = vrot.lane.b32.xlu0 %v3353, 64
    %v3356 = vpop.permute.xlu0 %3355
    %v3358 = vmul.f32 %v3337, %v3356
    %3360 = vrot.lane.b32.xlu0 %v3358, 64
    %v3361 = vpop.permute.xlu0 %3360
    %3363 = vst.msk [vmem:[#allocation2 + $0x8] sm:$0xc] %vm777, %v3361
    %v3364 = vld [vmem:[#allocation19] sm:$0xff]
    %v3365 = vld [vmem:[#allocation19 + $0x8] sm:$0xff]
    %v3366 = vld [vmem:[#allocation19 + $0x10] sm:$0xff]
    %v3367 = vld [vmem:[#allocation19 + $0x18] sm:$0xff]
    %v3368 = vrot.slane %v3280, 4
    %3369 = vrot.lane.b32.xlu0 %v3368, 32
    %v3370 = vpop.permute.xlu0 %3369
    %v3371 = vsel %vm263, %v3370, 0
    %3373 = vmatpush.msra.mxu0 0.0
    %3374 = vmatpush.msra.mxu0 0.0
    %3375 = vmatpush.msra.mxu0 0.0
    %3376 = vmatpush.msra.mxu0 0.0
    %3377 = vmatpush.msra.mxu0 0.0
    %3378 = vmatpush.msra.mxu0 0.0
    %3379 = vmatpush.msra.mxu0 0.0
    %3380 = vmatpush.msra.mxu0 0.0
    %3381 = vmatpush.msra.mxu0 0.0
    %3382 = vmatpush.msra.mxu0 0.0
    %3383 = vmatpush.msra.mxu0 0.0
    %3384 = vmatpush.msra.mxu0 0.0
    %3385 = vmatpush.msra.mxu0 %v3367
    %3386 = vmatpush.msra.mxu0 %v3366
    %3387 = vmatpush.msra.mxu0 %v3365
    %3388 = vmatpush.msra.mxu0 %v3364
    %3389 = vmatmul.f32.gmra.mxu0 %v3371
    %v3390 = vpop.f32.mrf.mxu0
    %v3391 = vadd.f32 0.0, %v3390
    %3392 = vdwg.mxu0
    %v3394 = vrot.slane %v3391, 2
    %v3396 = vadd.f32 %v2878, %v3394
    %v3397 = vxor.u32 %v3396, 2147483648
    %v3398 = vmul.f32 %v3397, 1.442695
    %v3399 = vpow.pop %v3398
    %v3400 = vadd.f32 %v3399, 1.0
    %v3401 = vrcp.pop %v3400
    %v3402 = vmul.f32 %v3400, %v3401
    %v3403 = vsub.f32 1.0, %v3402
    %v3404 = vmul.f32 %v3401, %v3403
    %v3405 = vadd.f32 %v3401, %v3404
    %vm3406 = vweird.f32 %v3400
    %vm3407 = vweird.f32 %v3401
    %vm3408 = vmor %vm3406, %vm3407
    %v3409 = vsel %vm3408, %v3401, %v3405
    %v3410 = vand.u32 2147483647, %v3400
    %vm3411 = vcmp.eq.f32.partialorder %v3410, 8.507059e+37
    %v3412 = vand.u32 %v3400, 2147483648
    %v3413 = vor.u32 1.1754944e-38, %v3412
    %v3414 = vsel %vm3411, %v3413, %v3409
    %v3415 = vmul.f32 1.0, %v3414
    %v3416 = vtanh.pop %v3396
    %v3418 = vrot.slane %v3274, 6
    %v3420 = vmul.f32 %v3415, %v3418
    %3422 = vrot.lane.b32.xlu0 %v3416, 64
    %v3423 = vpop.permute.xlu0 %3422
    %v3425 = vmul.f32 %v3415, %v3423
    %3427 = vrot.lane.b32.xlu0 %v3425, 32
    %v3428 = vpop.permute.xlu0 %3427
    %v3430 = vadd.f32 %v3420, %v3428
    %v3431 = vtanh.pop %v3430
    %3433 = vrot.lane.b32.xlu0 %v3431, 64
    %v3434 = vpop.permute.xlu0 %3433
    %v3436 = vmul.f32 %v3415, %v3434
    %3438 = vrot.lane.b32.xlu0 %v3436, 32
    %v3439 = vpop.permute.xlu0 %3438
    %3441 = vst.msk [vmem:[#allocation2] sm:$0xc0] %vm856, %v3439
    %v3442 = vld [vmem:[#allocation22] sm:$0xff]
    %v3443 = vld [vmem:[#allocation22 + $0x8] sm:$0xff]
    %v3444 = vld [vmem:[#allocation22 + $0x10] sm:$0xff]
    %v3445 = vld [vmem:[#allocation22 + $0x18] sm:$0xff]
    %v3446 = vrot.slane %v3358, 2
    %3447 = vrot.lane.b32.xlu0 %v3446, 32
    %v3448 = vpop.permute.xlu0 %3447
    %v3449 = vsel %vm263, %v3448, 0
    %3451 = vmatpush.msra.mxu0 0.0
    %3452 = vmatpush.msra.mxu0 0.0
    %3453 = vmatpush.msra.mxu0 0.0
    %3454 = vmatpush.msra.mxu0 0.0
    %3455 = vmatpush.msra.mxu0 0.0
    %3456 = vmatpush.msra.mxu0 0.0
    %3457 = vmatpush.msra.mxu0 0.0
    %3458 = vmatpush.msra.mxu0 0.0
    %3459 = vmatpush.msra.mxu0 0.0
    %3460 = vmatpush.msra.mxu0 0.0
    %3461 = vmatpush.msra.mxu0 0.0
    %3462 = vmatpush.msra.mxu0 0.0
    %3463 = vmatpush.msra.mxu0 %v3445
    %3464 = vmatpush.msra.mxu0 %v3444
    %3465 = vmatpush.msra.mxu0 %v3443
    %3466 = vmatpush.msra.mxu0 %v3442
    %3467 = vmatmul.f32.gmra.mxu0 %v3449
    %v3468 = vpop.f32.mrf.mxu0
    %v3469 = vadd.f32 0.0, %v3468
    %3470 = vdwg.mxu0
    %v3471 = vadd.f32 %v2916, %v3469
    %v3472 = vxor.u32 %v3471, 2147483648
    %v3473 = vmul.f32 %v3472, 1.442695
    %v3474 = vpow.pop %v3473
    %v3475 = vadd.f32 %v3474, 1.0
    %v3476 = vrcp.pop %v3475
    %v3477 = vmul.f32 %v3475, %v3476
    %v3478 = vsub.f32 1.0, %v3477
    %v3479 = vmul.f32 %v3476, %v3478
    %v3480 = vadd.f32 %v3476, %v3479
    %vm3481 = vweird.f32 %v3475
    %vm3482 = vweird.f32 %v3476
    %vm3483 = vmor %vm3481, %vm3482
    %v3484 = vsel %vm3483, %v3476, %v3480
    %v3485 = vand.u32 2147483647, %v3475
    %vm3486 = vcmp.eq.f32.partialorder %v3485, 8.507059e+37
    %v3487 = vand.u32 %v3475, 2147483648
    %v3488 = vor.u32 1.1754944e-38, %v3487
    %v3489 = vsel %vm3486, %v3488, %v3484
    %v3490 = vmul.f32 1.0, %v3489
    %v3491 = vtanh.pop %v3471
    %v3493 = vrot.slane %v3352, 2
    %v3495 = vmul.f32 %v3490, %v3493
    %3497 = vrot.lane.b32.xlu0 %v3491, 64
    %v3498 = vpop.permute.xlu0 %3497
    %v3500 = vmul.f32 %v3490, %v3498
    %3502 = vrot.lane.b32.xlu0 %v3500, 32
    %v3503 = vpop.permute.xlu0 %3502
    %v3505 = vadd.f32 %v3495, %v3503
    %v3506 = vtanh.pop %v3505
    %3508 = vrot.lane.b32.xlu0 %v3506, 64
    %v3509 = vpop.permute.xlu0 %3508
    %v3511 = vmul.f32 %v3490, %v3509
    %3513 = vrot.lane.b32.xlu0 %v3511, 64
    %v3514 = vpop.permute.xlu0 %3513
    %3516 = vst.msk [vmem:[#allocation2 + $0x8] sm:$0x3] %vm932, %v3514
    %v3517 = vld [vmem:[#allocation19] sm:$0xff]
    %v3518 = vld [vmem:[#allocation19 + $0x8] sm:$0xff]
    %v3519 = vld [vmem:[#allocation19 + $0x10] sm:$0xff]
    %v3520 = vld [vmem:[#allocation19 + $0x18] sm:$0xff]
    %v3521 = vrot.slane %v3436, 6
    %3522 = vrot.lane.b32.xlu0 %v3521, 32
    %v3523 = vpop.permute.xlu0 %3522
    %v3524 = vsel %vm263, %v3523, 0
    %3526 = vmatpush.msra.mxu0 0.0
    %3527 = vmatpush.msra.mxu0 0.0
    %3528 = vmatpush.msra.mxu0 0.0
    %3529 = vmatpush.msra.mxu0 0.0
    %3530 = vmatpush.msra.mxu0 0.0
    %3531 = vmatpush.msra.mxu0 0.0
    %3532 = vmatpush.msra.mxu0 0.0
    %3533 = vmatpush.msra.mxu0 0.0
    %3534 = vmatpush.msra.mxu0 0.0
    %3535 = vmatpush.msra.mxu0 0.0
    %3536 = vmatpush.msra.mxu0 0.0
    %3537 = vmatpush.msra.mxu0 0.0
    %3538 = vmatpush.msra.mxu0 %v3520
    %3539 = vmatpush.msra.mxu0 %v3519
    %3540 = vmatpush.msra.mxu0 %v3518
    %3541 = vmatpush.msra.mxu0 %v3517
    %3542 = vmatmul.f32.gmra.mxu0 %v3524
    %v3543 = vpop.f32.mrf.mxu0
    %v3544 = vadd.f32 0.0, %v3543
    %3545 = vdwg.mxu0
    %v3546 = vadd.f32 %v2881, %v3544
    %v3547 = vxor.u32 %v3546, 2147483648
    %v3548 = vmul.f32 %v3547, 1.442695
    %v3549 = vpow.pop %v3548
    %v3550 = vadd.f32 %v3549, 1.0
    %v3551 = vrcp.pop %v3550
    %v3552 = vmul.f32 %v3550, %v3551
    %v3553 = vsub.f32 1.0, %v3552
    %v3554 = vmul.f32 %v3551, %v3553
    %v3555 = vadd.f32 %v3551, %v3554
    %vm3556 = vweird.f32 %v3550
    %vm3557 = vweird.f32 %v3551
    %vm3558 = vmor %vm3556, %vm3557
    %v3559 = vsel %vm3558, %v3551, %v3555
    %v3560 = vand.u32 2147483647, %v3550
    %vm3561 = vcmp.eq.f32.partialorder %v3560, 8.507059e+37
    %v3562 = vand.u32 %v3550, 2147483648
    %v3563 = vor.u32 1.1754944e-38, %v3562
    %v3564 = vsel %vm3561, %v3563, %v3559
    %v3565 = vmul.f32 1.0, %v3564
    %v3566 = vtanh.pop %v3546
    %v3568 = vrot.slane %v3430, 6
    %v3570 = vmul.f32 %v3565, %v3568
    %3572 = vrot.lane.b32.xlu0 %v3566, 64
    %v3573 = vpop.permute.xlu0 %3572
    %v3575 = vmul.f32 %v3565, %v3573
    %3577 = vrot.lane.b32.xlu0 %v3575, 32
    %v3578 = vpop.permute.xlu0 %3577
    %v3580 = vadd.f32 %v3570, %v3578
    %v3581 = vtanh.pop %v3580
    %3583 = vrot.lane.b32.xlu0 %v3581, 64
    %v3584 = vpop.permute.xlu0 %3583
    %v3586 = vmul.f32 %v3565, %v3584
    %3588 = vrot.lane.b32.xlu0 %v3586, 32
    %v3589 = vpop.permute.xlu0 %3588
    %3591 = vst.msk [vmem:[#allocation2 + $0x8] sm:$0x3] %vm393, %v3589
    %v3592 = vld [vmem:[#allocation22] sm:$0xff]
    %v3593 = vld [vmem:[#allocation22 + $0x8] sm:$0xff]
    %v3594 = vld [vmem:[#allocation22 + $0x10] sm:$0xff]
    %v3595 = vld [vmem:[#allocation22 + $0x18] sm:$0xff]
    %3596 = vrot.lane.b32.xlu0 %v3511, 32
    %v3597 = vpop.permute.xlu0 %3596
    %v3598 = vsel %vm263, %v3597, 0
    %3600 = vmatpush.msra.mxu0 0.0
    %3601 = vmatpush.msra.mxu0 0.0
    %3602 = vmatpush.msra.mxu0 0.0
    %3603 = vmatpush.msra.mxu0 0.0
    %3604 = vmatpush.msra.mxu0 0.0
    %3605 = vmatpush.msra.mxu0 0.0
    %3606 = vmatpush.msra.mxu0 0.0
    %3607 = vmatpush.msra.mxu0 0.0
    %3608 = vmatpush.msra.mxu0 0.0
    %3609 = vmatpush.msra.mxu0 0.0
    %3610 = vmatpush.msra.mxu0 0.0
    %3611 = vmatpush.msra.mxu0 0.0
    %3612 = vmatpush.msra.mxu0 %v3595
    %3613 = vmatpush.msra.mxu0 %v3594
    %3614 = vmatpush.msra.mxu0 %v3593
    %3615 = vmatpush.msra.mxu0 %v3592
    %3616 = vmatmul.f32.gmra.mxu0 %v3598
    %v3617 = vpop.f32.mrf.mxu0
    %v3618 = vadd.f32 0.0, %v3617
    %3619 = vdwg.mxu0
    %v3621 = vrot.slane %v3618, 2
    %v3623 = vadd.f32 %v2913, %v3621
    %v3624 = vxor.u32 %v3623, 2147483648
    %v3625 = vmul.f32 %v3624, 1.442695
    %v3626 = vpow.pop %v3625
    %v3627 = vadd.f32 %v3626, 1.0
    %v3628 = vrcp.pop %v3627
    %v3629 = vmul.f32 %v3627, %v3628
    %v3630 = vsub.f32 1.0, %v3629
    %v3631 = vmul.f32 %v3628, %v3630
    %v3632 = vadd.f32 %v3628, %v3631
    %vm3633 = vweird.f32 %v3627
    %vm3634 = vweird.f32 %v3628
    %vm3635 = vmor %vm3633, %vm3634
    %v3636 = vsel %vm3635, %v3628, %v3632
    %v3637 = vand.u32 2147483647, %v3627
    %vm3638 = vcmp.eq.f32.partialorder %v3637, 8.507059e+37
    %v3639 = vand.u32 %v3627, 2147483648
    %v3640 = vor.u32 1.1754944e-38, %v3639
    %v3641 = vsel %vm3638, %v3640, %v3636
    %v3642 = vmul.f32 1.0, %v3641
    %v3643 = vtanh.pop %v3623
    %v3645 = vrot.slane %v3505, 2
    %v3647 = vmul.f32 %v3642, %v3645
    %3649 = vrot.lane.b32.xlu0 %v3643, 64
    %v3650 = vpop.permute.xlu0 %3649
    %v3652 = vmul.f32 %v3642, %v3650
    %3654 = vrot.lane.b32.xlu0 %v3652, 32
    %v3655 = vpop.permute.xlu0 %3654
    %v3657 = vadd.f32 %v3647, %v3655
    %v3658 = vtanh.pop %v3657
    %3660 = vrot.lane.b32.xlu0 %v3658, 64
    %v3661 = vpop.permute.xlu0 %3660
    %v3663 = vmul.f32 %v3642, %v3661
    %3665 = vrot.lane.b32.xlu0 %v3663, 64
    %v3666 = vpop.permute.xlu0 %3665
    %3668 = vst.msk [vmem:[#allocation2] sm:$0xc0] %vm464, %v3666
    %v3669 = vld [vmem:[#allocation19] sm:$0xff]
    %v3670 = vld [vmem:[#allocation19 + $0x8] sm:$0xff]
    %v3671 = vld [vmem:[#allocation19 + $0x10] sm:$0xff]
    %v3672 = vld [vmem:[#allocation19 + $0x18] sm:$0xff]
    %v3673 = vsel %vm263, %v3589, 0
    %3675 = vmatpush.msra.mxu0 0.0
    %3676 = vmatpush.msra.mxu0 0.0
    %3677 = vmatpush.msra.mxu0 0.0
    %3678 = vmatpush.msra.mxu0 0.0
    %3679 = vmatpush.msra.mxu0 0.0
    %3680 = vmatpush.msra.mxu0 0.0
    %3681 = vmatpush.msra.mxu0 0.0
    %3682 = vmatpush.msra.mxu0 0.0
    %3683 = vmatpush.msra.mxu0 0.0
    %3684 = vmatpush.msra.mxu0 0.0
    %3685 = vmatpush.msra.mxu0 0.0
    %3686 = vmatpush.msra.mxu0 0.0
    %3687 = vmatpush.msra.mxu0 %v3672
    %3688 = vmatpush.msra.mxu0 %v3671
    %3689 = vmatpush.msra.mxu0 %v3670
    %3690 = vmatpush.msra.mxu0 %v3669
    %3691 = vmatmul.f32.gmra.mxu0 %v3673
    %v3692 = vpop.f32.mrf.mxu0
    %v3693 = vadd.f32 0.0, %v3692
    %3694 = vdwg.mxu0
    %v3696 = vrot.slane %v3693, 6
    %v3698 = vadd.f32 %v2881, %v3696
    %v3699 = vxor.u32 %v3698, 2147483648
    %v3700 = vmul.f32 %v3699, 1.442695
    %v3701 = vpow.pop %v3700
    %v3702 = vadd.f32 %v3701, 1.0
    %v3703 = vrcp.pop %v3702
    %v3704 = vmul.f32 %v3702, %v3703
    %v3705 = vsub.f32 1.0, %v3704
    %v3706 = vmul.f32 %v3703, %v3705
    %v3707 = vadd.f32 %v3703, %v3706
    %vm3708 = vweird.f32 %v3702
    %vm3709 = vweird.f32 %v3703
    %vm3710 = vmor %vm3708, %vm3709
    %v3711 = vsel %vm3710, %v3703, %v3707
    %v3712 = vand.u32 2147483647, %v3702
    %vm3713 = vcmp.eq.f32.partialorder %v3712, 8.507059e+37
    %v3714 = vand.u32 %v3702, 2147483648
    %v3715 = vor.u32 1.1754944e-38, %v3714
    %v3716 = vsel %vm3713, %v3715, %v3711
    %v3717 = vmul.f32 1.0, %v3716
    %v3718 = vtanh.pop %v3698
    %v3720 = vrot.slane %v3580, 6
    %v3722 = vmul.f32 %v3717, %v3720
    %3724 = vrot.lane.b32.xlu0 %v3718, 64
    %v3725 = vpop.permute.xlu0 %3724
    %v3727 = vmul.f32 %v3717, %v3725
    %3729 = vrot.lane.b32.xlu0 %v3727, 32
    %v3730 = vpop.permute.xlu0 %3729
    %v3732 = vadd.f32 %v3722, %v3730
    %v3733 = vtanh.pop %v3732
    %3735 = vrot.lane.b32.xlu0 %v3733, 64
    %v3736 = vpop.permute.xlu0 %3735
    %v3738 = vmul.f32 %v3717, %v3736
    %3740 = vrot.lane.b32.xlu0 %v3738, 32
    %v3741 = vpop.permute.xlu0 %3740
    %3743 = vst.msk [vmem:[#allocation2 + $0x8] sm:$0xc] %vm540, %v3741
    %v3744 = vld [vmem:[#allocation22] sm:$0xff]
    %v3745 = vld [vmem:[#allocation22 + $0x8] sm:$0xff]
    %v3746 = vld [vmem:[#allocation22 + $0x10] sm:$0xff]
    %v3747 = vld [vmem:[#allocation22 + $0x18] sm:$0xff]
    %v3748 = vrot.slane %v3663, 6
    %3749 = vrot.lane.b32.xlu0 %v3748, 32
    %v3750 = vpop.permute.xlu0 %3749
    %v3751 = vsel %vm263, %v3750, 0
    %3753 = vmatpush.msra.mxu0 0.0
    %3754 = vmatpush.msra.mxu0 0.0
    %3755 = vmatpush.msra.mxu0 0.0
    %3756 = vmatpush.msra.mxu0 0.0
    %3757 = vmatpush.msra.mxu0 0.0
    %3758 = vmatpush.msra.mxu0 0.0
    %3759 = vmatpush.msra.mxu0 0.0
    %3760 = vmatpush.msra.mxu0 0.0
    %3761 = vmatpush.msra.mxu0 0.0
    %3762 = vmatpush.msra.mxu0 0.0
    %3763 = vmatpush.msra.mxu0 0.0
    %3764 = vmatpush.msra.mxu0 0.0
    %3765 = vmatpush.msra.mxu0 %v3747
    %3766 = vmatpush.msra.mxu0 %v3746
    %3767 = vmatpush.msra.mxu0 %v3745
    %3768 = vmatpush.msra.mxu0 %v3744
    %3769 = vmatmul.f32.gmra.mxu0 %v3751
    %v3770 = vpop.f32.mrf.mxu0
    %v3771 = vadd.f32 0.0, %v3770
    %3772 = vdwg.mxu0
    %v3774 = vrot.slane %v3771, 4
    %v3776 = vadd.f32 %v2913, %v3774
    %v3777 = vxor.u32 %v3776, 2147483648
    %v3778 = vmul.f32 %v3777, 1.442695
    %v3779 = vpow.pop %v3778
    %v3780 = vadd.f32 %v3779, 1.0
    %v3781 = vrcp.pop %v3780
    %v3782 = vmul.f32 %v3780, %v3781
    %v3783 = vsub.f32 1.0, %v3782
    %v3784 = vmul.f32 %v3781, %v3783
    %v3785 = vadd.f32 %v3781, %v3784
    %vm3786 = vweird.f32 %v3780
    %vm3787 = vweird.f32 %v3781
    %vm3788 = vmor %vm3786, %vm3787
    %v3789 = vsel %vm3788, %v3781, %v3785
    %v3790 = vand.u32 2147483647, %v3780
    %vm3791 = vcmp.eq.f32.partialorder %v3790, 8.507059e+37
    %v3792 = vand.u32 %v3780, 2147483648
    %v3793 = vor.u32 1.1754944e-38, %v3792
    %v3794 = vsel %vm3791, %v3793, %v3789
    %v3795 = vmul.f32 1.0, %v3794
    %v3796 = vtanh.pop %v3776
    %v3798 = vrot.slane %v3657, 2
    %v3800 = vmul.f32 %v3795, %v3798
    %3802 = vrot.lane.b32.xlu0 %v3796, 64
    %v3803 = vpop.permute.xlu0 %3802
    %v3805 = vmul.f32 %v3795, %v3803
    %3807 = vrot.lane.b32.xlu0 %v3805, 32
    %v3808 = vpop.permute.xlu0 %3807
    %v3810 = vadd.f32 %v3800, %v3808
    %v3811 = vtanh.pop %v3810
    %3813 = vrot.lane.b32.xlu0 %v3811, 64
    %v3814 = vpop.permute.xlu0 %3813
    %v3816 = vmul.f32 %v3795, %v3814
    %3818 = vrot.lane.b32.xlu0 %v3816, 64
    %v3819 = vpop.permute.xlu0 %3818
    %3821 = vst.msk [vmem:[#allocation2] sm:$0x30] %vm619, %v3819
    %v3822 = vld [vmem:[#allocation19] sm:$0xff]
    %v3823 = vld [vmem:[#allocation19 + $0x8] sm:$0xff]
    %v3824 = vld [vmem:[#allocation19 + $0x10] sm:$0xff]
    %v3825 = vld [vmem:[#allocation19 + $0x18] sm:$0xff]
    %v3826 = vrot.slane %v3738, 2
    %3827 = vrot.lane.b32.xlu0 %v3826, 32
    %v3828 = vpop.permute.xlu0 %3827
    %v3829 = vsel %vm263, %v3828, 0
    %3831 = vmatpush.msra.mxu0 0.0
    %3832 = vmatpush.msra.mxu0 0.0
    %3833 = vmatpush.msra.mxu0 0.0
    %3834 = vmatpush.msra.mxu0 0.0
    %3835 = vmatpush.msra.mxu0 0.0
    %3836 = vmatpush.msra.mxu0 0.0
    %3837 = vmatpush.msra.mxu0 0.0
    %3838 = vmatpush.msra.mxu0 0.0
    %3839 = vmatpush.msra.mxu0 0.0
    %3840 = vmatpush.msra.mxu0 0.0
    %3841 = vmatpush.msra.mxu0 0.0
    %3842 = vmatpush.msra.mxu0 0.0
    %3843 = vmatpush.msra.mxu0 %v3825
    %3844 = vmatpush.msra.mxu0 %v3824
    %3845 = vmatpush.msra.mxu0 %v3823
    %3846 = vmatpush.msra.mxu0 %v3822
    %3847 = vmatmul.f32.gmra.mxu0 %v3829
    %v3848 = vpop.f32.mrf.mxu0
    %v3849 = vadd.f32 0.0, %v3848
    %3850 = vdwg.mxu0
    %v3852 = vrot.slane %v3849, 4
    %v3854 = vadd.f32 %v2881, %v3852
    %v3855 = vxor.u32 %v3854, 2147483648
    %v3856 = vmul.f32 %v3855, 1.442695
    %v3857 = vpow.pop %v3856
    %v3858 = vadd.f32 %v3857, 1.0
    %v3859 = vrcp.pop %v3858
    %v3860 = vmul.f32 %v3858, %v3859
    %v3861 = vsub.f32 1.0, %v3860
    %v3862 = vmul.f32 %v3859, %v3861
    %v3863 = vadd.f32 %v3859, %v3862
    %vm3864 = vweird.f32 %v3858
    %vm3865 = vweird.f32 %v3859
    %vm3866 = vmor %vm3864, %vm3865
    %v3867 = vsel %vm3866, %v3859, %v3863
    %v3868 = vand.u32 2147483647, %v3858
    %vm3869 = vcmp.eq.f32.partialorder %v3868, 8.507059e+37
    %v3870 = vand.u32 %v3858, 2147483648
    %v3871 = vor.u32 1.1754944e-38, %v3870
    %v3872 = vsel %vm3869, %v3871, %v3867
    %v3873 = vmul.f32 1.0, %v3872
    %v3874 = vtanh.pop %v3854
    %v3876 = vrot.slane %v3732, 6
    %v3878 = vmul.f32 %v3873, %v3876
    %3880 = vrot.lane.b32.xlu0 %v3874, 64
    %v3881 = vpop.permute.xlu0 %3880
    %v3883 = vmul.f32 %v3873, %v3881
    %3885 = vrot.lane.b32.xlu0 %v3883, 32
    %v3886 = vpop.permute.xlu0 %3885
    %v3888 = vadd.f32 %v3878, %v3886
    %v3889 = vtanh.pop %v3888
    %3891 = vrot.lane.b32.xlu0 %v3889, 64
    %v3892 = vpop.permute.xlu0 %3891
    %v3894 = vmul.f32 %v3873, %v3892
    %3896 = vrot.lane.b32.xlu0 %v3894, 32
    %v3897 = vpop.permute.xlu0 %3896
    %3899 = vst.msk [vmem:[#allocation2 + $0x8] sm:$0x30] %vm698, %v3897
    %v3900 = vld [vmem:[#allocation22] sm:$0xff]
    %v3901 = vld [vmem:[#allocation22 + $0x8] sm:$0xff]
    %v3902 = vld [vmem:[#allocation22 + $0x10] sm:$0xff]
    %v3903 = vld [vmem:[#allocation22 + $0x18] sm:$0xff]
    %v3904 = vrot.slane %v3816, 4
    %3905 = vrot.lane.b32.xlu0 %v3904, 32
    %v3906 = vpop.permute.xlu0 %3905
    %v3907 = vsel %vm263, %v3906, 0
    %3909 = vmatpush.msra.mxu0 0.0
    %3910 = vmatpush.msra.mxu0 0.0
    %3911 = vmatpush.msra.mxu0 0.0
    %3912 = vmatpush.msra.mxu0 0.0
    %3913 = vmatpush.msra.mxu0 0.0
    %3914 = vmatpush.msra.mxu0 0.0
    %3915 = vmatpush.msra.mxu0 0.0
    %3916 = vmatpush.msra.mxu0 0.0
    %3917 = vmatpush.msra.mxu0 0.0
    %3918 = vmatpush.msra.mxu0 0.0
    %3919 = vmatpush.msra.mxu0 0.0
    %3920 = vmatpush.msra.mxu0 0.0
    %3921 = vmatpush.msra.mxu0 %v3903
    %3922 = vmatpush.msra.mxu0 %v3902
    %3923 = vmatpush.msra.mxu0 %v3901
    %3924 = vmatpush.msra.mxu0 %v3900
    %3925 = vmatmul.f32.gmra.mxu0 %v3907
    %v3926 = vpop.f32.mrf.mxu0
    %v3927 = vadd.f32 0.0, %v3926
    %3928 = vdwg.mxu0
    %v3930 = vrot.slane %v3927, 6
    %v3932 = vadd.f32 %v2913, %v3930
    %v3933 = vxor.u32 %v3932, 2147483648
    %v3934 = vmul.f32 %v3933, 1.442695
    %v3935 = vpow.pop %v3934
    %v3936 = vadd.f32 %v3935, 1.0
    %v3937 = vrcp.pop %v3936
    %v3938 = vmul.f32 %v3936, %v3937
    %v3939 = vsub.f32 1.0, %v3938
    %v3940 = vmul.f32 %v3937, %v3939
    %v3941 = vadd.f32 %v3937, %v3940
    %vm3942 = vweird.f32 %v3936
    %vm3943 = vweird.f32 %v3937
    %vm3944 = vmor %vm3942, %vm3943
    %v3945 = vsel %vm3944, %v3937, %v3941
    %v3946 = vand.u32 2147483647, %v3936
    %vm3947 = vcmp.eq.f32.partialorder %v3946, 8.507059e+37
    %v3948 = vand.u32 %v3936, 2147483648
    %v3949 = vor.u32 1.1754944e-38, %v3948
    %v3950 = vsel %vm3947, %v3949, %v3945
    %v3951 = vmul.f32 1.0, %v3950
    %v3952 = vtanh.pop %v3932
    %v3954 = vrot.slane %v3810, 2
    %v3956 = vmul.f32 %v3951, %v3954
    %3958 = vrot.lane.b32.xlu0 %v3952, 64
    %v3959 = vpop.permute.xlu0 %3958
    %v3961 = vmul.f32 %v3951, %v3959
    %3963 = vrot.lane.b32.xlu0 %v3961, 32
    %v3964 = vpop.permute.xlu0 %3963
    %v3966 = vadd.f32 %v3956, %v3964
    %v3967 = vtanh.pop %v3966
    %3969 = vrot.lane.b32.xlu0 %v3967, 64
    %v3970 = vpop.permute.xlu0 %3969
    %v3972 = vmul.f32 %v3951, %v3970
    %3974 = vrot.lane.b32.xlu0 %v3972, 64
    %v3975 = vpop.permute.xlu0 %3974
    %3977 = vst.msk [vmem:[#allocation2] sm:$0xc] %vm777, %v3975
    %v3978 = vld [vmem:[#allocation19] sm:$0xff]
    %v3979 = vld [vmem:[#allocation19 + $0x8] sm:$0xff]
    %v3980 = vld [vmem:[#allocation19 + $0x10] sm:$0xff]
    %v3981 = vld [vmem:[#allocation19 + $0x18] sm:$0xff]
    %v3982 = vrot.slane %v3894, 4
    %3983 = vrot.lane.b32.xlu0 %v3982, 32
    %v3984 = vpop.permute.xlu0 %3983
    %v3985 = vsel %vm263, %v3984, 0
    %3987 = vmatpush.msra.mxu0 0.0
    %3988 = vmatpush.msra.mxu0 0.0
    %3989 = vmatpush.msra.mxu0 0.0
    %3990 = vmatpush.msra.mxu0 0.0
    %3991 = vmatpush.msra.mxu0 0.0
    %3992 = vmatpush.msra.mxu0 0.0
    %3993 = vmatpush.msra.mxu0 0.0
    %3994 = vmatpush.msra.mxu0 0.0
    %3995 = vmatpush.msra.mxu0 0.0
    %3996 = vmatpush.msra.mxu0 0.0
    %3997 = vmatpush.msra.mxu0 0.0
    %3998 = vmatpush.msra.mxu0 0.0
    %3999 = vmatpush.msra.mxu0 %v3981
    %4000 = vmatpush.msra.mxu0 %v3980
    %4001 = vmatpush.msra.mxu0 %v3979
    %4002 = vmatpush.msra.mxu0 %v3978
    %4003 = vmatmul.f32.gmra.mxu0 %v3985
    %v4004 = vpop.f32.mrf.mxu0
    %v4005 = vadd.f32 0.0, %v4004
    %4006 = vdwg.mxu0
    %v4008 = vrot.slane %v4005, 2
    %v4010 = vadd.f32 %v2881, %v4008
    %v4011 = vxor.u32 %v4010, 2147483648
    %v4012 = vmul.f32 %v4011, 1.442695
    %v4013 = vpow.pop %v4012
    %v4014 = vadd.f32 %v4013, 1.0
    %v4015 = vrcp.pop %v4014
    %v4016 = vmul.f32 %v4014, %v4015
    %v4017 = vsub.f32 1.0, %v4016
    %v4018 = vmul.f32 %v4015, %v4017
    %v4019 = vadd.f32 %v4015, %v4018
    %vm4020 = vweird.f32 %v4014
    %vm4021 = vweird.f32 %v4015
    %vm4022 = vmor %vm4020, %vm4021
    %v4023 = vsel %vm4022, %v4015, %v4019
    %v4024 = vand.u32 2147483647, %v4014
    %vm4025 = vcmp.eq.f32.partialorder %v4024, 8.507059e+37
    %v4026 = vand.u32 %v4014, 2147483648
    %v4027 = vor.u32 1.1754944e-38, %v4026
    %v4028 = vsel %vm4025, %v4027, %v4023
    %v4029 = vmul.f32 1.0, %v4028
    %v4030 = vtanh.pop %v4010
    %v4032 = vrot.slane %v3888, 6
    %v4034 = vmul.f32 %v4029, %v4032
    %4036 = vrot.lane.b32.xlu0 %v4030, 64
    %v4037 = vpop.permute.xlu0 %4036
    %v4039 = vmul.f32 %v4029, %v4037
    %4041 = vrot.lane.b32.xlu0 %v4039, 32
    %v4042 = vpop.permute.xlu0 %4041
    %v4044 = vadd.f32 %v4034, %v4042
    %v4045 = vtanh.pop %v4044
    %4047 = vrot.lane.b32.xlu0 %v4045, 64
    %v4048 = vpop.permute.xlu0 %4047
    %v4050 = vmul.f32 %v4029, %v4048
    %4052 = vrot.lane.b32.xlu0 %v4050, 32
    %v4053 = vpop.permute.xlu0 %4052
    %4055 = vst.msk [vmem:[#allocation2 + $0x8] sm:$0xc0] %vm856, %v4053
    %v4056 = vld [vmem:[#allocation22] sm:$0xff]
    %v4057 = vld [vmem:[#allocation22 + $0x8] sm:$0xff]
    %v4058 = vld [vmem:[#allocation22 + $0x10] sm:$0xff]
    %v4059 = vld [vmem:[#allocation22 + $0x18] sm:$0xff]
    %v4060 = vrot.slane %v3972, 2
    %4061 = vrot.lane.b32.xlu0 %v4060, 32
    %v4062 = vpop.permute.xlu0 %4061
    %v4063 = vsel %vm263, %v4062, 0
    %4065 = vmatpush.msra.mxu0 0.0
    %4066 = vmatpush.msra.mxu0 0.0
    %4067 = vmatpush.msra.mxu0 0.0
    %4068 = vmatpush.msra.mxu0 0.0
    %4069 = vmatpush.msra.mxu0 0.0
    %4070 = vmatpush.msra.mxu0 0.0
    %4071 = vmatpush.msra.mxu0 0.0
    %4072 = vmatpush.msra.mxu0 0.0
    %4073 = vmatpush.msra.mxu0 0.0
    %4074 = vmatpush.msra.mxu0 0.0
    %4075 = vmatpush.msra.mxu0 0.0
    %4076 = vmatpush.msra.mxu0 0.0
    %4077 = vmatpush.msra.mxu0 %v4059
    %4078 = vmatpush.msra.mxu0 %v4058
    %4079 = vmatpush.msra.mxu0 %v4057
    %4080 = vmatpush.msra.mxu0 %v4056
    %4081 = vmatmul.f32.gmra.mxu0 %v4063
    %v4082 = vpop.f32.mrf.mxu0
    %v4083 = vadd.f32 0.0, %v4082
    %4084 = vdwg.mxu0
    %v4085 = vadd.f32 %v2913, %v4083
    %v4086 = vxor.u32 %v4085, 2147483648
    %v4087 = vmul.f32 %v4086, 1.442695
    %v4088 = vpow.pop %v4087
    %v4089 = vadd.f32 %v4088, 1.0
    %v4090 = vrcp.pop %v4089
    %v4091 = vmul.f32 %v4089, %v4090
    %v4092 = vsub.f32 1.0, %v4091
    %v4093 = vmul.f32 %v4090, %v4092
    %v4094 = vadd.f32 %v4090, %v4093
    %vm4095 = vweird.f32 %v4089
    %vm4096 = vweird.f32 %v4090
    %vm4097 = vmor %vm4095, %vm4096
    %v4098 = vsel %vm4097, %v4090, %v4094
    %v4099 = vand.u32 2147483647, %v4089
    %vm4100 = vcmp.eq.f32.partialorder %v4099, 8.507059e+37
    %v4101 = vand.u32 %v4089, 2147483648
    %v4102 = vor.u32 1.1754944e-38, %v4101
    %v4103 = vsel %vm4100, %v4102, %v4098
    %v4104 = vmul.f32 1.0, %v4103
    %v4105 = vtanh.pop %v4085
    %v4107 = vrot.slane %v3966, 2
    %v4109 = vmul.f32 %v4104, %v4107
    %4111 = vrot.lane.b32.xlu0 %v4105, 64
    %v4112 = vpop.permute.xlu0 %4111
    %v4114 = vmul.f32 %v4104, %v4112
    %4116 = vrot.lane.b32.xlu0 %v4114, 32
    %v4117 = vpop.permute.xlu0 %4116
    %v4119 = vadd.f32 %v4109, %v4117
    %v4120 = vtanh.pop %v4119
    %4122 = vrot.lane.b32.xlu0 %v4120, 64
    %v4123 = vpop.permute.xlu0 %4122
    %v4125 = vmul.f32 %v4104, %v4123
    %4127 = vrot.lane.b32.xlu0 %v4125, 64
    %v4128 = vpop.permute.xlu0 %4127
    %4130 = vst.msk [vmem:[#allocation2] sm:$0x3] %vm932, %v4128
    %v4131 = vld [vmem:[#allocation2] sm:$0xff]
    %v4132 = vld [vmem:[#allocation2 + $0x8] sm:$0xff]
    %v4133 = vld [vmem:[%s19] sm:$0xff]
    %v4134 = vld [vmem:[%s19 + $0x8] sm:$0xff]
    %v4135 = vld [vmem:[%s19 + $0x10] sm:$0xff]
    %v4136 = vld [vmem:[%s19 + $0x18] sm:$0xff]
    %v4137 = vld [vmem:[%s19 + $0x20] sm:$0xff]
    %v4138 = vld [vmem:[%s19 + $0x28] sm:$0xff]
    %v4139 = vld [vmem:[%s19 + $0x30] sm:$0xff]
    %v4140 = vld [vmem:[%s19 + $0x38] sm:$0xff]
    %v4141 = vld [vmem:[#allocation4] sm:$0x1]
    %v4143 = vperm.slane %v4141, 0
    %v4146 = vsel %vm1562, %v4131, 0
    %v4149 = vsel %vm1562, %v4132, 0
    %4151 = vmatpush.msra.mxu0 0.0
    %4152 = vmatpush.msra.mxu0 0.0
    %4153 = vmatpush.msra.mxu0 0.0
    %4154 = vmatpush.msra.mxu0 0.0
    %4155 = vmatpush.msra.mxu0 0.0
    %4156 = vmatpush.msra.mxu0 0.0
    %4157 = vmatpush.msra.mxu0 0.0
    %4158 = vmatpush.msra.mxu0 0.0
    %4159 = vmatpush.msra.mxu0 %v4140
    %4160 = vmatpush.msra.mxu0 %v4139
    %4161 = vmatpush.msra.mxu0 %v4138
    %4162 = vmatpush.msra.mxu0 %v4137
    %4163 = vmatpush.msra.mxu0 %v4136
    %4164 = vmatpush.msra.mxu0 %v4135
    %4165 = vmatpush.msra.mxu0 %v4134
    %4166 = vmatpush.msra.mxu0 %v4133
    %4167 = vmatmul.f32.gmra.mxu0 %v4146
    %v4168 = vpop.f32.mrf.mxu0
    %v4169 = vadd.f32 %v4143, %v4168
    %4170 = vmatmul.f32.gmra.mxu0 %v4149
    %v4171 = vpop.f32.mrf.mxu0
    %v4172 = vadd.f32 %v4143, %v4171
    %4173 = vdwg.mxu0
    %v4174 = vtanh.pop %v4169
    %v4175 = vtanh.pop %v4172
    %vm4176 = vcmask 1024
    %4177 = vst.msk [vmem:[#allocation3] sm:$0x3] %vm4176, %v4174
    %4179 = vrot.lane.b32.xlu0 %v4174, 1
    %v4180 = vpop.permute.xlu0 %4179
    %vm4182 = vcmask 11274
    %4183 = vst.msk [vmem:[#allocation3 - $0x2] sm:$0xc] %vm4182, %v4180
    %4184 = vrot.lane.b32.xlu0 %v4174, 2
    %v4185 = vpop.permute.xlu0 %4184
    %vm4187 = vcmask 21524
    %4188 = vst.msk [vmem:[#allocation3 - $0x4] sm:$0x30] %vm4187, %v4185
    %4189 = vrot.lane.b32.xlu0 %v4174, 3
    %v4190 = vpop.permute.xlu0 %4189
    %vm4192 = vcmask 31774
    %4193 = vst.msk [vmem:[#allocation3 - $0x6] sm:$0xc0] %vm4192, %v4190
    %4195 = vrot.lane.b32.xlu0 %v4175, 4
    %v4196 = vpop.permute.xlu0 %4195
    %vm4198 = vcmask 33824
    %4199 = vst.msk [vmem:[#allocation3] sm:$0x3] %vm4198, %v4196
    %4200 = vrot.lane.b32.xlu0 %v4175, 5
    %v4201 = vpop.permute.xlu0 %4200
    %vm4203 = vcmask 44074
    %4204 = vst.msk [vmem:[#allocation3 - $0x2] sm:$0xc] %vm4203, %v4201
    %4205 = vrot.lane.b32.xlu0 %v4175, 6
    %v4206 = vpop.permute.xlu0 %4205
    %vm4208 = vcmask 54324
    %4209 = vst.msk [vmem:[#allocation3 - $0x4] sm:$0x30] %vm4208, %v4206
    %4210 = vrot.lane.b32.xlu0 %v4175, 7
    %v4211 = vpop.permute.xlu0 %4210
    %vm4213 = vcmask 64574
    %4214 = vst.msk [vmem:[#allocation3 - $0x6] sm:$0xc0] %vm4213, %v4211
    %v4215 = vld [vmem:[#allocation3] sm:$0x3]
    %v4216 = vld [vmem:[%s21] sm:$0xff]
    %v4217 = vld [vmem:[%s22] sm:$0x1]
    %v4219 = vperm.slane %v4217, 0
    %vm4221 = vcmask 64512
    %v4223 = vsel %vm4221, %v4215, 0
    %4225 = vmatpush.msra.mxu0 0.0
    %4226 = vmatpush.msra.mxu0 0.0
    %4227 = vmatpush.msra.mxu0 0.0
    %4228 = vmatpush.msra.mxu0 0.0
    %4229 = vmatpush.msra.mxu0 0.0
    %4230 = vmatpush.msra.mxu0 0.0
    %4231 = vmatpush.msra.mxu0 0.0
    %4232 = vmatpush.msra.mxu0 0.0
    %4233 = vmatpush.msra.mxu0 0.0
    %4234 = vmatpush.msra.mxu0 0.0
    %4235 = vmatpush.msra.mxu0 0.0
    %4236 = vmatpush.msra.mxu0 0.0
    %4237 = vmatpush.msra.mxu0 0.0
    %4238 = vmatpush.msra.mxu0 0.0
    %4239 = vmatpush.msra.mxu0 0.0
    %4240 = vmatpush.msra.mxu0 %v4216
    %4241 = vmatmul.f32.gmra.mxu0 %v4223
    %v4242 = vpop.f32.mrf.mxu0
    %v4243 = vadd.f32 %v4219, %v4242
    %4244 = vdwg.mxu0
    %v4245 = vtanh.pop %v4243
    %v4246 = vld [vmem:[%s23] sm:$0xff]
    %v4247 = vld [vmem:[%s23 + $0x8] sm:$0xff]
    %v4248 = vld [vmem:[%s23 + $0x10] sm:$0xff]
    %v4249 = vld [vmem:[%s23 + $0x18] sm:$0xff]
    %v4250 = vld [vmem:[%s23 + $0x20] sm:$0xff]
    %v4251 = vld [vmem:[%s23 + $0x28] sm:$0xff]
    %v4252 = vld [vmem:[%s23 + $0x30] sm:$0xff]
    %v4253 = vld [vmem:[%s23 + $0x38] sm:$0xff]
    %v4254 = vld [vmem:[%s23 + $0x40] sm:$0xff]
    %v4255 = vld [vmem:[%s23 + $0x48] sm:$0xff]
    %v4256 = vld [vmem:[%s23 + $0x50] sm:$0xff]
    %v4257 = vld [vmem:[%s23 + $0x58] sm:$0xff]
    %v4258 = vld [vmem:[%s23 + $0x60] sm:$0xff]
    %v4259 = vld [vmem:[%s23 + $0x68] sm:$0xff]
    %v4260 = vld [vmem:[%s23 + $0x70] sm:$0xff]
    %v4261 = vld [vmem:[%s23 + $0x78] sm:$0xff]
    %v4262 = vld [vmem:[#allocation5] sm:$0x1]
    %v4264 = vperm.slane %v4262, 0
    %4266 = vmatpush.msra.mxu0 %v4261
    %4267 = vmatpush.msra.mxu0 %v4260
    %4268 = vmatpush.msra.mxu0 %v4259
    %4269 = vmatpush.msra.mxu0 %v4258
    %4270 = vmatpush.msra.mxu0 %v4257
    %4271 = vmatpush.msra.mxu0 %v4256
    %4272 = vmatpush.msra.mxu0 %v4255
    %4273 = vmatpush.msra.mxu0 %v4254
    %4274 = vmatpush.msra.mxu0 %v4253
    %4275 = vmatpush.msra.mxu0 %v4252
    %4276 = vmatpush.msra.mxu0 %v4251
    %4277 = vmatpush.msra.mxu0 %v4250
    %4278 = vmatpush.msra.mxu0 %v4249
    %4279 = vmatpush.msra.mxu0 %v4248
    %4280 = vmatpush.msra.mxu0 %v4247
    %4281 = vmatpush.msra.mxu0 %v4246
    %4282 = vmatmul.f32.gmra.mxu0 %v4245
    %v4283 = vpop.f32.mrf.mxu0
    %v4284 = vadd.f32 %v4264, %v4283
    %4285 = vdwg.mxu0
    %v4286 = vtanh.pop %v4284
    %4287 = vst.msk [vmem:[%s25] sm:$0x3] %vm4176, %v4286
    // Predicated region
    $region146: #{tpu_custom_call.1} parent=1 // pred_check
      _
    $region147: #{tpu_custom_call.1} parent=1 // pred_check_branch
      %4289 = sbr.rel (0) target = $region149
    $region148: #{tpu_custom_call.1} parent=1 // pred_region
      _
    $region149: #{tpu_custom_call.1} parent=1 // pred_fallthru
      _
    // Predicated region
    $region150: #{tpu_custom_call.1} parent=1 // pred_check
      _
    $region151: #{tpu_custom_call.1} parent=1 // pred_check_branch
      %4291 = sbr.rel (0) target = $region153
    $region152: #{tpu_custom_call.1} parent=1 // pred_region
      _
    $region153: #{tpu_custom_call.1} parent=1 // pred_fallthru
      _
    %4292 = vsyncpa [#allocation7], 1
    %4293 = vsyncpa [#allocation9], 1
    %4294 = vsyncpa [#allocation12], 1
    %4295 = vsyncpa [#allocation15], 1
    %4296 = vsyncpa [#allocation18], 1
    %4297 = vsyncpa [#allocation21], 1

</llo_original>
